<compile_context>
chip_gen: v7x
topology: tpu7x:2x2x1
jax: 0.10.0
libtpu: 0.0.40
codegen_flags: <defaults>
</compile_context>

<pallas_src>
import jax
import jax.numpy as jnp
from jax.experimental import pallas as pl
from jax.experimental.pallas import tpu as pltpu

IN_DIM = 28 * 28      # 784 (kernel handles the unaligned K; Mosaic pads in VMEM)
HID = 512
OUT_DIM = 10
OUT_PAD = 128         # lane-dense output width; wrapper slices back to 10
TB_DEFAULT = 512      # batch tile for v6e/v7x; use 256 on v5e


def _round_up(n, m):
    return ((n + m - 1) // m) * m


def mlp_kernel(x_ref, w1_ref, b1_ref, w2_ref, b2_ref, w3_ref, b3_ref, o_ref):
    # x: (TB, 784) bf16 ; w*: bf16 [in, out] ; b*: f32 (1, out) ; o: (TB, OUT_PAD) bf16
    x = x_ref[...]

    # Linear(784 -> 512) + ReLU  (bf16 MXU matmul, f32 accumulate)
    h1 = jnp.dot(x, w1_ref[...], preferred_element_type=jnp.float32) + b1_ref[...]
    h1 = jnp.maximum(h1, 0.0).astype(jnp.bfloat16)

    # Linear(512 -> 512) + ReLU
    h2 = jnp.dot(h1, w2_ref[...], preferred_element_type=jnp.float32) + b2_ref[...]
    h2 = jnp.maximum(h2, 0.0).astype(jnp.bfloat16)

    # Linear(512 -> 128-padded 10); padded lanes have f32 bias -1e30 -> exp() == 0
    logits = jnp.dot(h2, w3_ref[...], preferred_element_type=jnp.float32) + b3_ref[...]

    # Numerically stable softmax along the feature axis
    m = jnp.max(logits, axis=1, keepdims=True)
    e = jnp.exp(logits - m)
    denom = jnp.sum(e, axis=1, keepdims=True)
    o_ref[...] = (e * pl.reciprocal(denom, approx=True)).astype(o_ref.dtype)


def init_params(key):
    """PyTorch-Linear-style init (U[-1/sqrt(fan_in), 1/sqrt(fan_in)]).
    Weights stored pre-transposed as [in, out] so the kernel does x @ W + b."""
    keys = jax.random.split(key, 6)

    def linear(kw, kb, fan_in, fan_out):
        bound = 1.0 / jnp.sqrt(float(fan_in))
        w = jax.random.uniform(kw, (fan_in, fan_out), jnp.float32, -bound, bound)
        b = jax.random.uniform(kb, (1, fan_out), jnp.float32, -bound, bound)
        return w, b

    w1, b1 = linear(keys[0], keys[1], IN_DIM, HID)
    w2, b2 = linear(keys[2], keys[3], HID, HID)
    w3, b3 = linear(keys[4], keys[5], HID, OUT_DIM)
    return (w1, b1, w2, b2, w3, b3)


def prepare_params(params):
    """One-time conversion: bf16 weights, lane-padded (w3, b3).  Call once, reuse."""
    w1, b1, w2, b2, w3, b3 = params
    w1p = w1.astype(jnp.bfloat16)                                   # (784, 512), no K pad
    w2p = w2.astype(jnp.bfloat16)                                   # (512, 512)
    w3p = (jnp.zeros((HID, OUT_PAD), jnp.float32).at[:, :OUT_DIM].set(w3)
           ).astype(jnp.bfloat16)                                   # (512, 128)
    b1p = b1.reshape(1, HID).astype(jnp.float32)
    b2p = b2.reshape(1, HID).astype(jnp.float32)
    # padded logits get -1e30 f32 bias so softmax assigns them probability 0
    b3p = jnp.full((1, OUT_PAD), -1e30, jnp.float32).at[:, :OUT_DIM].set(
        b3.reshape(1, OUT_DIM))
    return (w1p, b1p, w2p, b2p, w3p, b3p)


def neural_network_forward(x, prepared_params, *, tb=TB_DEFAULT):
    """x: [B, 1, 28, 28] or [B, 28, 28] (like PyTorch NCHW).  Returns [B, 10] f32."""
    w1, b1, w2, b2, w3, b3 = prepared_params
    B = x.shape[0]
    x_flat = x.reshape(B, -1).astype(jnp.bfloat16)                  # nn.Flatten()
    assert x_flat.shape[1] == IN_DIM

    # Adaptive batch tile: don't burn a full 512-row tile on a tiny batch.
    tb_eff = min(tb, _round_up(B, 128))
    B_pad = _round_up(B, tb_eff)
    if B_pad != B:
        x_flat = jnp.pad(x_flat, ((0, B_pad - B), (0, 0)))          # single fused pad
    n_blocks = B_pad // tb_eff

    const = lambda shape: pl.BlockSpec(shape, lambda i: (0, 0))     # resident across steps

    flops = 2 * B_pad * (IN_DIM * HID + HID * HID + HID * OUT_PAD)
    bytes_accessed = (
        B_pad * IN_DIM * 2                                          # bf16 activations in
        + (w1.size + w2.size + w3.size) * 2                         # bf16 weights
        + (b1.size + b2.size + b3.size) * 4                         # f32 biases
        + B_pad * OUT_PAD * 2                                       # bf16 output
    )

    out = pl.pallas_call(
        mlp_kernel,
        out_shape=jax.ShapeDtypeStruct((B_pad, OUT_PAD), jnp.bfloat16),
        grid_spec=pltpu.PrefetchScalarGridSpec(
            num_scalar_prefetch=0,
            grid=(n_blocks,),
            in_specs=[
                pl.BlockSpec((tb_eff, IN_DIM), lambda i: (i, 0)),   # activations: tiled
                const((IN_DIM, HID)),                               # w1 resident
                const((1, HID)),                                    # b1
                const((HID, HID)),                                  # w2
                const((1, HID)),                                    # b2
                const((HID, OUT_PAD)),                              # w3 (lane-padded)
                const((1, OUT_PAD)),                                # b3 (lane-padded, f32)
            ],
            out_specs=pl.BlockSpec((tb_eff, OUT_PAD), lambda i: (i, 0)),
        ),
        compiler_params=pltpu.CompilerParams(
            dimension_semantics=("parallel",),                      # shard batch over TCs
        ),
        cost_estimate=pl.CostEstimate(
            flops=flops,
            transcendentals=B_pad * OUT_PAD,
            bytes_accessed=bytes_accessed,
        ),
    )(x_flat, w1, b1, w2, b2, w3, b3)

    return out[:B, :OUT_DIM].astype(jnp.float32)


if __name__ == "__main__":
    key = jax.random.PRNGKey(0)
    k_params, k_x = jax.random.split(key)

    params = init_params(k_params)
    prepared = prepare_params(params)

    # Small batch of MNIST-shaped inputs: [B, 1, 28, 28] (NCHW, like PyTorch)
    B = 8
    x = jax.random.normal(k_x, (B, 1, 28, 28), dtype=jnp.float32)

    out = neural_network_forward(x, prepared)
    out = jax.block_until_ready(out)

    # Sanity checks: shape, softmax rows sum to ~1 (bf16 output + approx reciprocal
    # -> loose tolerance), and agreement with a plain-JAX f32 reference.
    assert out.shape == (B, 10)
    assert out.dtype == jnp.float32
    assert bool(jnp.allclose(jnp.sum(out, axis=1), 1.0, atol=2e-2))

    w1, b1, w2, b2, w3, b3 = params
    xf = x.reshape(B, -1)
    h1 = jnp.maximum(xf @ w1 + b1, 0.0)
    h2 = jnp.maximum(h1 @ w2 + b2, 0.0)
    ref = jax.nn.softmax(h2 @ w3 + b3, axis=1)
    # bf16 inputs/weights/output (f32 accumulate) -> loosened tolerance vs f32 reference
    assert bool(jnp.allclose(out, ref, atol=2e-2, rtol=2e-2))

    print("KERNEL_OK")
</pallas_src>

<mosaic_0001>
module attributes {stable_mosaic.version = 11 : i64} {
  func.func @mlp_kernel(%arg0: i32, %arg1: memref<128x784xbf16, #tpu.memory_space<vmem>>, %arg2: memref<784x512xbf16, #tpu.memory_space<vmem>>, %arg3: memref<1x512xf32, #tpu.memory_space<vmem>>, %arg4: memref<512x512xbf16, #tpu.memory_space<vmem>>, %arg5: memref<1x512xf32, #tpu.memory_space<vmem>>, %arg6: memref<512x128xbf16, #tpu.memory_space<vmem>>, %arg7: memref<1x128xf32, #tpu.memory_space<vmem>>, %arg8: memref<128x128xbf16, #tpu.memory_space<vmem>>) attributes {dimension_semantics = [#tpu.dimension_semantics<parallel>], iteration_bounds = array<i64: 1>, scalar_prefetch = 0 : i64, scratch_operands = 0 : i64, tpu.core_type = #tpu.core_type<tc>, window_params = [{transform_indices = @transform_0, window_bounds = array<i64: 128, 784>}, {pipeline_mode = #tpu.pipeline_mode<synchronous>, transform_indices = @transform_1, window_bounds = array<i64: 784, 512>}, {pipeline_mode = #tpu.pipeline_mode<synchronous>, transform_indices = @transform_2, window_bounds = array<i64: 1, 512>}, {pipeline_mode = #tpu.pipeline_mode<synchronous>, transform_indices = @transform_3, window_bounds = array<i64: 512, 512>}, {pipeline_mode = #tpu.pipeline_mode<synchronous>, transform_indices = @transform_4, window_bounds = array<i64: 1, 512>}, {pipeline_mode = #tpu.pipeline_mode<synchronous>, transform_indices = @transform_5, window_bounds = array<i64: 512, 128>}, {pipeline_mode = #tpu.pipeline_mode<synchronous>, transform_indices = @transform_6, window_bounds = array<i64: 1, 128>}, {transform_indices = @transform_7, window_bounds = array<i64: 128, 128>}]} {
    %c0 = arith.constant 0 : index
    %c0_0 = arith.constant 0 : index
    %0 = vector.load %arg1[%c0, %c0_0] : memref<128x784xbf16, #tpu.memory_space<vmem>>, vector<128x784xbf16>
    %c0_1 = arith.constant 0 : index
    %c0_2 = arith.constant 0 : index
    %1 = vector.load %arg2[%c0_1, %c0_2] : memref<784x512xbf16, #tpu.memory_space<vmem>>, vector<784x512xbf16>
    %cst = arith.constant dense<0.000000e+00> : vector<128x512xf32>
    %2 = tpu.matmul %0, %1, %cst {dimension_numbers = #tpu.dot_dimension_numbers<[1], [0], [0], [1], [0, 0, 1, 1], [], []>} : vector<128x784xbf16>, vector<784x512xbf16>, vector<128x512xf32> -> vector<128x512xf32>
    %c0_3 = arith.constant 0 : index
    %c0_4 = arith.constant 0 : index
    %3 = vector.load %arg3[%c0_3, %c0_4] : memref<1x512xf32, #tpu.memory_space<vmem>>, vector<1x512xf32>
    %4 = vector.broadcast %3 : vector<1x512xf32> to vector<128x512xf32>
    %5 = arith.addf %2, %4 : vector<128x512xf32>
    %cst_5 = arith.constant 0.000000e+00 : f32
    %6 = vector.broadcast %cst_5 : f32 to vector<128x512xf32>
    %7 = arith.maximumf %5, %6 : vector<128x512xf32>
    %8 = arith.truncf %7 : vector<128x512xf32> to vector<128x512xbf16>
    %c0_6 = arith.constant 0 : index
    %c0_7 = arith.constant 0 : index
    %9 = vector.load %arg4[%c0_6, %c0_7] : memref<512x512xbf16, #tpu.memory_space<vmem>>, vector<512x512xbf16>
    %cst_8 = arith.constant dense<0.000000e+00> : vector<128x512xf32>
    %10 = tpu.matmul %8, %9, %cst_8 {dimension_numbers = #tpu.dot_dimension_numbers<[1], [0], [0], [1], [0, 0, 1, 1], [], []>} : vector<128x512xbf16>, vector<512x512xbf16>, vector<128x512xf32> -> vector<128x512xf32>
    %c0_9 = arith.constant 0 : index
    %c0_10 = arith.constant 0 : index
    %11 = vector.load %arg5[%c0_9, %c0_10] : memref<1x512xf32, #tpu.memory_space<vmem>>, vector<1x512xf32>
    %12 = vector.broadcast %11 : vector<1x512xf32> to vector<128x512xf32>
    %13 = arith.addf %10, %12 : vector<128x512xf32>
    %cst_11 = arith.constant 0.000000e+00 : f32
    %14 = vector.broadcast %cst_11 : f32 to vector<128x512xf32>
    %15 = arith.maximumf %13, %14 : vector<128x512xf32>
    %16 = arith.truncf %15 : vector<128x512xf32> to vector<128x512xbf16>
    %c0_12 = arith.constant 0 : index
    %c0_13 = arith.constant 0 : index
    %17 = vector.load %arg6[%c0_12, %c0_13] : memref<512x128xbf16, #tpu.memory_space<vmem>>, vector<512x128xbf16>
    %cst_14 = arith.constant dense<0.000000e+00> : vector<128x128xf32>
    %18 = tpu.matmul %16, %17, %cst_14 {dimension_numbers = #tpu.dot_dimension_numbers<[1], [0], [0], [1], [0, 0, 1, 1], [], []>} : vector<128x512xbf16>, vector<512x128xbf16>, vector<128x128xf32> -> vector<128x128xf32>
    %c0_15 = arith.constant 0 : index
    %c0_16 = arith.constant 0 : index
    %19 = vector.load %arg7[%c0_15, %c0_16] : memref<1x128xf32, #tpu.memory_space<vmem>>, vector<1x128xf32>
    %20 = vector.broadcast %19 : vector<1x128xf32> to vector<128x128xf32>
    %21 = arith.addf %18, %20 : vector<128x128xf32>
    %cst_17 = arith.constant dense<0xFF800000> : vector<128xf32>
    %22 = vector.multi_reduction <maximumf>, %21, %cst_17 [1] : vector<128x128xf32> to vector<128xf32>
    %23 = vector.shape_cast %22 : vector<128xf32> to vector<128x1xf32>
    %24 = vector.broadcast %23 : vector<128x1xf32> to vector<128x128xf32>
    %25 = arith.subf %21, %24 : vector<128x128xf32>
    %26 = math.exp %25 : vector<128x128xf32>
    %cst_18 = arith.constant dense<0.000000e+00> : vector<128xf32>
    %27 = vector.multi_reduction <add>, %26, %cst_18 [1] : vector<128x128xf32> to vector<128xf32>
    %28 = vector.shape_cast %27 : vector<128xf32> to vector<128x1xf32>
    %29 = tpu.reciprocal %28 {approx = true} : vector<128x1xf32> -> vector<128x1xf32>
    %30 = vector.broadcast %29 : vector<128x1xf32> to vector<128x128xf32>
    %31 = arith.mulf %26, %30 : vector<128x128xf32>
    %32 = arith.truncf %31 : vector<128x128xf32> to vector<128x128xbf16>
    %c0_19 = arith.constant 0 : index
    %c0_20 = arith.constant 0 : index
    %33 = vector.load %arg8[%c0_19, %c0_20] : memref<128x128xbf16, #tpu.memory_space<vmem>>, vector<128x128xbf16>
    tpu.vector_store %arg8[%c0_19, %c0_20], %32 {strides = array<i32>} : memref<128x128xbf16, #tpu.memory_space<vmem>>, vector<128x128xbf16>,
    return
  }
  func.func @transform_0(%arg0: i32) -> (i32, i32) {
    %c0_i32 = arith.constant 0 : i32
    %c0_i32_0 = arith.constant 0 : i32
    return %arg0, %c0_i32 : i32, i32
  }
  func.func @transform_1(%arg0: i32) -> (i32, i32) {
    %c0_i32 = arith.constant 0 : i32
    %c0_i32_0 = arith.constant 0 : i32
    %c0_i32_1 = arith.constant 0 : i32
    return %c0_i32, %c0_i32_0 : i32, i32
  }
  func.func @transform_2(%arg0: i32) -> (i32, i32) {
    %c0_i32 = arith.constant 0 : i32
    %c0_i32_0 = arith.constant 0 : i32
    %c0_i32_1 = arith.constant 0 : i32
    return %c0_i32, %c0_i32_0 : i32, i32
  }
  func.func @transform_3(%arg0: i32) -> (i32, i32) {
    %c0_i32 = arith.constant 0 : i32
    %c0_i32_0 = arith.constant 0 : i32
    %c0_i32_1 = arith.constant 0 : i32
    return %c0_i32, %c0_i32_0 : i32, i32
  }
  func.func @transform_4(%arg0: i32) -> (i32, i32) {
    %c0_i32 = arith.constant 0 : i32
    %c0_i32_0 = arith.constant 0 : i32
    %c0_i32_1 = arith.constant 0 : i32
    return %c0_i32, %c0_i32_0 : i32, i32
  }
  func.func @transform_5(%arg0: i32) -> (i32, i32) {
    %c0_i32 = arith.constant 0 : i32
    %c0_i32_0 = arith.constant 0 : i32
    %c0_i32_1 = arith.constant 0 : i32
    return %c0_i32, %c0_i32_0 : i32, i32
  }
  func.func @transform_6(%arg0: i32) -> (i32, i32) {
    %c0_i32 = arith.constant 0 : i32
    %c0_i32_0 = arith.constant 0 : i32
    %c0_i32_1 = arith.constant 0 : i32
    return %c0_i32, %c0_i32_0 : i32, i32
  }
  func.func @transform_7(%arg0: i32) -> (i32, i32) {
    %c0_i32 = arith.constant 0 : i32
    %c0_i32_0 = arith.constant 0 : i32
    return %arg0, %c0_i32 : i32, i32
  }
}

</mosaic_0001>

<llo_original>
// kernel: tpu_custom_call.1
$region0: #{tpu_custom_call.1}
  #allocation0 [shape = 'u32[]', space=smem, size = 0x4, offset = 0x4, fixed_abs, tag = 'smem constant byte address 0x4 - core index']
  #allocation1 [shape = 'u32[144,128]{1,0:T(1,128)}', space=vmem, size = 0x12000, scoped, tag = 'internal scratch']
  %s0 = inlined_call_operand.vmem [shape: bf16[128,784], index: 0, kind: input, shape index: {}]
  %s1 = inlined_call_operand.hbm [shape: bf16[784,512], index: 1, kind: input, shape index: {}]
  %s2 = inlined_call_operand.vmem [shape: f32[1,512], index: 2, kind: input, shape index: {}]
  %s3 = inlined_call_operand.hbm [shape: bf16[512,512], index: 3, kind: input, shape index: {}]
  %s4 = inlined_call_operand.vmem [shape: f32[1,512], index: 4, kind: input, shape index: {}]
  %s5 = inlined_call_operand.vmem [shape: bf16[512,128], index: 5, kind: input, shape index: {}]
  %s6 = inlined_call_operand.vmem [shape: f32[1,128], index: 6, kind: input, shape index: {}]
  %s7 = inlined_call_operand.hbm [shape: bf16[128,128], index: 7, kind: output, shape index: {}]
  %s8 = sld [smem:[#allocation0]]
  $region46: #{tpu_custom_call.1} parent=0
    _
  %s10 = ssub.s32 1, %s8
  %s11 = scalar_select 0, %s10, %s8
  $region1: #{tpu_custom_call.1} parent=0
    #allocation2 [shape = 'u8[802816]{0}', space=vmem, size = 0xc4000, scoped, tag = 'input window, operand 1, single buffered']
    #allocation3 [shape = 's32[1]{0}', space=sflag, size = 0x4, scoped, tag = 'scoped memory for tpu_custom_call.1']
    #allocation4 [shape = 's32[1]{0}', space=sflag, size = 0x4, scoped, tag = 'scoped memory for tpu_custom_call.1']
    #allocation5 [shape = 'u8[524288]{0}', space=vmem, size = 0x80000, scoped, tag = 'input window, operand 3, single buffered']
    #allocation6 [shape = 's32[1]{0}', space=sflag, size = 0x4, scoped, tag = 'scoped memory for tpu_custom_call.1']
    #allocation7 [shape = 'u8[32768]{0}', space=vmem, size = 0x8000, scoped, tag = 'output window, operand 0, single buffered']
    %12 = vsyncpa [#allocation3], 0
    %13 = vsyncpa [#allocation6], 0
    %14 = vsyncpa [#allocation4], 0
    // Predicated region
    $region2: #{tpu_custom_call.1} parent=1 // pred_check
      _
    $region3: #{tpu_custom_call.1} parent=1 // pred_check_branch
      %16 = sbr.rel (0) target = $region5
    $region4: #{tpu_custom_call.1} parent=1 // pred_region
      _
    $region5: #{tpu_custom_call.1} parent=1 // pred_fallthru
      _
    // Predicated region
    $region6: #{tpu_custom_call.1} parent=1 // pred_check
      _
    $region7: #{tpu_custom_call.1} parent=1 // pred_check_branch
      %18 = sbr.rel (0) target = $region9
    $region8: #{tpu_custom_call.1} parent=1 // pred_region
      %s20 = ssub.s32 25088, 25088
      %21 = vsyncadd [#allocation3], %s20
      %s22 = sshll.u32 [#allocation2], 4
      %s23 = int_to_ptr.vmem [resolvable:$true] %s22
      %28 = dma.hbm_to_vmem [thread:$0]  %s1, 25088, %s23, [#allocation3], 256, 256, 16
    $region9: #{tpu_custom_call.1} parent=1 // pred_fallthru
      _
    // Predicated region
    $region10: #{tpu_custom_call.1} parent=1 // pred_check
      _
    $region11: #{tpu_custom_call.1} parent=1 // pred_check_branch
      %30 = sbr.rel (0) target = $region13
    $region12: #{tpu_custom_call.1} parent=1 // pred_region
      _
    $region13: #{tpu_custom_call.1} parent=1 // pred_fallthru
      _
    // Predicated region
    $region14: #{tpu_custom_call.1} parent=1 // pred_check
      _
    $region15: #{tpu_custom_call.1} parent=1 // pred_check_branch
      %32 = sbr.rel (0) target = $region17
    $region16: #{tpu_custom_call.1} parent=1 // pred_region
      %s34 = ssub.s32 16384, 16384
      %35 = vsyncadd [#allocation6], %s34
      %s36 = sshll.u32 [#allocation5], 4
      %s37 = int_to_ptr.vmem [resolvable:$true] %s36
      %42 = dma.hbm_to_vmem [thread:$0]  %s3, 16384, %s37, [#allocation6], 256, 256, 16
    $region17: #{tpu_custom_call.1} parent=1 // pred_fallthru
      _
    // Predicated region
    $region18: #{tpu_custom_call.1} parent=1 // pred_check
      _
    $region19: #{tpu_custom_call.1} parent=1 // pred_check_branch
      %44 = sbr.rel (0) target = $region21
    $region20: #{tpu_custom_call.1} parent=1 // pred_region
      _
    $region21: #{tpu_custom_call.1} parent=1 // pred_fallthru
      _
    // Predicated region
    $region22: #{tpu_custom_call.1} parent=1 // pred_check
      _
    $region23: #{tpu_custom_call.1} parent=1 // pred_check_branch
      %46 = sbr.rel (0) target = $region25
    $region24: #{tpu_custom_call.1} parent=1 // pred_region
      _
    $region25: #{tpu_custom_call.1} parent=1 // pred_fallthru
      _
    // Predicated region
    $region26: #{tpu_custom_call.1} parent=1 // pred_check
      _
    $region27: #{tpu_custom_call.1} parent=1 // pred_check_branch
      %48 = sbr.rel (0) target = $region29
    $region28: #{tpu_custom_call.1} parent=1 // pred_region
      _
    $region29: #{tpu_custom_call.1} parent=1 // pred_fallthru
      _
    // Predicated region
    $region30: #{tpu_custom_call.1} parent=1 // pred_check
      _
    $region31: #{tpu_custom_call.1} parent=1 // pred_check_branch
      %50 = sbr.rel (0) target = $region33
    $region32: #{tpu_custom_call.1} parent=1 // pred_region
      %51 = dma.done [#allocation3], 25088
    $region33: #{tpu_custom_call.1} parent=1 // pred_fallthru
      _
    // Predicated region
    $region34: #{tpu_custom_call.1} parent=1 // pred_check
      _
    $region35: #{tpu_custom_call.1} parent=1 // pred_check_branch
      %53 = sbr.rel (0) target = $region37
    $region36: #{tpu_custom_call.1} parent=1 // pred_region
      %54 = dma.done [#allocation6], 16384
    $region37: #{tpu_custom_call.1} parent=1 // pred_fallthru
      _
    %v56 = vld [vmem:[%s0] sm:$0xff]
    %v57 = vld [vmem:[%s0 + $0x8] sm:$0xff]
    %v58 = vld [vmem:[%s0 + $0x10] sm:$0xff]
    %v59 = vld [vmem:[%s0 + $0x18] sm:$0xf]
    %v60 = vld [vmem:[%s0 + $0x1c] sm:$0xff]
    %v61 = vld [vmem:[%s0 + $0x24] sm:$0xff]
    %v62 = vld [vmem:[%s0 + $0x2c] sm:$0xff]
    %v63 = vld [vmem:[%s0 + $0x34] sm:$0xf]
    %v64 = vld [vmem:[%s0 + $0x38] sm:$0xff]
    %v65 = vld [vmem:[%s0 + $0x40] sm:$0xff]
    %v66 = vld [vmem:[%s0 + $0x48] sm:$0xff]
    %v67 = vld [vmem:[%s0 + $0x50] sm:$0xf]
    %v68 = vld [vmem:[%s0 + $0x54] sm:$0xff]
    %v69 = vld [vmem:[%s0 + $0x5c] sm:$0xff]
    %v70 = vld [vmem:[%s0 + $0x64] sm:$0xff]
    %v71 = vld [vmem:[%s0 + $0x6c] sm:$0xf]
    %v72 = vld [vmem:[%s0 + $0x70] sm:$0xff]
    %v73 = vld [vmem:[%s0 + $0x78] sm:$0xff]
    %v74 = vld [vmem:[%s0 + $0x80] sm:$0xff]
    %v75 = vld [vmem:[%s0 + $0x88] sm:$0xf]
    %v76 = vld [vmem:[%s0 + $0x8c] sm:$0xff]
    %v77 = vld [vmem:[%s0 + $0x94] sm:$0xff]
    %v78 = vld [vmem:[%s0 + $0x9c] sm:$0xff]
    %v79 = vld [vmem:[%s0 + $0xa4] sm:$0xf]
    %v80 = vld [vmem:[%s0 + $0xa8] sm:$0xff]
    %v81 = vld [vmem:[%s0 + $0xb0] sm:$0xff]
    %v82 = vld [vmem:[%s0 + $0xb8] sm:$0xff]
    %v83 = vld [vmem:[%s0 + $0xc0] sm:$0xf]
    %v84 = vld [vmem:[%s0 + $0xc4] sm:$0xff]
    %v85 = vld [vmem:[%s0 + $0xcc] sm:$0xff]
    %v86 = vld [vmem:[%s0 + $0xd4] sm:$0xff]
    %v87 = vld [vmem:[%s0 + $0xdc] sm:$0xf]
    %v88 = vld [vmem:[%s0 + $0xe0] sm:$0xff]
    %v89 = vld [vmem:[%s0 + $0xe8] sm:$0xff]
    %v90 = vld [vmem:[%s0 + $0xf0] sm:$0xff]
    %v91 = vld [vmem:[%s0 + $0xf8] sm:$0xf]
    %v92 = vld [vmem:[%s0 + $0xfc] sm:$0xff]
    %v93 = vld [vmem:[%s0 + $0x104] sm:$0xff]
    %v94 = vld [vmem:[%s0 + $0x10c] sm:$0xff]
    %v95 = vld [vmem:[%s0 + $0x114] sm:$0xf]
    %v96 = vld [vmem:[%s0 + $0x118] sm:$0xff]
    %v97 = vld [vmem:[%s0 + $0x120] sm:$0xff]
    %v98 = vld [vmem:[%s0 + $0x128] sm:$0xff]
    %v99 = vld [vmem:[%s0 + $0x130] sm:$0xf]
    %v100 = vld [vmem:[%s0 + $0x134] sm:$0xff]
    %v101 = vld [vmem:[%s0 + $0x13c] sm:$0xff]
    %v102 = vld [vmem:[%s0 + $0x144] sm:$0xff]
    %v103 = vld [vmem:[%s0 + $0x14c] sm:$0xf]
    %v104 = vld [vmem:[%s0 + $0x150] sm:$0xff]
    %v105 = vld [vmem:[%s0 + $0x158] sm:$0xff]
    %v106 = vld [vmem:[%s0 + $0x160] sm:$0xff]
    %v107 = vld [vmem:[%s0 + $0x168] sm:$0xf]
    %v108 = vld [vmem:[%s0 + $0x16c] sm:$0xff]
    %v109 = vld [vmem:[%s0 + $0x174] sm:$0xff]
    %v110 = vld [vmem:[%s0 + $0x17c] sm:$0xff]
    %v111 = vld [vmem:[%s0 + $0x184] sm:$0xf]
    %v112 = vld [vmem:[%s0 + $0x188] sm:$0xff]
    %v113 = vld [vmem:[%s0 + $0x190] sm:$0xff]
    %v114 = vld [vmem:[%s0 + $0x198] sm:$0xff]
    %v115 = vld [vmem:[%s0 + $0x1a0] sm:$0xf]
    %v116 = vld [vmem:[%s0 + $0x1a4] sm:$0xff]
    %v117 = vld [vmem:[%s0 + $0x1ac] sm:$0xff]
    %v118 = vld [vmem:[%s0 + $0x1b4] sm:$0xff]
    %v119 = vld [vmem:[%s0 + $0x1bc] sm:$0xf]
    %v120 = vld [vmem:[#allocation2] sm:$0xff]
    %v121 = vld [vmem:[#allocation2 + $0x8] sm:$0xff]
    %v122 = vld [vmem:[#allocation2 + $0x10] sm:$0xff]
    %v123 = vld [vmem:[#allocation2 + $0x18] sm:$0xff]
    %v124 = vld [vmem:[#allocation2 + $0x20] sm:$0xff]
    %v125 = vld [vmem:[#allocation2 + $0x28] sm:$0xff]
    %v126 = vld [vmem:[#allocation2 + $0x30] sm:$0xff]
    %v127 = vld [vmem:[#allocation2 + $0x38] sm:$0xff]
    %v128 = vld [vmem:[#allocation2 + $0x40] sm:$0xff]
    %v129 = vld [vmem:[#allocation2 + $0x48] sm:$0xff]
    %v130 = vld [vmem:[#allocation2 + $0x50] sm:$0xff]
    %v131 = vld [vmem:[#allocation2 + $0x58] sm:$0xff]
    %v132 = vld [vmem:[#allocation2 + $0x60] sm:$0xff]
    %v133 = vld [vmem:[#allocation2 + $0x68] sm:$0xff]
    %v134 = vld [vmem:[#allocation2 + $0x70] sm:$0xff]
    %v135 = vld [vmem:[#allocation2 + $0x78] sm:$0xff]
    %v136 = vld [vmem:[#allocation2 + $0x80] sm:$0xff]
    %v137 = vld [vmem:[#allocation2 + $0x88] sm:$0xff]
    %v138 = vld [vmem:[#allocation2 + $0x90] sm:$0xff]
    %v139 = vld [vmem:[#allocation2 + $0x98] sm:$0xff]
    %v140 = vld [vmem:[#allocation2 + $0xa0] sm:$0xff]
    %v141 = vld [vmem:[#allocation2 + $0xa8] sm:$0xff]
    %v142 = vld [vmem:[#allocation2 + $0xb0] sm:$0xff]
    %v143 = vld [vmem:[#allocation2 + $0xb8] sm:$0xff]
    %v144 = vld [vmem:[#allocation2 + $0xc0] sm:$0xff]
    %v145 = vld [vmem:[#allocation2 + $0xc8] sm:$0xff]
    %v146 = vld [vmem:[#allocation2 + $0xd0] sm:$0xff]
    %v147 = vld [vmem:[#allocation2 + $0xd8] sm:$0xff]
    %v148 = vld [vmem:[#allocation2 + $0xe0] sm:$0xff]
    %v149 = vld [vmem:[#allocation2 + $0xe8] sm:$0xff]
    %v150 = vld [vmem:[#allocation2 + $0xf0] sm:$0xff]
    %v151 = vld [vmem:[#allocation2 + $0xf8] sm:$0xff]
    %v152 = vld [vmem:[#allocation2 + $0x100] sm:$0xff]
    %v153 = vld [vmem:[#allocation2 + $0x108] sm:$0xff]
    %v154 = vld [vmem:[#allocation2 + $0x110] sm:$0xff]
    %v155 = vld [vmem:[#allocation2 + $0x118] sm:$0xff]
    %v156 = vld [vmem:[#allocation2 + $0x120] sm:$0xff]
    %v157 = vld [vmem:[#allocation2 + $0x128] sm:$0xff]
    %v158 = vld [vmem:[#allocation2 + $0x130] sm:$0xff]
    %v159 = vld [vmem:[#allocation2 + $0x138] sm:$0xff]
    %v160 = vld [vmem:[#allocation2 + $0x140] sm:$0xff]
    %v161 = vld [vmem:[#allocation2 + $0x148] sm:$0xff]
    %v162 = vld [vmem:[#allocation2 + $0x150] sm:$0xff]
    %v163 = vld [vmem:[#allocation2 + $0x158] sm:$0xff]
    %v164 = vld [vmem:[#allocation2 + $0x160] sm:$0xff]
    %v165 = vld [vmem:[#allocation2 + $0x168] sm:$0xff]
    %v166 = vld [vmem:[#allocation2 + $0x170] sm:$0xff]
    %v167 = vld [vmem:[#allocation2 + $0x178] sm:$0xff]
    %v168 = vld [vmem:[#allocation2 + $0x180] sm:$0xff]
    %v169 = vld [vmem:[#allocation2 + $0x188] sm:$0xff]
    %v170 = vld [vmem:[#allocation2 + $0x190] sm:$0xff]
    %v171 = vld [vmem:[#allocation2 + $0x198] sm:$0xff]
    %v172 = vld [vmem:[#allocation2 + $0x1a0] sm:$0xff]
    %v173 = vld [vmem:[#allocation2 + $0x1a8] sm:$0xff]
    %v174 = vld [vmem:[#allocation2 + $0x1b0] sm:$0xff]
    %v175 = vld [vmem:[#allocation2 + $0x1b8] sm:$0xff]
    %v176 = vld [vmem:[#allocation2 + $0x1c0] sm:$0xff]
    %v177 = vld [vmem:[#allocation2 + $0x1c8] sm:$0xff]
    %v178 = vld [vmem:[#allocation2 + $0x1d0] sm:$0xff]
    %v179 = vld [vmem:[#allocation2 + $0x1d8] sm:$0xff]
    %v180 = vld [vmem:[#allocation2 + $0x1e0] sm:$0xff]
    %v181 = vld [vmem:[#allocation2 + $0x1e8] sm:$0xff]
    %v182 = vld [vmem:[#allocation2 + $0x1f0] sm:$0xff]
    %v183 = vld [vmem:[#allocation2 + $0x1f8] sm:$0xff]
    %v184 = vld [vmem:[#allocation2 + $0x200] sm:$0xff]
    %v185 = vld [vmem:[#allocation2 + $0x208] sm:$0xff]
    %v186 = vld [vmem:[#allocation2 + $0x210] sm:$0xff]
    %v187 = vld [vmem:[#allocation2 + $0x218] sm:$0xff]
    %v188 = vld [vmem:[#allocation2 + $0x220] sm:$0xff]
    %v189 = vld [vmem:[#allocation2 + $0x228] sm:$0xff]
    %v190 = vld [vmem:[#allocation2 + $0x230] sm:$0xff]
    %v191 = vld [vmem:[#allocation2 + $0x238] sm:$0xff]
    %v192 = vld [vmem:[#allocation2 + $0x240] sm:$0xff]
    %v193 = vld [vmem:[#allocation2 + $0x248] sm:$0xff]
    %v194 = vld [vmem:[#allocation2 + $0x250] sm:$0xff]
    %v195 = vld [vmem:[#allocation2 + $0x258] sm:$0xff]
    %v196 = vld [vmem:[#allocation2 + $0x260] sm:$0xff]
    %v197 = vld [vmem:[#allocation2 + $0x268] sm:$0xff]
    %v198 = vld [vmem:[#allocation2 + $0x270] sm:$0xff]
    %v199 = vld [vmem:[#allocation2 + $0x278] sm:$0xff]
    %v200 = vld [vmem:[#allocation2 + $0x280] sm:$0xff]
    %v201 = vld [vmem:[#allocation2 + $0x288] sm:$0xff]
    %v202 = vld [vmem:[#allocation2 + $0x290] sm:$0xff]
    %v203 = vld [vmem:[#allocation2 + $0x298] sm:$0xff]
    %v204 = vld [vmem:[#allocation2 + $0x2a0] sm:$0xff]
    %v205 = vld [vmem:[#allocation2 + $0x2a8] sm:$0xff]
    %v206 = vld [vmem:[#allocation2 + $0x2b0] sm:$0xff]
    %v207 = vld [vmem:[#allocation2 + $0x2b8] sm:$0xff]
    %v208 = vld [vmem:[#allocation2 + $0x2c0] sm:$0xff]
    %v209 = vld [vmem:[#allocation2 + $0x2c8] sm:$0xff]
    %v210 = vld [vmem:[#allocation2 + $0x2d0] sm:$0xff]
    %v211 = vld [vmem:[#allocation2 + $0x2d8] sm:$0xff]
    %v212 = vld [vmem:[#allocation2 + $0x2e0] sm:$0xff]
    %v213 = vld [vmem:[#allocation2 + $0x2e8] sm:$0xff]
    %v214 = vld [vmem:[#allocation2 + $0x2f0] sm:$0xff]
    %v215 = vld [vmem:[#allocation2 + $0x2f8] sm:$0xff]
    %v216 = vld [vmem:[#allocation2 + $0x300] sm:$0xff]
    %v217 = vld [vmem:[#allocation2 + $0x308] sm:$0xff]
    %v218 = vld [vmem:[#allocation2 + $0x310] sm:$0xff]
    %v219 = vld [vmem:[#allocation2 + $0x318] sm:$0xff]
    %v220 = vld [vmem:[#allocation2 + $0x320] sm:$0xff]
    %v221 = vld [vmem:[#allocation2 + $0x328] sm:$0xff]
    %v222 = vld [vmem:[#allocation2 + $0x330] sm:$0xff]
    %v223 = vld [vmem:[#allocation2 + $0x338] sm:$0xff]
    %v224 = vld [vmem:[#allocation2 + $0x340] sm:$0xff]
    %v225 = vld [vmem:[#allocation2 + $0x348] sm:$0xff]
    %v226 = vld [vmem:[#allocation2 + $0x350] sm:$0xff]
    %v227 = vld [vmem:[#allocation2 + $0x358] sm:$0xff]
    %v228 = vld [vmem:[#allocation2 + $0x360] sm:$0xff]
    %v229 = vld [vmem:[#allocation2 + $0x368] sm:$0xff]
    %v230 = vld [vmem:[#allocation2 + $0x370] sm:$0xff]
    %v231 = vld [vmem:[#allocation2 + $0x378] sm:$0xff]
    %v232 = vld [vmem:[#allocation2 + $0x380] sm:$0xff]
    %v233 = vld [vmem:[#allocation2 + $0x388] sm:$0xff]
    %v234 = vld [vmem:[#allocation2 + $0x390] sm:$0xff]
    %v235 = vld [vmem:[#allocation2 + $0x398] sm:$0xff]
    %v236 = vld [vmem:[#allocation2 + $0x3a0] sm:$0xff]
    %v237 = vld [vmem:[#allocation2 + $0x3a8] sm:$0xff]
    %v238 = vld [vmem:[#allocation2 + $0x3b0] sm:$0xff]
    %v239 = vld [vmem:[#allocation2 + $0x3b8] sm:$0xff]
    %v240 = vld [vmem:[#allocation2 + $0x3c0] sm:$0xff]
    %v241 = vld [vmem:[#allocation2 + $0x3c8] sm:$0xff]
    %v242 = vld [vmem:[#allocation2 + $0x3d0] sm:$0xff]
    %v243 = vld [vmem:[#allocation2 + $0x3d8] sm:$0xff]
    %v244 = vld [vmem:[#allocation2 + $0x3e0] sm:$0xff]
    %v245 = vld [vmem:[#allocation2 + $0x3e8] sm:$0xff]
    %v246 = vld [vmem:[#allocation2 + $0x3f0] sm:$0xff]
    %v247 = vld [vmem:[#allocation2 + $0x3f8] sm:$0xff]
    %v248 = vld [vmem:[#allocation2 + $0x400] sm:$0xff]
    %v249 = vld [vmem:[#allocation2 + $0x408] sm:$0xff]
    %v250 = vld [vmem:[#allocation2 + $0x410] sm:$0xff]
    %v251 = vld [vmem:[#allocation2 + $0x418] sm:$0xff]
    %v252 = vld [vmem:[#allocation2 + $0x420] sm:$0xff]
    %v253 = vld [vmem:[#allocation2 + $0x428] sm:$0xff]
    %v254 = vld [vmem:[#allocation2 + $0x430] sm:$0xff]
    %v255 = vld [vmem:[#allocation2 + $0x438] sm:$0xff]
    %v256 = vld [vmem:[#allocation2 + $0x440] sm:$0xff]
    %v257 = vld [vmem:[#allocation2 + $0x448] sm:$0xff]
    %v258 = vld [vmem:[#allocation2 + $0x450] sm:$0xff]
    %v259 = vld [vmem:[#allocation2 + $0x458] sm:$0xff]
    %v260 = vld [vmem:[#allocation2 + $0x460] sm:$0xff]
    %v261 = vld [vmem:[#allocation2 + $0x468] sm:$0xff]
    %v262 = vld [vmem:[#allocation2 + $0x470] sm:$0xff]
    %v263 = vld [vmem:[#allocation2 + $0x478] sm:$0xff]
    %v264 = vld [vmem:[#allocation2 + $0x480] sm:$0xff]
    %v265 = vld [vmem:[#allocation2 + $0x488] sm:$0xff]
    %v266 = vld [vmem:[#allocation2 + $0x490] sm:$0xff]
    %v267 = vld [vmem:[#allocation2 + $0x498] sm:$0xff]
    %v268 = vld [vmem:[#allocation2 + $0x4a0] sm:$0xff]
    %v269 = vld [vmem:[#allocation2 + $0x4a8] sm:$0xff]
    %v270 = vld [vmem:[#allocation2 + $0x4b0] sm:$0xff]
    %v271 = vld [vmem:[#allocation2 + $0x4b8] sm:$0xff]
    %v272 = vld [vmem:[#allocation2 + $0x4c0] sm:$0xff]
    %v273 = vld [vmem:[#allocation2 + $0x4c8] sm:$0xff]
    %v274 = vld [vmem:[#allocation2 + $0x4d0] sm:$0xff]
    %v275 = vld [vmem:[#allocation2 + $0x4d8] sm:$0xff]
    %v276 = vld [vmem:[#allocation2 + $0x4e0] sm:$0xff]
    %v277 = vld [vmem:[#allocation2 + $0x4e8] sm:$0xff]
    %v278 = vld [vmem:[#allocation2 + $0x4f0] sm:$0xff]
    %v279 = vld [vmem:[#allocation2 + $0x4f8] sm:$0xff]
    %v280 = vld [vmem:[#allocation2 + $0x500] sm:$0xff]
    %v281 = vld [vmem:[#allocation2 + $0x508] sm:$0xff]
    %v282 = vld [vmem:[#allocation2 + $0x510] sm:$0xff]
    %v283 = vld [vmem:[#allocation2 + $0x518] sm:$0xff]
    %v284 = vld [vmem:[#allocation2 + $0x520] sm:$0xff]
    %v285 = vld [vmem:[#allocation2 + $0x528] sm:$0xff]
    %v286 = vld [vmem:[#allocation2 + $0x530] sm:$0xff]
    %v287 = vld [vmem:[#allocation2 + $0x538] sm:$0xff]
    %v288 = vld [vmem:[#allocation2 + $0x540] sm:$0xff]
    %v289 = vld [vmem:[#allocation2 + $0x548] sm:$0xff]
    %v290 = vld [vmem:[#allocation2 + $0x550] sm:$0xff]
    %v291 = vld [vmem:[#allocation2 + $0x558] sm:$0xff]
    %v292 = vld [vmem:[#allocation2 + $0x560] sm:$0xff]
    %v293 = vld [vmem:[#allocation2 + $0x568] sm:$0xff]
    %v294 = vld [vmem:[#allocation2 + $0x570] sm:$0xff]
    %v295 = vld [vmem:[#allocation2 + $0x578] sm:$0xff]
    %v296 = vld [vmem:[#allocation2 + $0x580] sm:$0xff]
    %v297 = vld [vmem:[#allocation2 + $0x588] sm:$0xff]
    %v298 = vld [vmem:[#allocation2 + $0x590] sm:$0xff]
    %v299 = vld [vmem:[#allocation2 + $0x598] sm:$0xff]
    %v300 = vld [vmem:[#allocation2 + $0x5a0] sm:$0xff]
    %v301 = vld [vmem:[#allocation2 + $0x5a8] sm:$0xff]
    %v302 = vld [vmem:[#allocation2 + $0x5b0] sm:$0xff]
    %v303 = vld [vmem:[#allocation2 + $0x5b8] sm:$0xff]
    %v304 = vld [vmem:[#allocation2 + $0x5c0] sm:$0xff]
    %v305 = vld [vmem:[#allocation2 + $0x5c8] sm:$0xff]
    %v306 = vld [vmem:[#allocation2 + $0x5d0] sm:$0xff]
    %v307 = vld [vmem:[#allocation2 + $0x5d8] sm:$0xff]
    %v308 = vld [vmem:[#allocation2 + $0x5e0] sm:$0xff]
    %v309 = vld [vmem:[#allocation2 + $0x5e8] sm:$0xff]
    %v310 = vld [vmem:[#allocation2 + $0x5f0] sm:$0xff]
    %v311 = vld [vmem:[#allocation2 + $0x5f8] sm:$0xff]
    %v312 = vld [vmem:[#allocation2 + $0x600] sm:$0xff]
    %v313 = vld [vmem:[#allocation2 + $0x608] sm:$0xff]
    %v314 = vld [vmem:[#allocation2 + $0x610] sm:$0xff]
    %v315 = vld [vmem:[#allocation2 + $0x618] sm:$0xff]
    %v316 = vld [vmem:[%s2] sm:$0xf]
    %v318 = vlaneseq
    %v319 = vshrl.u32 %v318, 7
    %v320 = vsub.s32 0, %v319
    %v321 = vrot.slane %v316, %v320
    %v322 = vlaneseq
    %v323 = vshrl.u32 %v322, 7
    %v324 = vsub.s32 1, %v323
    %v325 = vrot.slane %v316, %v324
    %v326 = vlaneseq
    %v327 = vshrl.u32 %v326, 7
    %v328 = vsub.s32 2, %v327
    %v329 = vrot.slane %v316, %v328
    %v330 = vlaneseq
    %v331 = vshrl.u32 %v330, 7
    %v332 = vsub.s32 3, %v331
    %v333 = vrot.slane %v316, %v332
    %v402 = vunpack.c.l.b16 %v56
    %v403 = vunpack.c.h.b16 %v56
    %v404 = vunpack.c.l.b16 %v57
    %v405 = vunpack.c.h.b16 %v57
    %v406 = vunpack.c.l.b16 %v58
    %v407 = vunpack.c.h.b16 %v58
    %v408 = vunpack.c.l.b16 %v59
    %v409 = vunpack.c.l.b16 %v60
    %v410 = vunpack.c.h.b16 %v60
    %v411 = vunpack.c.l.b16 %v61
    %v412 = vunpack.c.h.b16 %v61
    %v413 = vunpack.c.l.b16 %v62
    %v414 = vunpack.c.h.b16 %v62
    %v415 = vunpack.c.l.b16 %v63
    %v416 = vunpack.c.l.b16 %v64
    %v417 = vunpack.c.h.b16 %v64
    %v418 = vunpack.c.l.b16 %v65
    %v419 = vunpack.c.h.b16 %v65
    %v420 = vunpack.c.l.b16 %v66
    %v421 = vunpack.c.h.b16 %v66
    %v422 = vunpack.c.l.b16 %v67
    %v423 = vunpack.c.l.b16 %v68
    %v424 = vunpack.c.h.b16 %v68
    %v425 = vunpack.c.l.b16 %v69
    %v426 = vunpack.c.h.b16 %v69
    %v427 = vunpack.c.l.b16 %v70
    %v428 = vunpack.c.h.b16 %v70
    %v429 = vunpack.c.l.b16 %v71
    %v430 = vunpack.c.l.b16 %v72
    %v431 = vunpack.c.h.b16 %v72
    %v432 = vunpack.c.l.b16 %v73
    %v433 = vunpack.c.h.b16 %v73
    %v434 = vunpack.c.l.b16 %v74
    %v435 = vunpack.c.h.b16 %v74
    %v436 = vunpack.c.l.b16 %v75
    %v437 = vunpack.c.l.b16 %v76
    %v438 = vunpack.c.h.b16 %v76
    %v439 = vunpack.c.l.b16 %v77
    %v440 = vunpack.c.h.b16 %v77
    %v441 = vunpack.c.l.b16 %v78
    %v442 = vunpack.c.h.b16 %v78
    %v443 = vunpack.c.l.b16 %v79
    %v444 = vunpack.c.l.b16 %v80
    %v445 = vunpack.c.h.b16 %v80
    %v446 = vunpack.c.l.b16 %v81
    %v447 = vunpack.c.h.b16 %v81
    %v448 = vunpack.c.l.b16 %v82
    %v449 = vunpack.c.h.b16 %v82
    %v450 = vunpack.c.l.b16 %v83
    %v451 = vunpack.c.l.b16 %v84
    %v452 = vunpack.c.h.b16 %v84
    %v453 = vunpack.c.l.b16 %v85
    %v454 = vunpack.c.h.b16 %v85
    %v455 = vunpack.c.l.b16 %v86
    %v456 = vunpack.c.h.b16 %v86
    %v457 = vunpack.c.l.b16 %v87
    %v458 = vunpack.c.l.b16 %v88
    %v459 = vunpack.c.h.b16 %v88
    %v460 = vunpack.c.l.b16 %v89
    %v461 = vunpack.c.h.b16 %v89
    %v462 = vunpack.c.l.b16 %v90
    %v463 = vunpack.c.h.b16 %v90
    %v464 = vunpack.c.l.b16 %v91
    %v465 = vunpack.c.l.b16 %v92
    %v466 = vunpack.c.h.b16 %v92
    %v467 = vunpack.c.l.b16 %v93
    %v468 = vunpack.c.h.b16 %v93
    %v469 = vunpack.c.l.b16 %v94
    %v470 = vunpack.c.h.b16 %v94
    %v471 = vunpack.c.l.b16 %v95
    %v472 = vunpack.c.l.b16 %v96
    %v473 = vunpack.c.h.b16 %v96
    %v474 = vunpack.c.l.b16 %v97
    %v475 = vunpack.c.h.b16 %v97
    %v476 = vunpack.c.l.b16 %v98
    %v477 = vunpack.c.h.b16 %v98
    %v478 = vunpack.c.l.b16 %v99
    %v479 = vunpack.c.l.b16 %v100
    %v480 = vunpack.c.h.b16 %v100
    %v481 = vunpack.c.l.b16 %v101
    %v482 = vunpack.c.h.b16 %v101
    %v483 = vunpack.c.l.b16 %v102
    %v484 = vunpack.c.h.b16 %v102
    %v485 = vunpack.c.l.b16 %v103
    %v486 = vunpack.c.l.b16 %v104
    %v487 = vunpack.c.h.b16 %v104
    %v488 = vunpack.c.l.b16 %v105
    %v489 = vunpack.c.h.b16 %v105
    %v490 = vunpack.c.l.b16 %v106
    %v491 = vunpack.c.h.b16 %v106
    %v492 = vunpack.c.l.b16 %v107
    %v493 = vunpack.c.l.b16 %v108
    %v494 = vunpack.c.h.b16 %v108
    %v495 = vunpack.c.l.b16 %v109
    %v496 = vunpack.c.h.b16 %v109
    %v497 = vunpack.c.l.b16 %v110
    %v498 = vunpack.c.h.b16 %v110
    %v499 = vunpack.c.l.b16 %v111
    %v500 = vunpack.c.l.b16 %v112
    %v501 = vunpack.c.h.b16 %v112
    %v502 = vunpack.c.l.b16 %v113
    %v503 = vunpack.c.h.b16 %v113
    %v504 = vunpack.c.l.b16 %v114
    %v505 = vunpack.c.h.b16 %v114
    %v506 = vunpack.c.l.b16 %v115
    %v507 = vunpack.c.l.b16 %v116
    %v508 = vunpack.c.h.b16 %v116
    %v509 = vunpack.c.l.b16 %v117
    %v510 = vunpack.c.h.b16 %v117
    %v511 = vunpack.c.l.b16 %v118
    %v512 = vunpack.c.h.b16 %v118
    %v513 = vunpack.c.l.b16 %v119
    %v514 = vpack.c.b16 %v409, %v402
    %v515 = vpack.c.b16 %v410, %v403
    %v516 = vpack.c.b16 %v411, %v404
    %v517 = vpack.c.b16 %v412, %v405
    %v518 = vpack.c.b16 %v413, %v406
    %v519 = vpack.c.b16 %v414, %v407
    %v520 = vpack.c.b16 %v415, %v408
    %v521 = vpack.c.b16 %v423, %v416
    %v522 = vpack.c.b16 %v424, %v417
    %v523 = vpack.c.b16 %v425, %v418
    %v524 = vpack.c.b16 %v426, %v419
    %v525 = vpack.c.b16 %v427, %v420
    %v526 = vpack.c.b16 %v428, %v421
    %v527 = vpack.c.b16 %v429, %v422
    %v528 = vpack.c.b16 %v437, %v430
    %v529 = vpack.c.b16 %v438, %v431
    %v530 = vpack.c.b16 %v439, %v432
    %v531 = vpack.c.b16 %v440, %v433
    %v532 = vpack.c.b16 %v441, %v434
    %v533 = vpack.c.b16 %v442, %v435
    %v534 = vpack.c.b16 %v443, %v436
    %v535 = vpack.c.b16 %v451, %v444
    %v536 = vpack.c.b16 %v452, %v445
    %v537 = vpack.c.b16 %v453, %v446
    %v538 = vpack.c.b16 %v454, %v447
    %v539 = vpack.c.b16 %v455, %v448
    %v540 = vpack.c.b16 %v456, %v449
    %v541 = vpack.c.b16 %v457, %v450
    %v542 = vpack.c.b16 %v465, %v458
    %v543 = vpack.c.b16 %v466, %v459
    %v544 = vpack.c.b16 %v467, %v460
    %v545 = vpack.c.b16 %v468, %v461
    %v546 = vpack.c.b16 %v469, %v462
    %v547 = vpack.c.b16 %v470, %v463
    %v548 = vpack.c.b16 %v471, %v464
    %v549 = vpack.c.b16 %v479, %v472
    %v550 = vpack.c.b16 %v480, %v473
    %v551 = vpack.c.b16 %v481, %v474
    %v552 = vpack.c.b16 %v482, %v475
    %v553 = vpack.c.b16 %v483, %v476
    %v554 = vpack.c.b16 %v484, %v477
    %v555 = vpack.c.b16 %v485, %v478
    %v556 = vpack.c.b16 %v493, %v486
    %v557 = vpack.c.b16 %v494, %v487
    %v558 = vpack.c.b16 %v495, %v488
    %v559 = vpack.c.b16 %v496, %v489
    %v560 = vpack.c.b16 %v497, %v490
    %v561 = vpack.c.b16 %v498, %v491
    %v562 = vpack.c.b16 %v499, %v492
    %v563 = vpack.c.b16 %v507, %v500
    %v564 = vpack.c.b16 %v508, %v501
    %v565 = vpack.c.b16 %v509, %v502
    %v566 = vpack.c.b16 %v510, %v503
    %v567 = vpack.c.b16 %v511, %v504
    %v568 = vpack.c.b16 %v512, %v505
    %v569 = vpack.c.b16 %v513, %v506
    %v814 = vunpack.c.l.b16 %v120
    %v815 = vunpack.c.h.b16 %v120
    %v816 = vunpack.c.l.b16 %v121
    %v817 = vunpack.c.h.b16 %v121
    %v818 = vunpack.c.l.b16 %v122
    %v819 = vunpack.c.h.b16 %v122
    %v820 = vunpack.c.l.b16 %v123
    %v821 = vunpack.c.h.b16 %v123
    %v822 = vunpack.c.l.b16 %v124
    %v823 = vunpack.c.h.b16 %v124
    %v824 = vunpack.c.l.b16 %v125
    %v825 = vunpack.c.h.b16 %v125
    %v826 = vunpack.c.l.b16 %v126
    %v827 = vunpack.c.h.b16 %v126
    %v828 = vunpack.c.l.b16 %v127
    %v829 = vunpack.c.h.b16 %v127
    %v830 = vunpack.c.l.b16 %v128
    %v831 = vunpack.c.h.b16 %v128
    %v832 = vunpack.c.l.b16 %v129
    %v833 = vunpack.c.h.b16 %v129
    %v834 = vunpack.c.l.b16 %v130
    %v835 = vunpack.c.h.b16 %v130
    %v836 = vunpack.c.l.b16 %v131
    %v837 = vunpack.c.h.b16 %v131
    %v838 = vunpack.c.l.b16 %v132
    %v839 = vunpack.c.h.b16 %v132
    %v840 = vunpack.c.l.b16 %v133
    %v841 = vunpack.c.h.b16 %v133
    %v842 = vunpack.c.l.b16 %v134
    %v843 = vunpack.c.h.b16 %v134
    %v844 = vunpack.c.l.b16 %v135
    %v845 = vunpack.c.h.b16 %v135
    %v846 = vunpack.c.l.b16 %v136
    %v847 = vunpack.c.h.b16 %v136
    %v848 = vunpack.c.l.b16 %v137
    %v849 = vunpack.c.h.b16 %v137
    %v850 = vunpack.c.l.b16 %v138
    %v851 = vunpack.c.h.b16 %v138
    %v852 = vunpack.c.l.b16 %v139
    %v853 = vunpack.c.h.b16 %v139
    %v854 = vunpack.c.l.b16 %v140
    %v855 = vunpack.c.h.b16 %v140
    %v856 = vunpack.c.l.b16 %v141
    %v857 = vunpack.c.h.b16 %v141
    %v858 = vunpack.c.l.b16 %v142
    %v859 = vunpack.c.h.b16 %v142
    %v860 = vunpack.c.l.b16 %v143
    %v861 = vunpack.c.h.b16 %v143
    %v862 = vunpack.c.l.b16 %v144
    %v863 = vunpack.c.h.b16 %v144
    %v864 = vunpack.c.l.b16 %v145
    %v865 = vunpack.c.h.b16 %v145
    %v866 = vunpack.c.l.b16 %v146
    %v867 = vunpack.c.h.b16 %v146
    %v868 = vunpack.c.l.b16 %v147
    %v869 = vunpack.c.h.b16 %v147
    %v870 = vunpack.c.l.b16 %v148
    %v871 = vunpack.c.h.b16 %v148
    %v872 = vunpack.c.l.b16 %v149
    %v873 = vunpack.c.h.b16 %v149
    %v874 = vunpack.c.l.b16 %v150
    %v875 = vunpack.c.h.b16 %v150
    %v876 = vunpack.c.l.b16 %v151
    %v877 = vunpack.c.h.b16 %v151
    %v878 = vunpack.c.l.b16 %v152
    %v879 = vunpack.c.h.b16 %v152
    %v880 = vunpack.c.l.b16 %v153
    %v881 = vunpack.c.h.b16 %v153
    %v882 = vunpack.c.l.b16 %v154
    %v883 = vunpack.c.h.b16 %v154
    %v884 = vunpack.c.l.b16 %v155
    %v885 = vunpack.c.h.b16 %v155
    %v886 = vunpack.c.l.b16 %v156
    %v887 = vunpack.c.h.b16 %v156
    %v888 = vunpack.c.l.b16 %v157
    %v889 = vunpack.c.h.b16 %v157
    %v890 = vunpack.c.l.b16 %v158
    %v891 = vunpack.c.h.b16 %v158
    %v892 = vunpack.c.l.b16 %v159
    %v893 = vunpack.c.h.b16 %v159
    %v894 = vunpack.c.l.b16 %v160
    %v895 = vunpack.c.h.b16 %v160
    %v896 = vunpack.c.l.b16 %v161
    %v897 = vunpack.c.h.b16 %v161
    %v898 = vunpack.c.l.b16 %v162
    %v899 = vunpack.c.h.b16 %v162
    %v900 = vunpack.c.l.b16 %v163
    %v901 = vunpack.c.h.b16 %v163
    %v902 = vunpack.c.l.b16 %v164
    %v903 = vunpack.c.h.b16 %v164
    %v904 = vunpack.c.l.b16 %v165
    %v905 = vunpack.c.h.b16 %v165
    %v906 = vunpack.c.l.b16 %v166
    %v907 = vunpack.c.h.b16 %v166
    %v908 = vunpack.c.l.b16 %v167
    %v909 = vunpack.c.h.b16 %v167
    %v910 = vunpack.c.l.b16 %v168
    %v911 = vunpack.c.h.b16 %v168
    %v912 = vunpack.c.l.b16 %v169
    %v913 = vunpack.c.h.b16 %v169
    %v914 = vunpack.c.l.b16 %v170
    %v915 = vunpack.c.h.b16 %v170
    %v916 = vunpack.c.l.b16 %v171
    %v917 = vunpack.c.h.b16 %v171
    %v918 = vunpack.c.l.b16 %v172
    %v919 = vunpack.c.h.b16 %v172
    %v920 = vunpack.c.l.b16 %v173
    %v921 = vunpack.c.h.b16 %v173
    %v922 = vunpack.c.l.b16 %v174
    %v923 = vunpack.c.h.b16 %v174
    %v924 = vunpack.c.l.b16 %v175
    %v925 = vunpack.c.h.b16 %v175
    %v926 = vunpack.c.l.b16 %v176
    %v927 = vunpack.c.h.b16 %v176
    %v928 = vunpack.c.l.b16 %v177
    %v929 = vunpack.c.h.b16 %v177
    %v930 = vunpack.c.l.b16 %v178
    %v931 = vunpack.c.h.b16 %v178
    %v932 = vunpack.c.l.b16 %v179
    %v933 = vunpack.c.h.b16 %v179
    %v934 = vunpack.c.l.b16 %v180
    %v935 = vunpack.c.h.b16 %v180
    %v936 = vunpack.c.l.b16 %v181
    %v937 = vunpack.c.h.b16 %v181
    %v938 = vunpack.c.l.b16 %v182
    %v939 = vunpack.c.h.b16 %v182
    %v940 = vunpack.c.l.b16 %v183
    %v941 = vunpack.c.h.b16 %v183
    %v942 = vunpack.c.l.b16 %v184
    %v943 = vunpack.c.h.b16 %v184
    %v944 = vunpack.c.l.b16 %v185
    %v945 = vunpack.c.h.b16 %v185
    %v946 = vunpack.c.l.b16 %v186
    %v947 = vunpack.c.h.b16 %v186
    %v948 = vunpack.c.l.b16 %v187
    %v949 = vunpack.c.h.b16 %v187
    %v950 = vunpack.c.l.b16 %v188
    %v951 = vunpack.c.h.b16 %v188
    %v952 = vunpack.c.l.b16 %v189
    %v953 = vunpack.c.h.b16 %v189
    %v954 = vunpack.c.l.b16 %v190
    %v955 = vunpack.c.h.b16 %v190
    %v956 = vunpack.c.l.b16 %v191
    %v957 = vunpack.c.h.b16 %v191
    %v958 = vunpack.c.l.b16 %v192
    %v959 = vunpack.c.h.b16 %v192
    %v960 = vunpack.c.l.b16 %v193
    %v961 = vunpack.c.h.b16 %v193
    %v962 = vunpack.c.l.b16 %v194
    %v963 = vunpack.c.h.b16 %v194
    %v964 = vunpack.c.l.b16 %v195
    %v965 = vunpack.c.h.b16 %v195
    %v966 = vunpack.c.l.b16 %v196
    %v967 = vunpack.c.h.b16 %v196
    %v968 = vunpack.c.l.b16 %v197
    %v969 = vunpack.c.h.b16 %v197
    %v970 = vunpack.c.l.b16 %v198
    %v971 = vunpack.c.h.b16 %v198
    %v972 = vunpack.c.l.b16 %v199
    %v973 = vunpack.c.h.b16 %v199
    %v974 = vunpack.c.l.b16 %v200
    %v975 = vunpack.c.h.b16 %v200
    %v976 = vunpack.c.l.b16 %v201
    %v977 = vunpack.c.h.b16 %v201
    %v978 = vunpack.c.l.b16 %v202
    %v979 = vunpack.c.h.b16 %v202
    %v980 = vunpack.c.l.b16 %v203
    %v981 = vunpack.c.h.b16 %v203
    %v982 = vunpack.c.l.b16 %v204
    %v983 = vunpack.c.h.b16 %v204
    %v984 = vunpack.c.l.b16 %v205
    %v985 = vunpack.c.h.b16 %v205
    %v986 = vunpack.c.l.b16 %v206
    %v987 = vunpack.c.h.b16 %v206
    %v988 = vunpack.c.l.b16 %v207
    %v989 = vunpack.c.h.b16 %v207
    %v990 = vunpack.c.l.b16 %v208
    %v991 = vunpack.c.h.b16 %v208
    %v992 = vunpack.c.l.b16 %v209
    %v993 = vunpack.c.h.b16 %v209
    %v994 = vunpack.c.l.b16 %v210
    %v995 = vunpack.c.h.b16 %v210
    %v996 = vunpack.c.l.b16 %v211
    %v997 = vunpack.c.h.b16 %v211
    %v998 = vunpack.c.l.b16 %v212
    %v999 = vunpack.c.h.b16 %v212
    %v1000 = vunpack.c.l.b16 %v213
    %v1001 = vunpack.c.h.b16 %v213
    %v1002 = vunpack.c.l.b16 %v214
    %v1003 = vunpack.c.h.b16 %v214
    %v1004 = vunpack.c.l.b16 %v215
    %v1005 = vunpack.c.h.b16 %v215
    %v1006 = vunpack.c.l.b16 %v216
    %v1007 = vunpack.c.h.b16 %v216
    %v1008 = vunpack.c.l.b16 %v217
    %v1009 = vunpack.c.h.b16 %v217
    %v1010 = vunpack.c.l.b16 %v218
    %v1011 = vunpack.c.h.b16 %v218
    %v1012 = vunpack.c.l.b16 %v219
    %v1013 = vunpack.c.h.b16 %v219
    %v1014 = vunpack.c.l.b16 %v220
    %v1015 = vunpack.c.h.b16 %v220
    %v1016 = vunpack.c.l.b16 %v221
    %v1017 = vunpack.c.h.b16 %v221
    %v1018 = vunpack.c.l.b16 %v222
    %v1019 = vunpack.c.h.b16 %v222
    %v1020 = vunpack.c.l.b16 %v223
    %v1021 = vunpack.c.h.b16 %v223
    %v1022 = vunpack.c.l.b16 %v224
    %v1023 = vunpack.c.h.b16 %v224
    %v1024 = vunpack.c.l.b16 %v225
    %v1025 = vunpack.c.h.b16 %v225
    %v1026 = vunpack.c.l.b16 %v226
    %v1027 = vunpack.c.h.b16 %v226
    %v1028 = vunpack.c.l.b16 %v227
    %v1029 = vunpack.c.h.b16 %v227
    %v1030 = vunpack.c.l.b16 %v228
    %v1031 = vunpack.c.h.b16 %v228
    %v1032 = vunpack.c.l.b16 %v229
    %v1033 = vunpack.c.h.b16 %v229
    %v1034 = vunpack.c.l.b16 %v230
    %v1035 = vunpack.c.h.b16 %v230
    %v1036 = vunpack.c.l.b16 %v231
    %v1037 = vunpack.c.h.b16 %v231
    %v1038 = vunpack.c.l.b16 %v232
    %v1039 = vunpack.c.h.b16 %v232
    %v1040 = vunpack.c.l.b16 %v233
    %v1041 = vunpack.c.h.b16 %v233
    %v1042 = vunpack.c.l.b16 %v234
    %v1043 = vunpack.c.h.b16 %v234
    %v1044 = vunpack.c.l.b16 %v235
    %v1045 = vunpack.c.h.b16 %v235
    %v1046 = vunpack.c.l.b16 %v236
    %v1047 = vunpack.c.h.b16 %v236
    %v1048 = vunpack.c.l.b16 %v237
    %v1049 = vunpack.c.h.b16 %v237
    %v1050 = vunpack.c.l.b16 %v238
    %v1051 = vunpack.c.h.b16 %v238
    %v1052 = vunpack.c.l.b16 %v239
    %v1053 = vunpack.c.h.b16 %v239
    %v1054 = vunpack.c.l.b16 %v240
    %v1055 = vunpack.c.h.b16 %v240
    %v1056 = vunpack.c.l.b16 %v241
    %v1057 = vunpack.c.h.b16 %v241
    %v1058 = vunpack.c.l.b16 %v242
    %v1059 = vunpack.c.h.b16 %v242
    %v1060 = vunpack.c.l.b16 %v243
    %v1061 = vunpack.c.h.b16 %v243
    %v1062 = vunpack.c.l.b16 %v244
    %v1063 = vunpack.c.h.b16 %v244
    %v1064 = vunpack.c.l.b16 %v245
    %v1065 = vunpack.c.h.b16 %v245
    %v1066 = vunpack.c.l.b16 %v246
    %v1067 = vunpack.c.h.b16 %v246
    %v1068 = vunpack.c.l.b16 %v247
    %v1069 = vunpack.c.h.b16 %v247
    %v1070 = vunpack.c.l.b16 %v248
    %v1071 = vunpack.c.h.b16 %v248
    %v1072 = vunpack.c.l.b16 %v249
    %v1073 = vunpack.c.h.b16 %v249
    %v1074 = vunpack.c.l.b16 %v250
    %v1075 = vunpack.c.h.b16 %v250
    %v1076 = vunpack.c.l.b16 %v251
    %v1077 = vunpack.c.h.b16 %v251
    %v1078 = vunpack.c.l.b16 %v252
    %v1079 = vunpack.c.h.b16 %v252
    %v1080 = vunpack.c.l.b16 %v253
    %v1081 = vunpack.c.h.b16 %v253
    %v1082 = vunpack.c.l.b16 %v254
    %v1083 = vunpack.c.h.b16 %v254
    %v1084 = vunpack.c.l.b16 %v255
    %v1085 = vunpack.c.h.b16 %v255
    %v1086 = vunpack.c.l.b16 %v256
    %v1087 = vunpack.c.h.b16 %v256
    %v1088 = vunpack.c.l.b16 %v257
    %v1089 = vunpack.c.h.b16 %v257
    %v1090 = vunpack.c.l.b16 %v258
    %v1091 = vunpack.c.h.b16 %v258
    %v1092 = vunpack.c.l.b16 %v259
    %v1093 = vunpack.c.h.b16 %v259
    %v1094 = vunpack.c.l.b16 %v260
    %v1095 = vunpack.c.h.b16 %v260
    %v1096 = vunpack.c.l.b16 %v261
    %v1097 = vunpack.c.h.b16 %v261
    %v1098 = vunpack.c.l.b16 %v262
    %v1099 = vunpack.c.h.b16 %v262
    %v1100 = vunpack.c.l.b16 %v263
    %v1101 = vunpack.c.h.b16 %v263
    %v1102 = vunpack.c.l.b16 %v264
    %v1103 = vunpack.c.h.b16 %v264
    %v1104 = vunpack.c.l.b16 %v265
    %v1105 = vunpack.c.h.b16 %v265
    %v1106 = vunpack.c.l.b16 %v266
    %v1107 = vunpack.c.h.b16 %v266
    %v1108 = vunpack.c.l.b16 %v267
    %v1109 = vunpack.c.h.b16 %v267
    %v1110 = vunpack.c.l.b16 %v268
    %v1111 = vunpack.c.h.b16 %v268
    %v1112 = vunpack.c.l.b16 %v269
    %v1113 = vunpack.c.h.b16 %v269
    %v1114 = vunpack.c.l.b16 %v270
    %v1115 = vunpack.c.h.b16 %v270
    %v1116 = vunpack.c.l.b16 %v271
    %v1117 = vunpack.c.h.b16 %v271
    %v1118 = vunpack.c.l.b16 %v272
    %v1119 = vunpack.c.h.b16 %v272
    %v1120 = vunpack.c.l.b16 %v273
    %v1121 = vunpack.c.h.b16 %v273
    %v1122 = vunpack.c.l.b16 %v274
    %v1123 = vunpack.c.h.b16 %v274
    %v1124 = vunpack.c.l.b16 %v275
    %v1125 = vunpack.c.h.b16 %v275
    %v1126 = vunpack.c.l.b16 %v276
    %v1127 = vunpack.c.h.b16 %v276
    %v1128 = vunpack.c.l.b16 %v277
    %v1129 = vunpack.c.h.b16 %v277
    %v1130 = vunpack.c.l.b16 %v278
    %v1131 = vunpack.c.h.b16 %v278
    %v1132 = vunpack.c.l.b16 %v279
    %v1133 = vunpack.c.h.b16 %v279
    %v1134 = vunpack.c.l.b16 %v280
    %v1135 = vunpack.c.h.b16 %v280
    %v1136 = vunpack.c.l.b16 %v281
    %v1137 = vunpack.c.h.b16 %v281
    %v1138 = vunpack.c.l.b16 %v282
    %v1139 = vunpack.c.h.b16 %v282
    %v1140 = vunpack.c.l.b16 %v283
    %v1141 = vunpack.c.h.b16 %v283
    %v1142 = vunpack.c.l.b16 %v284
    %v1143 = vunpack.c.h.b16 %v284
    %v1144 = vunpack.c.l.b16 %v285
    %v1145 = vunpack.c.h.b16 %v285
    %v1146 = vunpack.c.l.b16 %v286
    %v1147 = vunpack.c.h.b16 %v286
    %v1148 = vunpack.c.l.b16 %v287
    %v1149 = vunpack.c.h.b16 %v287
    %v1150 = vunpack.c.l.b16 %v288
    %v1151 = vunpack.c.h.b16 %v288
    %v1152 = vunpack.c.l.b16 %v289
    %v1153 = vunpack.c.h.b16 %v289
    %v1154 = vunpack.c.l.b16 %v290
    %v1155 = vunpack.c.h.b16 %v290
    %v1156 = vunpack.c.l.b16 %v291
    %v1157 = vunpack.c.h.b16 %v291
    %v1158 = vunpack.c.l.b16 %v292
    %v1159 = vunpack.c.h.b16 %v292
    %v1160 = vunpack.c.l.b16 %v293
    %v1161 = vunpack.c.h.b16 %v293
    %v1162 = vunpack.c.l.b16 %v294
    %v1163 = vunpack.c.h.b16 %v294
    %v1164 = vunpack.c.l.b16 %v295
    %v1165 = vunpack.c.h.b16 %v295
    %v1166 = vunpack.c.l.b16 %v296
    %v1167 = vunpack.c.h.b16 %v296
    %v1168 = vunpack.c.l.b16 %v297
    %v1169 = vunpack.c.h.b16 %v297
    %v1170 = vunpack.c.l.b16 %v298
    %v1171 = vunpack.c.h.b16 %v298
    %v1172 = vunpack.c.l.b16 %v299
    %v1173 = vunpack.c.h.b16 %v299
    %v1174 = vunpack.c.l.b16 %v300
    %v1175 = vunpack.c.h.b16 %v300
    %v1176 = vunpack.c.l.b16 %v301
    %v1177 = vunpack.c.h.b16 %v301
    %v1178 = vunpack.c.l.b16 %v302
    %v1179 = vunpack.c.h.b16 %v302
    %v1180 = vunpack.c.l.b16 %v303
    %v1181 = vunpack.c.h.b16 %v303
    %v1182 = vunpack.c.l.b16 %v304
    %v1183 = vunpack.c.h.b16 %v304
    %v1184 = vunpack.c.l.b16 %v305
    %v1185 = vunpack.c.h.b16 %v305
    %v1186 = vunpack.c.l.b16 %v306
    %v1187 = vunpack.c.h.b16 %v306
    %v1188 = vunpack.c.l.b16 %v307
    %v1189 = vunpack.c.h.b16 %v307
    %v1190 = vunpack.c.l.b16 %v308
    %v1191 = vunpack.c.h.b16 %v308
    %v1192 = vunpack.c.l.b16 %v309
    %v1193 = vunpack.c.h.b16 %v309
    %v1194 = vunpack.c.l.b16 %v310
    %v1195 = vunpack.c.h.b16 %v310
    %v1196 = vunpack.c.l.b16 %v311
    %v1197 = vunpack.c.h.b16 %v311
    %v1198 = vunpack.c.l.b16 %v312
    %v1199 = vunpack.c.h.b16 %v312
    %v1200 = vunpack.c.l.b16 %v313
    %v1201 = vunpack.c.h.b16 %v313
    %v1202 = vunpack.c.l.b16 %v314
    %v1203 = vunpack.c.h.b16 %v314
    %v1204 = vunpack.c.l.b16 %v315
    %v1205 = vunpack.c.h.b16 %v315
    %v1206 = vpack.c.b16 %v818, %v814
    %v1207 = vpack.c.b16 %v819, %v815
    %v1208 = vpack.c.b16 %v820, %v816
    %v1209 = vpack.c.b16 %v821, %v817
    %v1210 = vpack.c.b16 %v826, %v822
    %v1211 = vpack.c.b16 %v827, %v823
    %v1212 = vpack.c.b16 %v828, %v824
    %v1213 = vpack.c.b16 %v829, %v825
    %v1214 = vpack.c.b16 %v834, %v830
    %v1215 = vpack.c.b16 %v835, %v831
    %v1216 = vpack.c.b16 %v836, %v832
    %v1217 = vpack.c.b16 %v837, %v833
    %v1218 = vpack.c.b16 %v842, %v838
    %v1219 = vpack.c.b16 %v843, %v839
    %v1220 = vpack.c.b16 %v844, %v840
    %v1221 = vpack.c.b16 %v845, %v841
    %v1222 = vpack.c.b16 %v850, %v846
    %v1223 = vpack.c.b16 %v851, %v847
    %v1224 = vpack.c.b16 %v852, %v848
    %v1225 = vpack.c.b16 %v853, %v849
    %v1226 = vpack.c.b16 %v858, %v854
    %v1227 = vpack.c.b16 %v859, %v855
    %v1228 = vpack.c.b16 %v860, %v856
    %v1229 = vpack.c.b16 %v861, %v857
    %v1230 = vpack.c.b16 %v866, %v862
    %v1231 = vpack.c.b16 %v867, %v863
    %v1232 = vpack.c.b16 %v868, %v864
    %v1233 = vpack.c.b16 %v869, %v865
    %v1234 = vpack.c.b16 %v874, %v870
    %v1235 = vpack.c.b16 %v875, %v871
    %v1236 = vpack.c.b16 %v876, %v872
    %v1237 = vpack.c.b16 %v877, %v873
    %v1238 = vpack.c.b16 %v882, %v878
    %v1239 = vpack.c.b16 %v883, %v879
    %v1240 = vpack.c.b16 %v884, %v880
    %v1241 = vpack.c.b16 %v885, %v881
    %v1242 = vpack.c.b16 %v890, %v886
    %v1243 = vpack.c.b16 %v891, %v887
    %v1244 = vpack.c.b16 %v892, %v888
    %v1245 = vpack.c.b16 %v893, %v889
    %v1246 = vpack.c.b16 %v898, %v894
    %v1247 = vpack.c.b16 %v899, %v895
    %v1248 = vpack.c.b16 %v900, %v896
    %v1249 = vpack.c.b16 %v901, %v897
    %v1250 = vpack.c.b16 %v906, %v902
    %v1251 = vpack.c.b16 %v907, %v903
    %v1252 = vpack.c.b16 %v908, %v904
    %v1253 = vpack.c.b16 %v909, %v905
    %v1254 = vpack.c.b16 %v914, %v910
    %v1255 = vpack.c.b16 %v915, %v911
    %v1256 = vpack.c.b16 %v916, %v912
    %v1257 = vpack.c.b16 %v917, %v913
    %v1258 = vpack.c.b16 %v922, %v918
    %v1259 = vpack.c.b16 %v923, %v919
    %v1260 = vpack.c.b16 %v924, %v920
    %v1261 = vpack.c.b16 %v925, %v921
    %v1262 = vpack.c.b16 %v930, %v926
    %v1263 = vpack.c.b16 %v931, %v927
    %v1264 = vpack.c.b16 %v932, %v928
    %v1265 = vpack.c.b16 %v933, %v929
    %v1266 = vpack.c.b16 %v938, %v934
    %v1267 = vpack.c.b16 %v939, %v935
    %v1268 = vpack.c.b16 %v940, %v936
    %v1269 = vpack.c.b16 %v941, %v937
    %v1270 = vpack.c.b16 %v946, %v942
    %v1271 = vpack.c.b16 %v947, %v943
    %v1272 = vpack.c.b16 %v948, %v944
    %v1273 = vpack.c.b16 %v949, %v945
    %v1274 = vpack.c.b16 %v954, %v950
    %v1275 = vpack.c.b16 %v955, %v951
    %v1276 = vpack.c.b16 %v956, %v952
    %v1277 = vpack.c.b16 %v957, %v953
    %v1278 = vpack.c.b16 %v962, %v958
    %v1279 = vpack.c.b16 %v963, %v959
    %v1280 = vpack.c.b16 %v964, %v960
    %v1281 = vpack.c.b16 %v965, %v961
    %v1282 = vpack.c.b16 %v970, %v966
    %v1283 = vpack.c.b16 %v971, %v967
    %v1284 = vpack.c.b16 %v972, %v968
    %v1285 = vpack.c.b16 %v973, %v969
    %v1286 = vpack.c.b16 %v978, %v974
    %v1287 = vpack.c.b16 %v979, %v975
    %v1288 = vpack.c.b16 %v980, %v976
    %v1289 = vpack.c.b16 %v981, %v977
    %v1290 = vpack.c.b16 %v986, %v982
    %v1291 = vpack.c.b16 %v987, %v983
    %v1292 = vpack.c.b16 %v988, %v984
    %v1293 = vpack.c.b16 %v989, %v985
    %v1294 = vpack.c.b16 %v994, %v990
    %v1295 = vpack.c.b16 %v995, %v991
    %v1296 = vpack.c.b16 %v996, %v992
    %v1297 = vpack.c.b16 %v997, %v993
    %v1298 = vpack.c.b16 %v1002, %v998
    %v1299 = vpack.c.b16 %v1003, %v999
    %v1300 = vpack.c.b16 %v1004, %v1000
    %v1301 = vpack.c.b16 %v1005, %v1001
    %v1302 = vpack.c.b16 %v1010, %v1006
    %v1303 = vpack.c.b16 %v1011, %v1007
    %v1304 = vpack.c.b16 %v1012, %v1008
    %v1305 = vpack.c.b16 %v1013, %v1009
    %v1306 = vpack.c.b16 %v1018, %v1014
    %v1307 = vpack.c.b16 %v1019, %v1015
    %v1308 = vpack.c.b16 %v1020, %v1016
    %v1309 = vpack.c.b16 %v1021, %v1017
    %v1310 = vpack.c.b16 %v1026, %v1022
    %v1311 = vpack.c.b16 %v1027, %v1023
    %v1312 = vpack.c.b16 %v1028, %v1024
    %v1313 = vpack.c.b16 %v1029, %v1025
    %v1314 = vpack.c.b16 %v1034, %v1030
    %v1315 = vpack.c.b16 %v1035, %v1031
    %v1316 = vpack.c.b16 %v1036, %v1032
    %v1317 = vpack.c.b16 %v1037, %v1033
    %v1318 = vpack.c.b16 %v1042, %v1038
    %v1319 = vpack.c.b16 %v1043, %v1039
    %v1320 = vpack.c.b16 %v1044, %v1040
    %v1321 = vpack.c.b16 %v1045, %v1041
    %v1322 = vpack.c.b16 %v1050, %v1046
    %v1323 = vpack.c.b16 %v1051, %v1047
    %v1324 = vpack.c.b16 %v1052, %v1048
    %v1325 = vpack.c.b16 %v1053, %v1049
    %v1326 = vpack.c.b16 %v1058, %v1054
    %v1327 = vpack.c.b16 %v1059, %v1055
    %v1328 = vpack.c.b16 %v1060, %v1056
    %v1329 = vpack.c.b16 %v1061, %v1057
    %v1330 = vpack.c.b16 %v1066, %v1062
    %v1331 = vpack.c.b16 %v1067, %v1063
    %v1332 = vpack.c.b16 %v1068, %v1064
    %v1333 = vpack.c.b16 %v1069, %v1065
    %v1334 = vpack.c.b16 %v1074, %v1070
    %v1335 = vpack.c.b16 %v1075, %v1071
    %v1336 = vpack.c.b16 %v1076, %v1072
    %v1337 = vpack.c.b16 %v1077, %v1073
    %v1338 = vpack.c.b16 %v1082, %v1078
    %v1339 = vpack.c.b16 %v1083, %v1079
    %v1340 = vpack.c.b16 %v1084, %v1080
    %v1341 = vpack.c.b16 %v1085, %v1081
    %v1342 = vpack.c.b16 %v1090, %v1086
    %v1343 = vpack.c.b16 %v1091, %v1087
    %v1344 = vpack.c.b16 %v1092, %v1088
    %v1345 = vpack.c.b16 %v1093, %v1089
    %v1346 = vpack.c.b16 %v1098, %v1094
    %v1347 = vpack.c.b16 %v1099, %v1095
    %v1348 = vpack.c.b16 %v1100, %v1096
    %v1349 = vpack.c.b16 %v1101, %v1097
    %v1350 = vpack.c.b16 %v1106, %v1102
    %v1351 = vpack.c.b16 %v1107, %v1103
    %v1352 = vpack.c.b16 %v1108, %v1104
    %v1353 = vpack.c.b16 %v1109, %v1105
    %v1354 = vpack.c.b16 %v1114, %v1110
    %v1355 = vpack.c.b16 %v1115, %v1111
    %v1356 = vpack.c.b16 %v1116, %v1112
    %v1357 = vpack.c.b16 %v1117, %v1113
    %v1358 = vpack.c.b16 %v1122, %v1118
    %v1359 = vpack.c.b16 %v1123, %v1119
    %v1360 = vpack.c.b16 %v1124, %v1120
    %v1361 = vpack.c.b16 %v1125, %v1121
    %v1362 = vpack.c.b16 %v1130, %v1126
    %v1363 = vpack.c.b16 %v1131, %v1127
    %v1364 = vpack.c.b16 %v1132, %v1128
    %v1365 = vpack.c.b16 %v1133, %v1129
    %v1366 = vpack.c.b16 %v1138, %v1134
    %v1367 = vpack.c.b16 %v1139, %v1135
    %v1368 = vpack.c.b16 %v1140, %v1136
    %v1369 = vpack.c.b16 %v1141, %v1137
    %v1370 = vpack.c.b16 %v1146, %v1142
    %v1371 = vpack.c.b16 %v1147, %v1143
    %v1372 = vpack.c.b16 %v1148, %v1144
    %v1373 = vpack.c.b16 %v1149, %v1145
    %v1374 = vpack.c.b16 %v1154, %v1150
    %v1375 = vpack.c.b16 %v1155, %v1151
    %v1376 = vpack.c.b16 %v1156, %v1152
    %v1377 = vpack.c.b16 %v1157, %v1153
    %v1378 = vpack.c.b16 %v1162, %v1158
    %v1379 = vpack.c.b16 %v1163, %v1159
    %v1380 = vpack.c.b16 %v1164, %v1160
    %v1381 = vpack.c.b16 %v1165, %v1161
    %v1382 = vpack.c.b16 %v1170, %v1166
    %v1383 = vpack.c.b16 %v1171, %v1167
    %v1384 = vpack.c.b16 %v1172, %v1168
    %v1385 = vpack.c.b16 %v1173, %v1169
    %v1386 = vpack.c.b16 %v1178, %v1174
    %v1387 = vpack.c.b16 %v1179, %v1175
    %v1388 = vpack.c.b16 %v1180, %v1176
    %v1389 = vpack.c.b16 %v1181, %v1177
    %v1390 = vpack.c.b16 %v1186, %v1182
    %v1391 = vpack.c.b16 %v1187, %v1183
    %v1392 = vpack.c.b16 %v1188, %v1184
    %v1393 = vpack.c.b16 %v1189, %v1185
    %v1394 = vpack.c.b16 %v1194, %v1190
    %v1395 = vpack.c.b16 %v1195, %v1191
    %v1396 = vpack.c.b16 %v1196, %v1192
    %v1397 = vpack.c.b16 %v1197, %v1193
    %v1398 = vpack.c.b16 %v1202, %v1198
    %v1399 = vpack.c.b16 %v1203, %v1199
    %v1400 = vpack.c.b16 %v1204, %v1200
    %v1401 = vpack.c.b16 %v1205, %v1201
    %vm1598 = vcmask 130048
    %v1600 = vsel %vm1598, %v520, 0
    %v1603 = vsel %vm1598, %v527, 0
    %v1606 = vsel %vm1598, %v534, 0
    %v1609 = vsel %vm1598, %v541, 0
    %v1612 = vsel %vm1598, %v548, 0
    %v1615 = vsel %vm1598, %v555, 0
    %v1618 = vsel %vm1598, %v562, 0
    %v1621 = vsel %vm1598, %v569, 0
    %1623 = vmatprep.subr.bf16.mxu0 %v1207
    %1624 = vmatpush1.bf16.msra.mxu0 %v1206
    %1625 = vmatprep.subr.bf16.mxu0 %v1211
    %1626 = vmatpush1.bf16.msra.mxu0 %v1210
    %1627 = vmatprep.subr.bf16.mxu0 %v1215
    %1628 = vmatpush1.bf16.msra.mxu0 %v1214
    %1629 = vmatprep.subr.bf16.mxu0 %v1219
    %1630 = vmatpush1.bf16.msra.mxu0 %v1218
    %1631 = vmatprep.subr.bf16.mxu0 %v1223
    %1632 = vmatpush1.bf16.msra.mxu0 %v1222
    %1633 = vmatprep.subr.bf16.mxu0 %v1227
    %1634 = vmatpush1.bf16.msra.mxu0 %v1226
    %1635 = vmatprep.subr.bf16.mxu0 %v1231
    %1636 = vmatpush1.bf16.msra.mxu0 %v1230
    %1637 = vmatprep.subr.bf16.mxu0 %v1235
    %1638 = vmatpush1.bf16.msra.mxu0 %v1234
    %1639 = vmatprep.subr.bf16.mxu0 %v1239
    %1640 = vmatpush1.bf16.msra.mxu0 %v1238
    %1641 = vmatprep.subr.bf16.mxu0 %v1243
    %1642 = vmatpush1.bf16.msra.mxu0 %v1242
    %1643 = vmatprep.subr.bf16.mxu0 %v1247
    %1644 = vmatpush1.bf16.msra.mxu0 %v1246
    %1645 = vmatprep.subr.bf16.mxu0 %v1251
    %1646 = vmatpush1.bf16.msra.mxu0 %v1250
    %1647 = vmatprep.subr.bf16.mxu0 %v1255
    %1648 = vmatpush1.bf16.msra.mxu0 %v1254
    %1649 = vmatprep.subr.bf16.mxu0 %v1259
    %1650 = vmatpush1.bf16.msra.mxu0 %v1258
    %1651 = vmatprep.subr.bf16.mxu0 %v1263
    %1652 = vmatpush1.bf16.msra.mxu0 %v1262
    %1653 = vmatprep.subr.bf16.mxu0 %v1267
    %1654 = vmatpush1.bf16.msra.mxu0 %v1266
    %1655 = vmatprep.mubr.bf16.mxu0 %v515
    %1656 = vmatmul.mubr.bf16.gmra.mrb[0].mxu0 %v514
    %v1657 = vpop.f32.mrb[0].mxu0
    %v1658 = vadd.f32 %v321, %v1657
    %v1659 = vpop.f32.mrb[0].mxu0
    %v1660 = vadd.f32 %v325, %v1659
    %v1661 = vpop.f32.mrb[0].mxu0
    %v1662 = vadd.f32 %v321, %v1661
    %v1663 = vpop.f32.mrb[0].mxu0
    %v1664 = vadd.f32 %v325, %v1663
    %1665 = vmatprep.mubr.bf16.mxu0 %v522
    %1666 = vmatmul.mubr.bf16.gmra.mrb[0].mxu0 %v521
    %v1667 = vpop.f32.mrb[0].mxu0
    %v1668 = vadd.f32 %v321, %v1667
    %v1669 = vpop.f32.mrb[0].mxu0
    %v1670 = vadd.f32 %v325, %v1669
    %v1671 = vpop.f32.mrb[0].mxu0
    %v1672 = vadd.f32 %v321, %v1671
    %v1673 = vpop.f32.mrb[0].mxu0
    %v1674 = vadd.f32 %v325, %v1673
    %1675 = vmatprep.mubr.bf16.mxu0 %v529
    %1676 = vmatmul.mubr.bf16.gmra.mrb[0].mxu0 %v528
    %v1677 = vpop.f32.mrb[0].mxu0
    %v1678 = vadd.f32 %v321, %v1677
    %v1679 = vpop.f32.mrb[0].mxu0
    %v1680 = vadd.f32 %v325, %v1679
    %v1681 = vpop.f32.mrb[0].mxu0
    %v1682 = vadd.f32 %v321, %v1681
    %v1683 = vpop.f32.mrb[0].mxu0
    %v1684 = vadd.f32 %v325, %v1683
    %1685 = vmatprep.mubr.bf16.mxu0 %v536
    %1686 = vmatmul.mubr.bf16.gmra.mrb[0].mxu0 %v535
    %v1687 = vpop.f32.mrb[0].mxu0
    %v1688 = vadd.f32 %v321, %v1687
    %v1689 = vpop.f32.mrb[0].mxu0
    %v1690 = vadd.f32 %v325, %v1689
    %v1691 = vpop.f32.mrb[0].mxu0
    %v1692 = vadd.f32 %v321, %v1691
    %v1693 = vpop.f32.mrb[0].mxu0
    %v1694 = vadd.f32 %v325, %v1693
    %1695 = vmatprep.mubr.bf16.mxu0 %v543
    %1696 = vmatmul.mubr.bf16.gmra.mrb[0].mxu0 %v542
    %v1697 = vpop.f32.mrb[0].mxu0
    %v1698 = vadd.f32 %v321, %v1697
    %v1699 = vpop.f32.mrb[0].mxu0
    %v1700 = vadd.f32 %v325, %v1699
    %v1701 = vpop.f32.mrb[0].mxu0
    %v1702 = vadd.f32 %v321, %v1701
    %v1703 = vpop.f32.mrb[0].mxu0
    %v1704 = vadd.f32 %v325, %v1703
    %1705 = vmatprep.mubr.bf16.mxu0 %v550
    %1706 = vmatmul.mubr.bf16.gmra.mrb[0].mxu0 %v549
    %v1707 = vpop.f32.mrb[0].mxu0
    %v1708 = vadd.f32 %v321, %v1707
    %v1709 = vpop.f32.mrb[0].mxu0
    %v1710 = vadd.f32 %v325, %v1709
    %v1711 = vpop.f32.mrb[0].mxu0
    %v1712 = vadd.f32 %v321, %v1711
    %v1713 = vpop.f32.mrb[0].mxu0
    %v1714 = vadd.f32 %v325, %v1713
    %1715 = vmatprep.mubr.bf16.mxu0 %v557
    %1716 = vmatmul.mubr.bf16.gmra.mrb[0].mxu0 %v556
    %v1717 = vpop.f32.mrb[0].mxu0
    %v1718 = vadd.f32 %v321, %v1717
    %v1719 = vpop.f32.mrb[0].mxu0
    %v1720 = vadd.f32 %v325, %v1719
    %v1721 = vpop.f32.mrb[0].mxu0
    %v1722 = vadd.f32 %v321, %v1721
    %v1723 = vpop.f32.mrb[0].mxu0
    %v1724 = vadd.f32 %v325, %v1723
    %1725 = vmatprep.mubr.bf16.mxu0 %v564
    %1726 = vmatmul.mubr.bf16.gmra.mrb[0].mxu0 %v563
    %v1727 = vpop.f32.mrb[0].mxu0
    %v1728 = vadd.f32 %v321, %v1727
    %v1729 = vpop.f32.mrb[0].mxu0
    %v1730 = vadd.f32 %v325, %v1729
    %v1731 = vpop.f32.mrb[0].mxu0
    %v1732 = vadd.f32 %v321, %v1731
    %v1733 = vpop.f32.mrb[0].mxu0
    %v1734 = vadd.f32 %v325, %v1733
    %1735 = vdwg.mxu0
    %1736 = vmatprep.subr.bf16.mxu0 %v1271
    %1737 = vmatpush1.bf16.msra.mxu0 %v1270
    %1738 = vmatprep.subr.bf16.mxu0 %v1275
    %1739 = vmatpush1.bf16.msra.mxu0 %v1274
    %1740 = vmatprep.subr.bf16.mxu0 %v1279
    %1741 = vmatpush1.bf16.msra.mxu0 %v1278
    %1742 = vmatprep.subr.bf16.mxu0 %v1283
    %1743 = vmatpush1.bf16.msra.mxu0 %v1282
    %1744 = vmatprep.subr.bf16.mxu0 %v1287
    %1745 = vmatpush1.bf16.msra.mxu0 %v1286
    %1746 = vmatprep.subr.bf16.mxu0 %v1291
    %1747 = vmatpush1.bf16.msra.mxu0 %v1290
    %1748 = vmatprep.subr.bf16.mxu0 %v1295
    %1749 = vmatpush1.bf16.msra.mxu0 %v1294
    %1750 = vmatprep.subr.bf16.mxu0 %v1299
    %1751 = vmatpush1.bf16.msra.mxu0 %v1298
    %1752 = vmatprep.subr.bf16.mxu0 %v1303
    %1753 = vmatpush1.bf16.msra.mxu0 %v1302
    %1754 = vmatprep.subr.bf16.mxu0 %v1307
    %1755 = vmatpush1.bf16.msra.mxu0 %v1306
    %1756 = vmatprep.subr.bf16.mxu0 %v1311
    %1757 = vmatpush1.bf16.msra.mxu0 %v1310
    %1758 = vmatprep.subr.bf16.mxu0 %v1315
    %1759 = vmatpush1.bf16.msra.mxu0 %v1314
    %1760 = vmatprep.subr.bf16.mxu0 %v1319
    %1761 = vmatpush1.bf16.msra.mxu0 %v1318
    %1762 = vmatprep.subr.bf16.mxu0 %v1323
    %1763 = vmatpush1.bf16.msra.mxu0 %v1322
    %1764 = vmatprep.subr.bf16.mxu0 %v1327
    %1765 = vmatpush1.bf16.msra.mxu0 %v1326
    %1766 = vmatprep.subr.bf16.mxu0 %v1331
    %1767 = vmatpush1.bf16.msra.mxu0 %v1330
    %1768 = vmatprep.mubr.bf16.mxu0 %v517
    %1769 = vmatmul.mubr.bf16.gmra.mrb[0].mxu0 %v516
    %v1770 = vpop.f32.mrb[0].mxu0
    %v1771 = vadd.f32 %v1658, %v1770
    %v1772 = vpop.f32.mrb[0].mxu0
    %v1773 = vadd.f32 %v1660, %v1772
    %v1774 = vpop.f32.mrb[0].mxu0
    %v1775 = vadd.f32 %v1662, %v1774
    %v1776 = vpop.f32.mrb[0].mxu0
    %v1777 = vadd.f32 %v1664, %v1776
    %1778 = vmatprep.mubr.bf16.mxu0 %v524
    %1779 = vmatmul.mubr.bf16.gmra.mrb[0].mxu0 %v523
    %v1780 = vpop.f32.mrb[0].mxu0
    %v1781 = vadd.f32 %v1668, %v1780
    %v1782 = vpop.f32.mrb[0].mxu0
    %v1783 = vadd.f32 %v1670, %v1782
    %v1784 = vpop.f32.mrb[0].mxu0
    %v1785 = vadd.f32 %v1672, %v1784
    %v1786 = vpop.f32.mrb[0].mxu0
    %v1787 = vadd.f32 %v1674, %v1786
    %1788 = vmatprep.mubr.bf16.mxu0 %v531
    %1789 = vmatmul.mubr.bf16.gmra.mrb[0].mxu0 %v530
    %v1790 = vpop.f32.mrb[0].mxu0
    %v1791 = vadd.f32 %v1678, %v1790
    %v1792 = vpop.f32.mrb[0].mxu0
    %v1793 = vadd.f32 %v1680, %v1792
    %v1794 = vpop.f32.mrb[0].mxu0
    %v1795 = vadd.f32 %v1682, %v1794
    %v1796 = vpop.f32.mrb[0].mxu0
    %v1797 = vadd.f32 %v1684, %v1796
    %1798 = vmatprep.mubr.bf16.mxu0 %v538
    %1799 = vmatmul.mubr.bf16.gmra.mrb[0].mxu0 %v537
    %v1800 = vpop.f32.mrb[0].mxu0
    %v1801 = vadd.f32 %v1688, %v1800
    %v1802 = vpop.f32.mrb[0].mxu0
    %v1803 = vadd.f32 %v1690, %v1802
    %v1804 = vpop.f32.mrb[0].mxu0
    %v1805 = vadd.f32 %v1692, %v1804
    %v1806 = vpop.f32.mrb[0].mxu0
    %v1807 = vadd.f32 %v1694, %v1806
    %1808 = vmatprep.mubr.bf16.mxu0 %v545
    %1809 = vmatmul.mubr.bf16.gmra.mrb[0].mxu0 %v544
    %v1810 = vpop.f32.mrb[0].mxu0
    %v1811 = vadd.f32 %v1698, %v1810
    %v1812 = vpop.f32.mrb[0].mxu0
    %v1813 = vadd.f32 %v1700, %v1812
    %v1814 = vpop.f32.mrb[0].mxu0
    %v1815 = vadd.f32 %v1702, %v1814
    %v1816 = vpop.f32.mrb[0].mxu0
    %v1817 = vadd.f32 %v1704, %v1816
    %1818 = vmatprep.mubr.bf16.mxu0 %v552
    %1819 = vmatmul.mubr.bf16.gmra.mrb[0].mxu0 %v551
    %v1820 = vpop.f32.mrb[0].mxu0
    %v1821 = vadd.f32 %v1708, %v1820
    %v1822 = vpop.f32.mrb[0].mxu0
    %v1823 = vadd.f32 %v1710, %v1822
    %v1824 = vpop.f32.mrb[0].mxu0
    %v1825 = vadd.f32 %v1712, %v1824
    %v1826 = vpop.f32.mrb[0].mxu0
    %v1827 = vadd.f32 %v1714, %v1826
    %1828 = vmatprep.mubr.bf16.mxu0 %v559
    %1829 = vmatmul.mubr.bf16.gmra.mrb[0].mxu0 %v558
    %v1830 = vpop.f32.mrb[0].mxu0
    %v1831 = vadd.f32 %v1718, %v1830
    %v1832 = vpop.f32.mrb[0].mxu0
    %v1833 = vadd.f32 %v1720, %v1832
    %v1834 = vpop.f32.mrb[0].mxu0
    %v1835 = vadd.f32 %v1722, %v1834
    %v1836 = vpop.f32.mrb[0].mxu0
    %v1837 = vadd.f32 %v1724, %v1836
    %1838 = vmatprep.mubr.bf16.mxu0 %v566
    %1839 = vmatmul.mubr.bf16.gmra.mrb[0].mxu0 %v565
    %v1840 = vpop.f32.mrb[0].mxu0
    %v1841 = vadd.f32 %v1728, %v1840
    %v1842 = vpop.f32.mrb[0].mxu0
    %v1843 = vadd.f32 %v1730, %v1842
    %v1844 = vpop.f32.mrb[0].mxu0
    %v1845 = vadd.f32 %v1732, %v1844
    %v1846 = vpop.f32.mrb[0].mxu0
    %v1847 = vadd.f32 %v1734, %v1846
    %1848 = vdwg.mxu0
    %1849 = vmatprep.subr.bf16.mxu0 %v1335
    %1850 = vmatpush1.bf16.msra.mxu0 %v1334
    %1851 = vmatprep.subr.bf16.mxu0 %v1339
    %1852 = vmatpush1.bf16.msra.mxu0 %v1338
    %1853 = vmatprep.subr.bf16.mxu0 %v1343
    %1854 = vmatpush1.bf16.msra.mxu0 %v1342
    %1855 = vmatprep.subr.bf16.mxu0 %v1347
    %1856 = vmatpush1.bf16.msra.mxu0 %v1346
    %1857 = vmatprep.subr.bf16.mxu0 %v1351
    %1858 = vmatpush1.bf16.msra.mxu0 %v1350
    %1859 = vmatprep.subr.bf16.mxu0 %v1355
    %1860 = vmatpush1.bf16.msra.mxu0 %v1354
    %1861 = vmatprep.subr.bf16.mxu0 %v1359
    %1862 = vmatpush1.bf16.msra.mxu0 %v1358
    %1863 = vmatprep.subr.bf16.mxu0 %v1363
    %1864 = vmatpush1.bf16.msra.mxu0 %v1362
    %1865 = vmatprep.subr.bf16.mxu0 %v1367
    %1866 = vmatpush1.bf16.msra.mxu0 %v1366
    %1867 = vmatprep.subr.bf16.mxu0 %v1371
    %1868 = vmatpush1.bf16.msra.mxu0 %v1370
    %1869 = vmatprep.subr.bf16.mxu0 %v1375
    %1870 = vmatpush1.bf16.msra.mxu0 %v1374
    %1871 = vmatprep.subr.bf16.mxu0 %v1379
    %1872 = vmatpush1.bf16.msra.mxu0 %v1378
    %1873 = vmatprep.subr.bf16.mxu0 %v1383
    %1874 = vmatpush1.bf16.msra.mxu0 %v1382
    %1875 = vmatprep.subr.bf16.mxu0 %v1387
    %1876 = vmatpush1.bf16.msra.mxu0 %v1386
    %1877 = vmatprep.subr.bf16.mxu0 %v1391
    %1878 = vmatpush1.bf16.msra.mxu0 %v1390
    %1879 = vmatprep.subr.bf16.mxu0 %v1395
    %1880 = vmatpush1.bf16.msra.mxu0 %v1394
    %1881 = vmatprep.mubr.bf16.mxu0 %v519
    %1882 = vmatmul.mubr.bf16.gmra.mrb[0].mxu0 %v518
    %v1883 = vpop.f32.mrb[0].mxu0
    %v1884 = vadd.f32 %v1771, %v1883
    %v1885 = vpop.f32.mrb[0].mxu0
    %v1886 = vadd.f32 %v1773, %v1885
    %v1887 = vpop.f32.mrb[0].mxu0
    %v1888 = vadd.f32 %v1775, %v1887
    %v1889 = vpop.f32.mrb[0].mxu0
    %v1890 = vadd.f32 %v1777, %v1889
    %1891 = vmatprep.mubr.bf16.mxu0 %v526
    %1892 = vmatmul.mubr.bf16.gmra.mrb[0].mxu0 %v525
    %v1893 = vpop.f32.mrb[0].mxu0
    %v1894 = vadd.f32 %v1781, %v1893
    %v1895 = vpop.f32.mrb[0].mxu0
    %v1896 = vadd.f32 %v1783, %v1895
    %v1897 = vpop.f32.mrb[0].mxu0
    %v1898 = vadd.f32 %v1785, %v1897
    %v1899 = vpop.f32.mrb[0].mxu0
    %v1900 = vadd.f32 %v1787, %v1899
    %1901 = vmatprep.mubr.bf16.mxu0 %v533
    %1902 = vmatmul.mubr.bf16.gmra.mrb[0].mxu0 %v532
    %v1903 = vpop.f32.mrb[0].mxu0
    %v1904 = vadd.f32 %v1791, %v1903
    %v1905 = vpop.f32.mrb[0].mxu0
    %v1906 = vadd.f32 %v1793, %v1905
    %v1907 = vpop.f32.mrb[0].mxu0
    %v1908 = vadd.f32 %v1795, %v1907
    %v1909 = vpop.f32.mrb[0].mxu0
    %v1910 = vadd.f32 %v1797, %v1909
    %1911 = vmatprep.mubr.bf16.mxu0 %v540
    %1912 = vmatmul.mubr.bf16.gmra.mrb[0].mxu0 %v539
    %v1913 = vpop.f32.mrb[0].mxu0
    %v1914 = vadd.f32 %v1801, %v1913
    %v1915 = vpop.f32.mrb[0].mxu0
    %v1916 = vadd.f32 %v1803, %v1915
    %v1917 = vpop.f32.mrb[0].mxu0
    %v1918 = vadd.f32 %v1805, %v1917
    %v1919 = vpop.f32.mrb[0].mxu0
    %v1920 = vadd.f32 %v1807, %v1919
    %1921 = vmatprep.mubr.bf16.mxu0 %v547
    %1922 = vmatmul.mubr.bf16.gmra.mrb[0].mxu0 %v546
    %v1923 = vpop.f32.mrb[0].mxu0
    %v1924 = vadd.f32 %v1811, %v1923
    %v1925 = vpop.f32.mrb[0].mxu0
    %v1926 = vadd.f32 %v1813, %v1925
    %v1927 = vpop.f32.mrb[0].mxu0
    %v1928 = vadd.f32 %v1815, %v1927
    %v1929 = vpop.f32.mrb[0].mxu0
    %v1930 = vadd.f32 %v1817, %v1929
    %1931 = vmatprep.mubr.bf16.mxu0 %v554
    %1932 = vmatmul.mubr.bf16.gmra.mrb[0].mxu0 %v553
    %v1933 = vpop.f32.mrb[0].mxu0
    %v1934 = vadd.f32 %v1821, %v1933
    %v1935 = vpop.f32.mrb[0].mxu0
    %v1936 = vadd.f32 %v1823, %v1935
    %v1937 = vpop.f32.mrb[0].mxu0
    %v1938 = vadd.f32 %v1825, %v1937
    %v1939 = vpop.f32.mrb[0].mxu0
    %v1940 = vadd.f32 %v1827, %v1939
    %1941 = vmatprep.mubr.bf16.mxu0 %v561
    %1942 = vmatmul.mubr.bf16.gmra.mrb[0].mxu0 %v560
    %v1943 = vpop.f32.mrb[0].mxu0
    %v1944 = vadd.f32 %v1831, %v1943
    %v1945 = vpop.f32.mrb[0].mxu0
    %v1946 = vadd.f32 %v1833, %v1945
    %v1947 = vpop.f32.mrb[0].mxu0
    %v1948 = vadd.f32 %v1835, %v1947
    %v1949 = vpop.f32.mrb[0].mxu0
    %v1950 = vadd.f32 %v1837, %v1949
    %1951 = vmatprep.mubr.bf16.mxu0 %v568
    %1952 = vmatmul.mubr.bf16.gmra.mrb[0].mxu0 %v567
    %v1953 = vpop.f32.mrb[0].mxu0
    %v1954 = vadd.f32 %v1841, %v1953
    %v1955 = vpop.f32.mrb[0].mxu0
    %v1956 = vadd.f32 %v1843, %v1955
    %v1957 = vpop.f32.mrb[0].mxu0
    %v1958 = vadd.f32 %v1845, %v1957
    %v1959 = vpop.f32.mrb[0].mxu0
    %v1960 = vadd.f32 %v1847, %v1959
    %1961 = vdwg.mxu0
    %1962 = vmatprep.subr.bf16.mxu0 %v1399
    %1963 = vmatpush1.bf16.msra.mxu0 %v1398
    %1964 = vmatprep.subr.bf16.mxu0 0
    %1965 = vmatpush1.bf16.msra.mxu0 0
    %1966 = vmatprep.subr.bf16.mxu0 0
    %1967 = vmatpush1.bf16.msra.mxu0 0
    %1968 = vmatprep.subr.bf16.mxu0 0
    %1969 = vmatpush1.bf16.msra.mxu0 0
    %1970 = vmatprep.subr.bf16.mxu0 0
    %1971 = vmatpush1.bf16.msra.mxu0 0
    %1972 = vmatprep.subr.bf16.mxu0 0
    %1973 = vmatpush1.bf16.msra.mxu0 0
    %1974 = vmatprep.subr.bf16.mxu0 0
    %1975 = vmatpush1.bf16.msra.mxu0 0
    %1976 = vmatprep.subr.bf16.mxu0 0
    %1977 = vmatpush1.bf16.msra.mxu0 0
    %1978 = vmatprep.subr.bf16.mxu0 0
    %1979 = vmatpush1.bf16.msra.mxu0 0
    %1980 = vmatprep.subr.bf16.mxu0 0
    %1981 = vmatpush1.bf16.msra.mxu0 0
    %1982 = vmatprep.subr.bf16.mxu0 0
    %1983 = vmatpush1.bf16.msra.mxu0 0
    %1984 = vmatprep.subr.bf16.mxu0 0
    %1985 = vmatpush1.bf16.msra.mxu0 0
    %1986 = vmatprep.subr.bf16.mxu0 0
    %1987 = vmatpush1.bf16.msra.mxu0 0
    %1988 = vmatprep.subr.bf16.mxu0 0
    %1989 = vmatpush1.bf16.msra.mxu0 0
    %1990 = vmatprep.subr.bf16.mxu0 0
    %1991 = vmatpush1.bf16.msra.mxu0 0
    %1992 = vmatprep.subr.bf16.mxu0 0
    %1993 = vmatpush1.bf16.msra.mxu0 0
    %1994 = vmatprep.mubr.bf16.mxu0 0
    %1995 = vmatmul.mubr.bf16.gmra.mrb[0].mxu0 %v1600
    %v1996 = vpop.f32.mrb[0].mxu0
    %v1997 = vadd.f32 %v1884, %v1996
    %v1998 = vpop.f32.mrb[0].mxu0
    %v1999 = vadd.f32 %v1886, %v1998
    %v2000 = vpop.f32.mrb[0].mxu0
    %v2001 = vadd.f32 %v1888, %v2000
    %v2002 = vpop.f32.mrb[0].mxu0
    %v2003 = vadd.f32 %v1890, %v2002
    %2004 = vmatprep.mubr.bf16.mxu0 0
    %2005 = vmatmul.mubr.bf16.gmra.mrb[0].mxu0 %v1603
    %v2006 = vpop.f32.mrb[0].mxu0
    %v2007 = vadd.f32 %v1894, %v2006
    %v2008 = vpop.f32.mrb[0].mxu0
    %v2009 = vadd.f32 %v1896, %v2008
    %v2010 = vpop.f32.mrb[0].mxu0
    %v2011 = vadd.f32 %v1898, %v2010
    %v2012 = vpop.f32.mrb[0].mxu0
    %v2013 = vadd.f32 %v1900, %v2012
    %2014 = vmatprep.mubr.bf16.mxu0 0
    %2015 = vmatmul.mubr.bf16.gmra.mrb[0].mxu0 %v1606
    %v2016 = vpop.f32.mrb[0].mxu0
    %v2017 = vadd.f32 %v1904, %v2016
    %v2018 = vpop.f32.mrb[0].mxu0
    %v2019 = vadd.f32 %v1906, %v2018
    %v2020 = vpop.f32.mrb[0].mxu0
    %v2021 = vadd.f32 %v1908, %v2020
    %v2022 = vpop.f32.mrb[0].mxu0
    %v2023 = vadd.f32 %v1910, %v2022
    %2024 = vmatprep.mubr.bf16.mxu0 0
    %2025 = vmatmul.mubr.bf16.gmra.mrb[0].mxu0 %v1609
    %v2026 = vpop.f32.mrb[0].mxu0
    %v2027 = vadd.f32 %v1914, %v2026
    %v2028 = vpop.f32.mrb[0].mxu0
    %v2029 = vadd.f32 %v1916, %v2028
    %v2030 = vpop.f32.mrb[0].mxu0
    %v2031 = vadd.f32 %v1918, %v2030
    %v2032 = vpop.f32.mrb[0].mxu0
    %v2033 = vadd.f32 %v1920, %v2032
    %2034 = vmatprep.mubr.bf16.mxu0 0
    %2035 = vmatmul.mubr.bf16.gmra.mrb[0].mxu0 %v1612
    %v2036 = vpop.f32.mrb[0].mxu0
    %v2037 = vadd.f32 %v1924, %v2036
    %v2038 = vpop.f32.mrb[0].mxu0
    %v2039 = vadd.f32 %v1926, %v2038
    %v2040 = vpop.f32.mrb[0].mxu0
    %v2041 = vadd.f32 %v1928, %v2040
    %v2042 = vpop.f32.mrb[0].mxu0
    %v2043 = vadd.f32 %v1930, %v2042
    %2044 = vmatprep.mubr.bf16.mxu0 0
    %2045 = vmatmul.mubr.bf16.gmra.mrb[0].mxu0 %v1615
    %v2046 = vpop.f32.mrb[0].mxu0
    %v2047 = vadd.f32 %v1934, %v2046
    %v2048 = vpop.f32.mrb[0].mxu0
    %v2049 = vadd.f32 %v1936, %v2048
    %v2050 = vpop.f32.mrb[0].mxu0
    %v2051 = vadd.f32 %v1938, %v2050
    %v2052 = vpop.f32.mrb[0].mxu0
    %v2053 = vadd.f32 %v1940, %v2052
    %2054 = vmatprep.mubr.bf16.mxu0 0
    %2055 = vmatmul.mubr.bf16.gmra.mrb[0].mxu0 %v1618
    %v2056 = vpop.f32.mrb[0].mxu0
    %v2057 = vadd.f32 %v1944, %v2056
    %v2058 = vpop.f32.mrb[0].mxu0
    %v2059 = vadd.f32 %v1946, %v2058
    %v2060 = vpop.f32.mrb[0].mxu0
    %v2061 = vadd.f32 %v1948, %v2060
    %v2062 = vpop.f32.mrb[0].mxu0
    %v2063 = vadd.f32 %v1950, %v2062
    %2064 = vmatprep.mubr.bf16.mxu0 0
    %2065 = vmatmul.mubr.bf16.gmra.mrb[0].mxu0 %v1621
    %v2066 = vpop.f32.mrb[0].mxu0
    %v2067 = vadd.f32 %v1954, %v2066
    %v2068 = vpop.f32.mrb[0].mxu0
    %v2069 = vadd.f32 %v1956, %v2068
    %v2070 = vpop.f32.mrb[0].mxu0
    %v2071 = vadd.f32 %v1958, %v2070
    %v2072 = vpop.f32.mrb[0].mxu0
    %v2073 = vadd.f32 %v1960, %v2072
    %2074 = vdwg.mxu0
    %2075 = vmatprep.subr.bf16.mxu0 %v1209
    %2076 = vmatpush1.bf16.msra.mxu0 %v1208
    %2077 = vmatprep.subr.bf16.mxu0 %v1213
    %2078 = vmatpush1.bf16.msra.mxu0 %v1212
    %2079 = vmatprep.subr.bf16.mxu0 %v1217
    %2080 = vmatpush1.bf16.msra.mxu0 %v1216
    %2081 = vmatprep.subr.bf16.mxu0 %v1221
    %2082 = vmatpush1.bf16.msra.mxu0 %v1220
    %2083 = vmatprep.subr.bf16.mxu0 %v1225
    %2084 = vmatpush1.bf16.msra.mxu0 %v1224
    %2085 = vmatprep.subr.bf16.mxu0 %v1229
    %2086 = vmatpush1.bf16.msra.mxu0 %v1228
    %2087 = vmatprep.subr.bf16.mxu0 %v1233
    %2088 = vmatpush1.bf16.msra.mxu0 %v1232
    %2089 = vmatprep.subr.bf16.mxu0 %v1237
    %2090 = vmatpush1.bf16.msra.mxu0 %v1236
    %2091 = vmatprep.subr.bf16.mxu0 %v1241
    %2092 = vmatpush1.bf16.msra.mxu0 %v1240
    %2093 = vmatprep.subr.bf16.mxu0 %v1245
    %2094 = vmatpush1.bf16.msra.mxu0 %v1244
    %2095 = vmatprep.subr.bf16.mxu0 %v1249
    %2096 = vmatpush1.bf16.msra.mxu0 %v1248
    %2097 = vmatprep.subr.bf16.mxu0 %v1253
    %2098 = vmatpush1.bf16.msra.mxu0 %v1252
    %2099 = vmatprep.subr.bf16.mxu0 %v1257
    %2100 = vmatpush1.bf16.msra.mxu0 %v1256
    %2101 = vmatprep.subr.bf16.mxu0 %v1261
    %2102 = vmatpush1.bf16.msra.mxu0 %v1260
    %2103 = vmatprep.subr.bf16.mxu0 %v1265
    %2104 = vmatpush1.bf16.msra.mxu0 %v1264
    %2105 = vmatprep.subr.bf16.mxu0 %v1269
    %2106 = vmatpush1.bf16.msra.mxu0 %v1268
    %2107 = vmatprep.mubr.bf16.mxu0 %v515
    %2108 = vmatmul.mubr.bf16.gmra.mrb[0].mxu0 %v514
    %v2109 = vpop.f32.mrb[0].mxu0
    %v2110 = vadd.f32 %v329, %v2109
    %v2111 = vpop.f32.mrb[0].mxu0
    %v2112 = vadd.f32 %v333, %v2111
    %v2113 = vpop.f32.mrb[0].mxu0
    %v2114 = vadd.f32 %v329, %v2113
    %v2115 = vpop.f32.mrb[0].mxu0
    %v2116 = vadd.f32 %v333, %v2115
    %2117 = vmatprep.mubr.bf16.mxu0 %v522
    %2118 = vmatmul.mubr.bf16.gmra.mrb[0].mxu0 %v521
    %v2119 = vpop.f32.mrb[0].mxu0
    %v2120 = vadd.f32 %v329, %v2119
    %v2121 = vpop.f32.mrb[0].mxu0
    %v2122 = vadd.f32 %v333, %v2121
    %v2123 = vpop.f32.mrb[0].mxu0
    %v2124 = vadd.f32 %v329, %v2123
    %v2125 = vpop.f32.mrb[0].mxu0
    %v2126 = vadd.f32 %v333, %v2125
    %2127 = vmatprep.mubr.bf16.mxu0 %v529
    %2128 = vmatmul.mubr.bf16.gmra.mrb[0].mxu0 %v528
    %v2129 = vpop.f32.mrb[0].mxu0
    %v2130 = vadd.f32 %v329, %v2129
    %v2131 = vpop.f32.mrb[0].mxu0
    %v2132 = vadd.f32 %v333, %v2131
    %v2133 = vpop.f32.mrb[0].mxu0
    %v2134 = vadd.f32 %v329, %v2133
    %v2135 = vpop.f32.mrb[0].mxu0
    %v2136 = vadd.f32 %v333, %v2135
    %2137 = vmatprep.mubr.bf16.mxu0 %v536
    %2138 = vmatmul.mubr.bf16.gmra.mrb[0].mxu0 %v535
    %v2139 = vpop.f32.mrb[0].mxu0
    %v2140 = vadd.f32 %v329, %v2139
    %v2141 = vpop.f32.mrb[0].mxu0
    %v2142 = vadd.f32 %v333, %v2141
    %v2143 = vpop.f32.mrb[0].mxu0
    %v2144 = vadd.f32 %v329, %v2143
    %v2145 = vpop.f32.mrb[0].mxu0
    %v2146 = vadd.f32 %v333, %v2145
    %2147 = vmatprep.mubr.bf16.mxu0 %v543
    %2148 = vmatmul.mubr.bf16.gmra.mrb[0].mxu0 %v542
    %v2149 = vpop.f32.mrb[0].mxu0
    %v2150 = vadd.f32 %v329, %v2149
    %v2151 = vpop.f32.mrb[0].mxu0
    %v2152 = vadd.f32 %v333, %v2151
    %v2153 = vpop.f32.mrb[0].mxu0
    %v2154 = vadd.f32 %v329, %v2153
    %v2155 = vpop.f32.mrb[0].mxu0
    %v2156 = vadd.f32 %v333, %v2155
    %2157 = vmatprep.mubr.bf16.mxu0 %v550
    %2158 = vmatmul.mubr.bf16.gmra.mrb[0].mxu0 %v549
    %v2159 = vpop.f32.mrb[0].mxu0
    %v2160 = vadd.f32 %v329, %v2159
    %v2161 = vpop.f32.mrb[0].mxu0
    %v2162 = vadd.f32 %v333, %v2161
    %v2163 = vpop.f32.mrb[0].mxu0
    %v2164 = vadd.f32 %v329, %v2163
    %v2165 = vpop.f32.mrb[0].mxu0
    %v2166 = vadd.f32 %v333, %v2165
    %2167 = vmatprep.mubr.bf16.mxu0 %v557
    %2168 = vmatmul.mubr.bf16.gmra.mrb[0].mxu0 %v556
    %v2169 = vpop.f32.mrb[0].mxu0
    %v2170 = vadd.f32 %v329, %v2169
    %v2171 = vpop.f32.mrb[0].mxu0
    %v2172 = vadd.f32 %v333, %v2171
    %v2173 = vpop.f32.mrb[0].mxu0
    %v2174 = vadd.f32 %v329, %v2173
    %v2175 = vpop.f32.mrb[0].mxu0
    %v2176 = vadd.f32 %v333, %v2175
    %2177 = vmatprep.mubr.bf16.mxu0 %v564
    %2178 = vmatmul.mubr.bf16.gmra.mrb[0].mxu0 %v563
    %v2179 = vpop.f32.mrb[0].mxu0
    %v2180 = vadd.f32 %v329, %v2179
    %v2181 = vpop.f32.mrb[0].mxu0
    %v2182 = vadd.f32 %v333, %v2181
    %v2183 = vpop.f32.mrb[0].mxu0
    %v2184 = vadd.f32 %v329, %v2183
    %v2185 = vpop.f32.mrb[0].mxu0
    %v2186 = vadd.f32 %v333, %v2185
    %2187 = vdwg.mxu0
    %2188 = vmatprep.subr.bf16.mxu0 %v1273
    %2189 = vmatpush1.bf16.msra.mxu0 %v1272
    %2190 = vmatprep.subr.bf16.mxu0 %v1277
    %2191 = vmatpush1.bf16.msra.mxu0 %v1276
    %2192 = vmatprep.subr.bf16.mxu0 %v1281
    %2193 = vmatpush1.bf16.msra.mxu0 %v1280
    %2194 = vmatprep.subr.bf16.mxu0 %v1285
    %2195 = vmatpush1.bf16.msra.mxu0 %v1284
    %2196 = vmatprep.subr.bf16.mxu0 %v1289
    %2197 = vmatpush1.bf16.msra.mxu0 %v1288
    %2198 = vmatprep.subr.bf16.mxu0 %v1293
    %2199 = vmatpush1.bf16.msra.mxu0 %v1292
    %2200 = vmatprep.subr.bf16.mxu0 %v1297
    %2201 = vmatpush1.bf16.msra.mxu0 %v1296
    %2202 = vmatprep.subr.bf16.mxu0 %v1301
    %2203 = vmatpush1.bf16.msra.mxu0 %v1300
    %2204 = vmatprep.subr.bf16.mxu0 %v1305
    %2205 = vmatpush1.bf16.msra.mxu0 %v1304
    %2206 = vmatprep.subr.bf16.mxu0 %v1309
    %2207 = vmatpush1.bf16.msra.mxu0 %v1308
    %2208 = vmatprep.subr.bf16.mxu0 %v1313
    %2209 = vmatpush1.bf16.msra.mxu0 %v1312
    %2210 = vmatprep.subr.bf16.mxu0 %v1317
    %2211 = vmatpush1.bf16.msra.mxu0 %v1316
    %2212 = vmatprep.subr.bf16.mxu0 %v1321
    %2213 = vmatpush1.bf16.msra.mxu0 %v1320
    %2214 = vmatprep.subr.bf16.mxu0 %v1325
    %2215 = vmatpush1.bf16.msra.mxu0 %v1324
    %2216 = vmatprep.subr.bf16.mxu0 %v1329
    %2217 = vmatpush1.bf16.msra.mxu0 %v1328
    %2218 = vmatprep.subr.bf16.mxu0 %v1333
    %2219 = vmatpush1.bf16.msra.mxu0 %v1332
    %2220 = vmatprep.mubr.bf16.mxu0 %v517
    %2221 = vmatmul.mubr.bf16.gmra.mrb[0].mxu0 %v516
    %v2222 = vpop.f32.mrb[0].mxu0
    %v2223 = vadd.f32 %v2110, %v2222
    %v2224 = vpop.f32.mrb[0].mxu0
    %v2225 = vadd.f32 %v2112, %v2224
    %v2226 = vpop.f32.mrb[0].mxu0
    %v2227 = vadd.f32 %v2114, %v2226
    %v2228 = vpop.f32.mrb[0].mxu0
    %v2229 = vadd.f32 %v2116, %v2228
    %2230 = vmatprep.mubr.bf16.mxu0 %v524
    %2231 = vmatmul.mubr.bf16.gmra.mrb[0].mxu0 %v523
    %v2232 = vpop.f32.mrb[0].mxu0
    %v2233 = vadd.f32 %v2120, %v2232
    %v2234 = vpop.f32.mrb[0].mxu0
    %v2235 = vadd.f32 %v2122, %v2234
    %v2236 = vpop.f32.mrb[0].mxu0
    %v2237 = vadd.f32 %v2124, %v2236
    %v2238 = vpop.f32.mrb[0].mxu0
    %v2239 = vadd.f32 %v2126, %v2238
    %2240 = vmatprep.mubr.bf16.mxu0 %v531
    %2241 = vmatmul.mubr.bf16.gmra.mrb[0].mxu0 %v530
    %v2242 = vpop.f32.mrb[0].mxu0
    %v2243 = vadd.f32 %v2130, %v2242
    %v2244 = vpop.f32.mrb[0].mxu0
    %v2245 = vadd.f32 %v2132, %v2244
    %v2246 = vpop.f32.mrb[0].mxu0
    %v2247 = vadd.f32 %v2134, %v2246
    %v2248 = vpop.f32.mrb[0].mxu0
    %v2249 = vadd.f32 %v2136, %v2248
    %2250 = vmatprep.mubr.bf16.mxu0 %v538
    %2251 = vmatmul.mubr.bf16.gmra.mrb[0].mxu0 %v537
    %v2252 = vpop.f32.mrb[0].mxu0
    %v2253 = vadd.f32 %v2140, %v2252
    %v2254 = vpop.f32.mrb[0].mxu0
    %v2255 = vadd.f32 %v2142, %v2254
    %v2256 = vpop.f32.mrb[0].mxu0
    %v2257 = vadd.f32 %v2144, %v2256
    %v2258 = vpop.f32.mrb[0].mxu0
    %v2259 = vadd.f32 %v2146, %v2258
    %2260 = vmatprep.mubr.bf16.mxu0 %v545
    %2261 = vmatmul.mubr.bf16.gmra.mrb[0].mxu0 %v544
    %v2262 = vpop.f32.mrb[0].mxu0
    %v2263 = vadd.f32 %v2150, %v2262
    %v2264 = vpop.f32.mrb[0].mxu0
    %v2265 = vadd.f32 %v2152, %v2264
    %v2266 = vpop.f32.mrb[0].mxu0
    %v2267 = vadd.f32 %v2154, %v2266
    %v2268 = vpop.f32.mrb[0].mxu0
    %v2269 = vadd.f32 %v2156, %v2268
    %2270 = vmatprep.mubr.bf16.mxu0 %v552
    %2271 = vmatmul.mubr.bf16.gmra.mrb[0].mxu0 %v551
    %v2272 = vpop.f32.mrb[0].mxu0
    %v2273 = vadd.f32 %v2160, %v2272
    %v2274 = vpop.f32.mrb[0].mxu0
    %v2275 = vadd.f32 %v2162, %v2274
    %v2276 = vpop.f32.mrb[0].mxu0
    %v2277 = vadd.f32 %v2164, %v2276
    %v2278 = vpop.f32.mrb[0].mxu0
    %v2279 = vadd.f32 %v2166, %v2278
    %2280 = vmatprep.mubr.bf16.mxu0 %v559
    %2281 = vmatmul.mubr.bf16.gmra.mrb[0].mxu0 %v558
    %v2282 = vpop.f32.mrb[0].mxu0
    %v2283 = vadd.f32 %v2170, %v2282
    %v2284 = vpop.f32.mrb[0].mxu0
    %v2285 = vadd.f32 %v2172, %v2284
    %v2286 = vpop.f32.mrb[0].mxu0
    %v2287 = vadd.f32 %v2174, %v2286
    %v2288 = vpop.f32.mrb[0].mxu0
    %v2289 = vadd.f32 %v2176, %v2288
    %2290 = vmatprep.mubr.bf16.mxu0 %v566
    %2291 = vmatmul.mubr.bf16.gmra.mrb[0].mxu0 %v565
    %v2292 = vpop.f32.mrb[0].mxu0
    %v2293 = vadd.f32 %v2180, %v2292
    %v2294 = vpop.f32.mrb[0].mxu0
    %v2295 = vadd.f32 %v2182, %v2294
    %v2296 = vpop.f32.mrb[0].mxu0
    %v2297 = vadd.f32 %v2184, %v2296
    %v2298 = vpop.f32.mrb[0].mxu0
    %v2299 = vadd.f32 %v2186, %v2298
    %2300 = vdwg.mxu0
    %2301 = vmatprep.subr.bf16.mxu0 %v1337
    %2302 = vmatpush1.bf16.msra.mxu0 %v1336
    %2303 = vmatprep.subr.bf16.mxu0 %v1341
    %2304 = vmatpush1.bf16.msra.mxu0 %v1340
    %2305 = vmatprep.subr.bf16.mxu0 %v1345
    %2306 = vmatpush1.bf16.msra.mxu0 %v1344
    %2307 = vmatprep.subr.bf16.mxu0 %v1349
    %2308 = vmatpush1.bf16.msra.mxu0 %v1348
    %2309 = vmatprep.subr.bf16.mxu0 %v1353
    %2310 = vmatpush1.bf16.msra.mxu0 %v1352
    %2311 = vmatprep.subr.bf16.mxu0 %v1357
    %2312 = vmatpush1.bf16.msra.mxu0 %v1356
    %2313 = vmatprep.subr.bf16.mxu0 %v1361
    %2314 = vmatpush1.bf16.msra.mxu0 %v1360
    %2315 = vmatprep.subr.bf16.mxu0 %v1365
    %2316 = vmatpush1.bf16.msra.mxu0 %v1364
    %2317 = vmatprep.subr.bf16.mxu0 %v1369
    %2318 = vmatpush1.bf16.msra.mxu0 %v1368
    %2319 = vmatprep.subr.bf16.mxu0 %v1373
    %2320 = vmatpush1.bf16.msra.mxu0 %v1372
    %2321 = vmatprep.subr.bf16.mxu0 %v1377
    %2322 = vmatpush1.bf16.msra.mxu0 %v1376
    %2323 = vmatprep.subr.bf16.mxu0 %v1381
    %2324 = vmatpush1.bf16.msra.mxu0 %v1380
    %2325 = vmatprep.subr.bf16.mxu0 %v1385
    %2326 = vmatpush1.bf16.msra.mxu0 %v1384
    %2327 = vmatprep.subr.bf16.mxu0 %v1389
    %2328 = vmatpush1.bf16.msra.mxu0 %v1388
    %2329 = vmatprep.subr.bf16.mxu0 %v1393
    %2330 = vmatpush1.bf16.msra.mxu0 %v1392
    %2331 = vmatprep.subr.bf16.mxu0 %v1397
    %2332 = vmatpush1.bf16.msra.mxu0 %v1396
    %2333 = vmatprep.mubr.bf16.mxu0 %v519
    %2334 = vmatmul.mubr.bf16.gmra.mrb[0].mxu0 %v518
    %v2335 = vpop.f32.mrb[0].mxu0
    %v2336 = vadd.f32 %v2223, %v2335
    %v2337 = vpop.f32.mrb[0].mxu0
    %v2338 = vadd.f32 %v2225, %v2337
    %v2339 = vpop.f32.mrb[0].mxu0
    %v2340 = vadd.f32 %v2227, %v2339
    %v2341 = vpop.f32.mrb[0].mxu0
    %v2342 = vadd.f32 %v2229, %v2341
    %2343 = vmatprep.mubr.bf16.mxu0 %v526
    %2344 = vmatmul.mubr.bf16.gmra.mrb[0].mxu0 %v525
    %v2345 = vpop.f32.mrb[0].mxu0
    %v2346 = vadd.f32 %v2233, %v2345
    %v2347 = vpop.f32.mrb[0].mxu0
    %v2348 = vadd.f32 %v2235, %v2347
    %v2349 = vpop.f32.mrb[0].mxu0
    %v2350 = vadd.f32 %v2237, %v2349
    %v2351 = vpop.f32.mrb[0].mxu0
    %v2352 = vadd.f32 %v2239, %v2351
    %2353 = vmatprep.mubr.bf16.mxu0 %v533
    %2354 = vmatmul.mubr.bf16.gmra.mrb[0].mxu0 %v532
    %v2355 = vpop.f32.mrb[0].mxu0
    %v2356 = vadd.f32 %v2243, %v2355
    %v2357 = vpop.f32.mrb[0].mxu0
    %v2358 = vadd.f32 %v2245, %v2357
    %v2359 = vpop.f32.mrb[0].mxu0
    %v2360 = vadd.f32 %v2247, %v2359
    %v2361 = vpop.f32.mrb[0].mxu0
    %v2362 = vadd.f32 %v2249, %v2361
    %2363 = vmatprep.mubr.bf16.mxu0 %v540
    %2364 = vmatmul.mubr.bf16.gmra.mrb[0].mxu0 %v539
    %v2365 = vpop.f32.mrb[0].mxu0
    %v2366 = vadd.f32 %v2253, %v2365
    %v2367 = vpop.f32.mrb[0].mxu0
    %v2368 = vadd.f32 %v2255, %v2367
    %v2369 = vpop.f32.mrb[0].mxu0
    %v2370 = vadd.f32 %v2257, %v2369
    %v2371 = vpop.f32.mrb[0].mxu0
    %v2372 = vadd.f32 %v2259, %v2371
    %2373 = vmatprep.mubr.bf16.mxu0 %v547
    %2374 = vmatmul.mubr.bf16.gmra.mrb[0].mxu0 %v546
    %v2375 = vpop.f32.mrb[0].mxu0
    %v2376 = vadd.f32 %v2263, %v2375
    %v2377 = vpop.f32.mrb[0].mxu0
    %v2378 = vadd.f32 %v2265, %v2377
    %v2379 = vpop.f32.mrb[0].mxu0
    %v2380 = vadd.f32 %v2267, %v2379
    %v2381 = vpop.f32.mrb[0].mxu0
    %v2382 = vadd.f32 %v2269, %v2381
    %2383 = vmatprep.mubr.bf16.mxu0 %v554
    %2384 = vmatmul.mubr.bf16.gmra.mrb[0].mxu0 %v553
    %v2385 = vpop.f32.mrb[0].mxu0
    %v2386 = vadd.f32 %v2273, %v2385
    %v2387 = vpop.f32.mrb[0].mxu0
    %v2388 = vadd.f32 %v2275, %v2387
    %v2389 = vpop.f32.mrb[0].mxu0
    %v2390 = vadd.f32 %v2277, %v2389
    %v2391 = vpop.f32.mrb[0].mxu0
    %v2392 = vadd.f32 %v2279, %v2391
    %2393 = vmatprep.mubr.bf16.mxu0 %v561
    %2394 = vmatmul.mubr.bf16.gmra.mrb[0].mxu0 %v560
    %v2395 = vpop.f32.mrb[0].mxu0
    %v2396 = vadd.f32 %v2283, %v2395
    %v2397 = vpop.f32.mrb[0].mxu0
    %v2398 = vadd.f32 %v2285, %v2397
    %v2399 = vpop.f32.mrb[0].mxu0
    %v2400 = vadd.f32 %v2287, %v2399
    %v2401 = vpop.f32.mrb[0].mxu0
    %v2402 = vadd.f32 %v2289, %v2401
    %2403 = vmatprep.mubr.bf16.mxu0 %v568
    %2404 = vmatmul.mubr.bf16.gmra.mrb[0].mxu0 %v567
    %v2405 = vpop.f32.mrb[0].mxu0
    %v2406 = vadd.f32 %v2293, %v2405
    %v2407 = vpop.f32.mrb[0].mxu0
    %v2408 = vadd.f32 %v2295, %v2407
    %v2409 = vpop.f32.mrb[0].mxu0
    %v2410 = vadd.f32 %v2297, %v2409
    %v2411 = vpop.f32.mrb[0].mxu0
    %v2412 = vadd.f32 %v2299, %v2411
    %2413 = vdwg.mxu0
    %2414 = vmatprep.subr.bf16.mxu0 %v1401
    %2415 = vmatpush1.bf16.msra.mxu0 %v1400
    %2416 = vmatprep.subr.bf16.mxu0 0
    %2417 = vmatpush1.bf16.msra.mxu0 0
    %2418 = vmatprep.subr.bf16.mxu0 0
    %2419 = vmatpush1.bf16.msra.mxu0 0
    %2420 = vmatprep.subr.bf16.mxu0 0
    %2421 = vmatpush1.bf16.msra.mxu0 0
    %2422 = vmatprep.subr.bf16.mxu0 0
    %2423 = vmatpush1.bf16.msra.mxu0 0
    %2424 = vmatprep.subr.bf16.mxu0 0
    %2425 = vmatpush1.bf16.msra.mxu0 0
    %2426 = vmatprep.subr.bf16.mxu0 0
    %2427 = vmatpush1.bf16.msra.mxu0 0
    %2428 = vmatprep.subr.bf16.mxu0 0
    %2429 = vmatpush1.bf16.msra.mxu0 0
    %2430 = vmatprep.subr.bf16.mxu0 0
    %2431 = vmatpush1.bf16.msra.mxu0 0
    %2432 = vmatprep.subr.bf16.mxu0 0
    %2433 = vmatpush1.bf16.msra.mxu0 0
    %2434 = vmatprep.subr.bf16.mxu0 0
    %2435 = vmatpush1.bf16.msra.mxu0 0
    %2436 = vmatprep.subr.bf16.mxu0 0
    %2437 = vmatpush1.bf16.msra.mxu0 0
    %2438 = vmatprep.subr.bf16.mxu0 0
    %2439 = vmatpush1.bf16.msra.mxu0 0
    %2440 = vmatprep.subr.bf16.mxu0 0
    %2441 = vmatpush1.bf16.msra.mxu0 0
    %2442 = vmatprep.subr.bf16.mxu0 0
    %2443 = vmatpush1.bf16.msra.mxu0 0
    %2444 = vmatprep.subr.bf16.mxu0 0
    %2445 = vmatpush1.bf16.msra.mxu0 0
    %2446 = vmatprep.mubr.bf16.mxu0 0
    %2447 = vmatmul.mubr.bf16.gmra.mrb[0].mxu0 %v1600
    %v2448 = vpop.f32.mrb[0].mxu0
    %v2449 = vadd.f32 %v2336, %v2448
    %v2450 = vpop.f32.mrb[0].mxu0
    %v2451 = vadd.f32 %v2338, %v2450
    %v2452 = vpop.f32.mrb[0].mxu0
    %v2453 = vadd.f32 %v2340, %v2452
    %v2454 = vpop.f32.mrb[0].mxu0
    %v2455 = vadd.f32 %v2342, %v2454
    %2456 = vmatprep.mubr.bf16.mxu0 0
    %2457 = vmatmul.mubr.bf16.gmra.mrb[0].mxu0 %v1603
    %v2458 = vpop.f32.mrb[0].mxu0
    %v2459 = vadd.f32 %v2346, %v2458
    %v2460 = vpop.f32.mrb[0].mxu0
    %v2461 = vadd.f32 %v2348, %v2460
    %v2462 = vpop.f32.mrb[0].mxu0
    %v2463 = vadd.f32 %v2350, %v2462
    %v2464 = vpop.f32.mrb[0].mxu0
    %v2465 = vadd.f32 %v2352, %v2464
    %2466 = vmatprep.mubr.bf16.mxu0 0
    %2467 = vmatmul.mubr.bf16.gmra.mrb[0].mxu0 %v1606
    %v2468 = vpop.f32.mrb[0].mxu0
    %v2469 = vadd.f32 %v2356, %v2468
    %v2470 = vpop.f32.mrb[0].mxu0
    %v2471 = vadd.f32 %v2358, %v2470
    %v2472 = vpop.f32.mrb[0].mxu0
    %v2473 = vadd.f32 %v2360, %v2472
    %v2474 = vpop.f32.mrb[0].mxu0
    %v2475 = vadd.f32 %v2362, %v2474
    %2476 = vmatprep.mubr.bf16.mxu0 0
    %2477 = vmatmul.mubr.bf16.gmra.mrb[0].mxu0 %v1609
    %v2478 = vpop.f32.mrb[0].mxu0
    %v2479 = vadd.f32 %v2366, %v2478
    %v2480 = vpop.f32.mrb[0].mxu0
    %v2481 = vadd.f32 %v2368, %v2480
    %v2482 = vpop.f32.mrb[0].mxu0
    %v2483 = vadd.f32 %v2370, %v2482
    %v2484 = vpop.f32.mrb[0].mxu0
    %v2485 = vadd.f32 %v2372, %v2484
    %2486 = vmatprep.mubr.bf16.mxu0 0
    %2487 = vmatmul.mubr.bf16.gmra.mrb[0].mxu0 %v1612
    %v2488 = vpop.f32.mrb[0].mxu0
    %v2489 = vadd.f32 %v2376, %v2488
    %v2490 = vpop.f32.mrb[0].mxu0
    %v2491 = vadd.f32 %v2378, %v2490
    %v2492 = vpop.f32.mrb[0].mxu0
    %v2493 = vadd.f32 %v2380, %v2492
    %v2494 = vpop.f32.mrb[0].mxu0
    %v2495 = vadd.f32 %v2382, %v2494
    %2496 = vmatprep.mubr.bf16.mxu0 0
    %2497 = vmatmul.mubr.bf16.gmra.mrb[0].mxu0 %v1615
    %v2498 = vpop.f32.mrb[0].mxu0
    %v2499 = vadd.f32 %v2386, %v2498
    %v2500 = vpop.f32.mrb[0].mxu0
    %v2501 = vadd.f32 %v2388, %v2500
    %v2502 = vpop.f32.mrb[0].mxu0
    %v2503 = vadd.f32 %v2390, %v2502
    %v2504 = vpop.f32.mrb[0].mxu0
    %v2505 = vadd.f32 %v2392, %v2504
    %2506 = vmatprep.mubr.bf16.mxu0 0
    %2507 = vmatmul.mubr.bf16.gmra.mrb[0].mxu0 %v1618
    %v2508 = vpop.f32.mrb[0].mxu0
    %v2509 = vadd.f32 %v2396, %v2508
    %v2510 = vpop.f32.mrb[0].mxu0
    %v2511 = vadd.f32 %v2398, %v2510
    %v2512 = vpop.f32.mrb[0].mxu0
    %v2513 = vadd.f32 %v2400, %v2512
    %v2514 = vpop.f32.mrb[0].mxu0
    %v2515 = vadd.f32 %v2402, %v2514
    %2516 = vmatprep.mubr.bf16.mxu0 0
    %2517 = vmatmul.mubr.bf16.gmra.mrb[0].mxu0 %v1621
    %v2518 = vpop.f32.mrb[0].mxu0
    %v2519 = vadd.f32 %v2406, %v2518
    %v2520 = vpop.f32.mrb[0].mxu0
    %v2521 = vadd.f32 %v2408, %v2520
    %v2522 = vpop.f32.mrb[0].mxu0
    %v2523 = vadd.f32 %v2410, %v2522
    %v2524 = vpop.f32.mrb[0].mxu0
    %v2525 = vadd.f32 %v2412, %v2524
    %2526 = vdwg.mxu0
    %v2527 = vmax.f32 %v1997, 0.0
    %v2528 = vmax.f32 %v1999, 0.0
    %v2529 = vmax.f32 %v2449, 0.0
    %v2530 = vmax.f32 %v2451, 0.0
    %v2531 = vmax.f32 %v2001, 0.0
    %v2532 = vmax.f32 %v2003, 0.0
    %v2533 = vmax.f32 %v2453, 0.0
    %v2534 = vmax.f32 %v2455, 0.0
    %v2535 = vmax.f32 %v2007, 0.0
    %v2536 = vmax.f32 %v2009, 0.0
    %v2537 = vmax.f32 %v2459, 0.0
    %v2538 = vmax.f32 %v2461, 0.0
    %v2539 = vmax.f32 %v2011, 0.0
    %v2540 = vmax.f32 %v2013, 0.0
    %v2541 = vmax.f32 %v2463, 0.0
    %v2542 = vmax.f32 %v2465, 0.0
    %v2543 = vmax.f32 %v2017, 0.0
    %v2544 = vmax.f32 %v2019, 0.0
    %v2545 = vmax.f32 %v2469, 0.0
    %v2546 = vmax.f32 %v2471, 0.0
    %v2547 = vmax.f32 %v2021, 0.0
    %v2548 = vmax.f32 %v2023, 0.0
    %v2549 = vmax.f32 %v2473, 0.0
    %v2550 = vmax.f32 %v2475, 0.0
    %v2551 = vmax.f32 %v2027, 0.0
    %v2552 = vmax.f32 %v2029, 0.0
    %v2553 = vmax.f32 %v2479, 0.0
    %v2554 = vmax.f32 %v2481, 0.0
    %v2555 = vmax.f32 %v2031, 0.0
    %v2556 = vmax.f32 %v2033, 0.0
    %v2557 = vmax.f32 %v2483, 0.0
    %v2558 = vmax.f32 %v2485, 0.0
    %v2559 = vmax.f32 %v2037, 0.0
    %v2560 = vmax.f32 %v2039, 0.0
    %v2561 = vmax.f32 %v2489, 0.0
    %v2562 = vmax.f32 %v2491, 0.0
    %v2563 = vmax.f32 %v2041, 0.0
    %v2564 = vmax.f32 %v2043, 0.0
    %v2565 = vmax.f32 %v2493, 0.0
    %v2566 = vmax.f32 %v2495, 0.0
    %v2567 = vmax.f32 %v2047, 0.0
    %v2568 = vmax.f32 %v2049, 0.0
    %v2569 = vmax.f32 %v2499, 0.0
    %v2570 = vmax.f32 %v2501, 0.0
    %v2571 = vmax.f32 %v2051, 0.0
    %v2572 = vmax.f32 %v2053, 0.0
    %v2573 = vmax.f32 %v2503, 0.0
    %v2574 = vmax.f32 %v2505, 0.0
    %v2575 = vmax.f32 %v2057, 0.0
    %v2576 = vmax.f32 %v2059, 0.0
    %v2577 = vmax.f32 %v2509, 0.0
    %v2578 = vmax.f32 %v2511, 0.0
    %v2579 = vmax.f32 %v2061, 0.0
    %v2580 = vmax.f32 %v2063, 0.0
    %v2581 = vmax.f32 %v2513, 0.0
    %v2582 = vmax.f32 %v2515, 0.0
    %v2583 = vmax.f32 %v2067, 0.0
    %v2584 = vmax.f32 %v2069, 0.0
    %v2585 = vmax.f32 %v2519, 0.0
    %v2586 = vmax.f32 %v2521, 0.0
    %v2587 = vmax.f32 %v2071, 0.0
    %v2588 = vmax.f32 %v2073, 0.0
    %v2589 = vmax.f32 %v2523, 0.0
    %v2590 = vmax.f32 %v2525, 0.0
    %v2591 = vpack.c.bf16 %v2531, %v2527
    %v2592 = vpack.c.bf16 %v2532, %v2528
    %v2593 = vpack.c.bf16 %v2533, %v2529
    %v2594 = vpack.c.bf16 %v2534, %v2530
    %v2595 = vpack.c.bf16 %v2539, %v2535
    %v2596 = vpack.c.bf16 %v2540, %v2536
    %v2597 = vpack.c.bf16 %v2541, %v2537
    %v2598 = vpack.c.bf16 %v2542, %v2538
    %v2599 = vpack.c.bf16 %v2547, %v2543
    %v2600 = vpack.c.bf16 %v2548, %v2544
    %v2601 = vpack.c.bf16 %v2549, %v2545
    %v2602 = vpack.c.bf16 %v2550, %v2546
    %v2603 = vpack.c.bf16 %v2555, %v2551
    %v2604 = vpack.c.bf16 %v2556, %v2552
    %v2605 = vpack.c.bf16 %v2557, %v2553
    %v2606 = vpack.c.bf16 %v2558, %v2554
    %v2607 = vpack.c.bf16 %v2563, %v2559
    %v2608 = vpack.c.bf16 %v2564, %v2560
    %v2609 = vpack.c.bf16 %v2565, %v2561
    %v2610 = vpack.c.bf16 %v2566, %v2562
    %v2611 = vpack.c.bf16 %v2571, %v2567
    %v2612 = vpack.c.bf16 %v2572, %v2568
    %v2613 = vpack.c.bf16 %v2573, %v2569
    %v2614 = vpack.c.bf16 %v2574, %v2570
    %v2615 = vpack.c.bf16 %v2579, %v2575
    %v2616 = vpack.c.bf16 %v2580, %v2576
    %v2617 = vpack.c.bf16 %v2581, %v2577
    %v2618 = vpack.c.bf16 %v2582, %v2578
    %v2619 = vpack.c.bf16 %v2587, %v2583
    %v2620 = vpack.c.bf16 %v2588, %v2584
    %v2621 = vpack.c.bf16 %v2589, %v2585
    %v2622 = vpack.c.bf16 %v2590, %v2586
    %v2623 = vld [vmem:[#allocation5] sm:$0xff]
    %v2624 = vld [vmem:[#allocation5 + $0x8] sm:$0xff]
    %v2625 = vld [vmem:[#allocation5 + $0x10] sm:$0xff]
    %v2626 = vld [vmem:[#allocation5 + $0x18] sm:$0xff]
    %v2627 = vld [vmem:[#allocation5 + $0x20] sm:$0xff]
    %v2628 = vld [vmem:[#allocation5 + $0x28] sm:$0xff]
    %v2629 = vld [vmem:[#allocation5 + $0x30] sm:$0xff]
    %v2630 = vld [vmem:[#allocation5 + $0x38] sm:$0xff]
    %v2631 = vld [vmem:[#allocation5 + $0x40] sm:$0xff]
    %v2632 = vld [vmem:[#allocation5 + $0x48] sm:$0xff]
    %v2633 = vld [vmem:[#allocation5 + $0x50] sm:$0xff]
    %v2634 = vld [vmem:[#allocation5 + $0x58] sm:$0xff]
    %v2635 = vld [vmem:[#allocation5 + $0x60] sm:$0xff]
    %v2636 = vld [vmem:[#allocation5 + $0x68] sm:$0xff]
    %v2637 = vld [vmem:[#allocation5 + $0x70] sm:$0xff]
    %v2638 = vld [vmem:[#allocation5 + $0x78] sm:$0xff]
    %v2639 = vld [vmem:[#allocation5 + $0x80] sm:$0xff]
    %v2640 = vld [vmem:[#allocation5 + $0x88] sm:$0xff]
    %v2641 = vld [vmem:[#allocation5 + $0x90] sm:$0xff]
    %v2642 = vld [vmem:[#allocation5 + $0x98] sm:$0xff]
    %v2643 = vld [vmem:[#allocation5 + $0xa0] sm:$0xff]
    %v2644 = vld [vmem:[#allocation5 + $0xa8] sm:$0xff]
    %v2645 = vld [vmem:[#allocation5 + $0xb0] sm:$0xff]
    %v2646 = vld [vmem:[#allocation5 + $0xb8] sm:$0xff]
    %v2647 = vld [vmem:[#allocation5 + $0xc0] sm:$0xff]
    %v2648 = vld [vmem:[#allocation5 + $0xc8] sm:$0xff]
    %v2649 = vld [vmem:[#allocation5 + $0xd0] sm:$0xff]
    %v2650 = vld [vmem:[#allocation5 + $0xd8] sm:$0xff]
    %v2651 = vld [vmem:[#allocation5 + $0xe0] sm:$0xff]
    %v2652 = vld [vmem:[#allocation5 + $0xe8] sm:$0xff]
    %v2653 = vld [vmem:[#allocation5 + $0xf0] sm:$0xff]
    %v2654 = vld [vmem:[#allocation5 + $0xf8] sm:$0xff]
    %v2655 = vld [vmem:[#allocation5 + $0x100] sm:$0xff]
    %v2656 = vld [vmem:[#allocation5 + $0x108] sm:$0xff]
    %v2657 = vld [vmem:[#allocation5 + $0x110] sm:$0xff]
    %v2658 = vld [vmem:[#allocation5 + $0x118] sm:$0xff]
    %v2659 = vld [vmem:[#allocation5 + $0x120] sm:$0xff]
    %v2660 = vld [vmem:[#allocation5 + $0x128] sm:$0xff]
    %v2661 = vld [vmem:[#allocation5 + $0x130] sm:$0xff]
    %v2662 = vld [vmem:[#allocation5 + $0x138] sm:$0xff]
    %v2663 = vld [vmem:[#allocation5 + $0x140] sm:$0xff]
    %v2664 = vld [vmem:[#allocation5 + $0x148] sm:$0xff]
    %v2665 = vld [vmem:[#allocation5 + $0x150] sm:$0xff]
    %v2666 = vld [vmem:[#allocation5 + $0x158] sm:$0xff]
    %v2667 = vld [vmem:[#allocation5 + $0x160] sm:$0xff]
    %v2668 = vld [vmem:[#allocation5 + $0x168] sm:$0xff]
    %v2669 = vld [vmem:[#allocation5 + $0x170] sm:$0xff]
    %v2670 = vld [vmem:[#allocation5 + $0x178] sm:$0xff]
    %v2671 = vld [vmem:[#allocation5 + $0x180] sm:$0xff]
    %v2672 = vld [vmem:[#allocation5 + $0x188] sm:$0xff]
    %v2673 = vld [vmem:[#allocation5 + $0x190] sm:$0xff]
    %v2674 = vld [vmem:[#allocation5 + $0x198] sm:$0xff]
    %v2675 = vld [vmem:[#allocation5 + $0x1a0] sm:$0xff]
    %v2676 = vld [vmem:[#allocation5 + $0x1a8] sm:$0xff]
    %v2677 = vld [vmem:[#allocation5 + $0x1b0] sm:$0xff]
    %v2678 = vld [vmem:[#allocation5 + $0x1b8] sm:$0xff]
    %v2679 = vld [vmem:[#allocation5 + $0x1c0] sm:$0xff]
    %v2680 = vld [vmem:[#allocation5 + $0x1c8] sm:$0xff]
    %v2681 = vld [vmem:[#allocation5 + $0x1d0] sm:$0xff]
    %v2682 = vld [vmem:[#allocation5 + $0x1d8] sm:$0xff]
    %v2683 = vld [vmem:[#allocation5 + $0x1e0] sm:$0xff]
    %v2684 = vld [vmem:[#allocation5 + $0x1e8] sm:$0xff]
    %v2685 = vld [vmem:[#allocation5 + $0x1f0] sm:$0xff]
    %v2686 = vld [vmem:[#allocation5 + $0x1f8] sm:$0xff]
    %v2687 = vld [vmem:[#allocation5 + $0x200] sm:$0xff]
    %v2688 = vld [vmem:[#allocation5 + $0x208] sm:$0xff]
    %v2689 = vld [vmem:[#allocation5 + $0x210] sm:$0xff]
    %v2690 = vld [vmem:[#allocation5 + $0x218] sm:$0xff]
    %v2691 = vld [vmem:[#allocation5 + $0x220] sm:$0xff]
    %v2692 = vld [vmem:[#allocation5 + $0x228] sm:$0xff]
    %v2693 = vld [vmem:[#allocation5 + $0x230] sm:$0xff]
    %v2694 = vld [vmem:[#allocation5 + $0x238] sm:$0xff]
    %v2695 = vld [vmem:[#allocation5 + $0x240] sm:$0xff]
    %v2696 = vld [vmem:[#allocation5 + $0x248] sm:$0xff]
    %v2697 = vld [vmem:[#allocation5 + $0x250] sm:$0xff]
    %v2698 = vld [vmem:[#allocation5 + $0x258] sm:$0xff]
    %v2699 = vld [vmem:[#allocation5 + $0x260] sm:$0xff]
    %v2700 = vld [vmem:[#allocation5 + $0x268] sm:$0xff]
    %v2701 = vld [vmem:[#allocation5 + $0x270] sm:$0xff]
    %v2702 = vld [vmem:[#allocation5 + $0x278] sm:$0xff]
    %v2703 = vld [vmem:[#allocation5 + $0x280] sm:$0xff]
    %v2704 = vld [vmem:[#allocation5 + $0x288] sm:$0xff]
    %v2705 = vld [vmem:[#allocation5 + $0x290] sm:$0xff]
    %v2706 = vld [vmem:[#allocation5 + $0x298] sm:$0xff]
    %v2707 = vld [vmem:[#allocation5 + $0x2a0] sm:$0xff]
    %v2708 = vld [vmem:[#allocation5 + $0x2a8] sm:$0xff]
    %v2709 = vld [vmem:[#allocation5 + $0x2b0] sm:$0xff]
    %v2710 = vld [vmem:[#allocation5 + $0x2b8] sm:$0xff]
    %v2711 = vld [vmem:[#allocation5 + $0x2c0] sm:$0xff]
    %v2712 = vld [vmem:[#allocation5 + $0x2c8] sm:$0xff]
    %v2713 = vld [vmem:[#allocation5 + $0x2d0] sm:$0xff]
    %v2714 = vld [vmem:[#allocation5 + $0x2d8] sm:$0xff]
    %v2715 = vld [vmem:[#allocation5 + $0x2e0] sm:$0xff]
    %v2716 = vld [vmem:[#allocation5 + $0x2e8] sm:$0xff]
    %v2717 = vld [vmem:[#allocation5 + $0x2f0] sm:$0xff]
    %v2718 = vld [vmem:[#allocation5 + $0x2f8] sm:$0xff]
    %v2719 = vld [vmem:[#allocation5 + $0x300] sm:$0xff]
    %v2720 = vld [vmem:[#allocation5 + $0x308] sm:$0xff]
    %v2721 = vld [vmem:[#allocation5 + $0x310] sm:$0xff]
    %v2722 = vld [vmem:[#allocation5 + $0x318] sm:$0xff]
    %v2723 = vld [vmem:[#allocation5 + $0x320] sm:$0xff]
    %v2724 = vld [vmem:[#allocation5 + $0x328] sm:$0xff]
    %v2725 = vld [vmem:[#allocation5 + $0x330] sm:$0xff]
    %v2726 = vld [vmem:[#allocation5 + $0x338] sm:$0xff]
    %v2727 = vld [vmem:[#allocation5 + $0x340] sm:$0xff]
    %v2728 = vld [vmem:[#allocation5 + $0x348] sm:$0xff]
    %v2729 = vld [vmem:[#allocation5 + $0x350] sm:$0xff]
    %v2730 = vld [vmem:[#allocation5 + $0x358] sm:$0xff]
    %v2731 = vld [vmem:[#allocation5 + $0x360] sm:$0xff]
    %v2732 = vld [vmem:[#allocation5 + $0x368] sm:$0xff]
    %v2733 = vld [vmem:[#allocation5 + $0x370] sm:$0xff]
    %v2734 = vld [vmem:[#allocation5 + $0x378] sm:$0xff]
    %v2735 = vld [vmem:[#allocation5 + $0x380] sm:$0xff]
    %v2736 = vld [vmem:[#allocation5 + $0x388] sm:$0xff]
    %v2737 = vld [vmem:[#allocation5 + $0x390] sm:$0xff]
    %v2738 = vld [vmem:[#allocation5 + $0x398] sm:$0xff]
    %v2739 = vld [vmem:[#allocation5 + $0x3a0] sm:$0xff]
    %v2740 = vld [vmem:[#allocation5 + $0x3a8] sm:$0xff]
    %v2741 = vld [vmem:[#allocation5 + $0x3b0] sm:$0xff]
    %v2742 = vld [vmem:[#allocation5 + $0x3b8] sm:$0xff]
    %v2743 = vld [vmem:[#allocation5 + $0x3c0] sm:$0xff]
    %v2744 = vld [vmem:[#allocation5 + $0x3c8] sm:$0xff]
    %v2745 = vld [vmem:[#allocation5 + $0x3d0] sm:$0xff]
    %v2746 = vld [vmem:[#allocation5 + $0x3d8] sm:$0xff]
    %v2747 = vld [vmem:[#allocation5 + $0x3e0] sm:$0xff]
    %v2748 = vld [vmem:[#allocation5 + $0x3e8] sm:$0xff]
    %v2749 = vld [vmem:[#allocation5 + $0x3f0] sm:$0xff]
    %v2750 = vld [vmem:[#allocation5 + $0x3f8] sm:$0xff]
    %v2751 = vld [vmem:[%s4] sm:$0xf]
    %v2753 = vlaneseq
    %v2754 = vshrl.u32 %v2753, 7
    %v2755 = vsub.s32 0, %v2754
    %v2756 = vrot.slane %v2751, %v2755
    %v2757 = vlaneseq
    %v2758 = vshrl.u32 %v2757, 7
    %v2759 = vsub.s32 1, %v2758
    %v2760 = vrot.slane %v2751, %v2759
    %v2761 = vlaneseq
    %v2762 = vshrl.u32 %v2761, 7
    %v2763 = vsub.s32 2, %v2762
    %v2764 = vrot.slane %v2751, %v2763
    %v2765 = vlaneseq
    %v2766 = vshrl.u32 %v2765, 7
    %v2767 = vsub.s32 3, %v2766
    %v2768 = vrot.slane %v2751, %v2767
    %v2901 = vunpack.c.l.b16 %v2623
    %v2902 = vunpack.c.h.b16 %v2623
    %v2903 = vunpack.c.l.b16 %v2624
    %v2904 = vunpack.c.h.b16 %v2624
    %v2905 = vunpack.c.l.b16 %v2625
    %v2906 = vunpack.c.h.b16 %v2625
    %v2907 = vunpack.c.l.b16 %v2626
    %v2908 = vunpack.c.h.b16 %v2626
    %v2909 = vunpack.c.l.b16 %v2627
    %v2910 = vunpack.c.h.b16 %v2627
    %v2911 = vunpack.c.l.b16 %v2628
    %v2912 = vunpack.c.h.b16 %v2628
    %v2913 = vunpack.c.l.b16 %v2629
    %v2914 = vunpack.c.h.b16 %v2629
    %v2915 = vunpack.c.l.b16 %v2630
    %v2916 = vunpack.c.h.b16 %v2630
    %v2917 = vunpack.c.l.b16 %v2631
    %v2918 = vunpack.c.h.b16 %v2631
    %v2919 = vunpack.c.l.b16 %v2632
    %v2920 = vunpack.c.h.b16 %v2632
    %v2921 = vunpack.c.l.b16 %v2633
    %v2922 = vunpack.c.h.b16 %v2633
    %v2923 = vunpack.c.l.b16 %v2634
    %v2924 = vunpack.c.h.b16 %v2634
    %v2925 = vunpack.c.l.b16 %v2635
    %v2926 = vunpack.c.h.b16 %v2635
    %v2927 = vunpack.c.l.b16 %v2636
    %v2928 = vunpack.c.h.b16 %v2636
    %v2929 = vunpack.c.l.b16 %v2637
    %v2930 = vunpack.c.h.b16 %v2637
    %v2931 = vunpack.c.l.b16 %v2638
    %v2932 = vunpack.c.h.b16 %v2638
    %v2933 = vunpack.c.l.b16 %v2639
    %v2934 = vunpack.c.h.b16 %v2639
    %v2935 = vunpack.c.l.b16 %v2640
    %v2936 = vunpack.c.h.b16 %v2640
    %v2937 = vunpack.c.l.b16 %v2641
    %v2938 = vunpack.c.h.b16 %v2641
    %v2939 = vunpack.c.l.b16 %v2642
    %v2940 = vunpack.c.h.b16 %v2642
    %v2941 = vunpack.c.l.b16 %v2643
    %v2942 = vunpack.c.h.b16 %v2643
    %v2943 = vunpack.c.l.b16 %v2644
    %v2944 = vunpack.c.h.b16 %v2644
    %v2945 = vunpack.c.l.b16 %v2645
    %v2946 = vunpack.c.h.b16 %v2645
    %v2947 = vunpack.c.l.b16 %v2646
    %v2948 = vunpack.c.h.b16 %v2646
    %v2949 = vunpack.c.l.b16 %v2647
    %v2950 = vunpack.c.h.b16 %v2647
    %v2951 = vunpack.c.l.b16 %v2648
    %v2952 = vunpack.c.h.b16 %v2648
    %v2953 = vunpack.c.l.b16 %v2649
    %v2954 = vunpack.c.h.b16 %v2649
    %v2955 = vunpack.c.l.b16 %v2650
    %v2956 = vunpack.c.h.b16 %v2650
    %v2957 = vunpack.c.l.b16 %v2651
    %v2958 = vunpack.c.h.b16 %v2651
    %v2959 = vunpack.c.l.b16 %v2652
    %v2960 = vunpack.c.h.b16 %v2652
    %v2961 = vunpack.c.l.b16 %v2653
    %v2962 = vunpack.c.h.b16 %v2653
    %v2963 = vunpack.c.l.b16 %v2654
    %v2964 = vunpack.c.h.b16 %v2654
    %v2965 = vunpack.c.l.b16 %v2655
    %v2966 = vunpack.c.h.b16 %v2655
    %v2967 = vunpack.c.l.b16 %v2656
    %v2968 = vunpack.c.h.b16 %v2656
    %v2969 = vunpack.c.l.b16 %v2657
    %v2970 = vunpack.c.h.b16 %v2657
    %v2971 = vunpack.c.l.b16 %v2658
    %v2972 = vunpack.c.h.b16 %v2658
    %v2973 = vunpack.c.l.b16 %v2659
    %v2974 = vunpack.c.h.b16 %v2659
    %v2975 = vunpack.c.l.b16 %v2660
    %v2976 = vunpack.c.h.b16 %v2660
    %v2977 = vunpack.c.l.b16 %v2661
    %v2978 = vunpack.c.h.b16 %v2661
    %v2979 = vunpack.c.l.b16 %v2662
    %v2980 = vunpack.c.h.b16 %v2662
    %v2981 = vunpack.c.l.b16 %v2663
    %v2982 = vunpack.c.h.b16 %v2663
    %v2983 = vunpack.c.l.b16 %v2664
    %v2984 = vunpack.c.h.b16 %v2664
    %v2985 = vunpack.c.l.b16 %v2665
    %v2986 = vunpack.c.h.b16 %v2665
    %v2987 = vunpack.c.l.b16 %v2666
    %v2988 = vunpack.c.h.b16 %v2666
    %v2989 = vunpack.c.l.b16 %v2667
    %v2990 = vunpack.c.h.b16 %v2667
    %v2991 = vunpack.c.l.b16 %v2668
    %v2992 = vunpack.c.h.b16 %v2668
    %v2993 = vunpack.c.l.b16 %v2669
    %v2994 = vunpack.c.h.b16 %v2669
    %v2995 = vunpack.c.l.b16 %v2670
    %v2996 = vunpack.c.h.b16 %v2670
    %v2997 = vunpack.c.l.b16 %v2671
    %v2998 = vunpack.c.h.b16 %v2671
    %v2999 = vunpack.c.l.b16 %v2672
    %v3000 = vunpack.c.h.b16 %v2672
    %v3001 = vunpack.c.l.b16 %v2673
    %v3002 = vunpack.c.h.b16 %v2673
    %v3003 = vunpack.c.l.b16 %v2674
    %v3004 = vunpack.c.h.b16 %v2674
    %v3005 = vunpack.c.l.b16 %v2675
    %v3006 = vunpack.c.h.b16 %v2675
    %v3007 = vunpack.c.l.b16 %v2676
    %v3008 = vunpack.c.h.b16 %v2676
    %v3009 = vunpack.c.l.b16 %v2677
    %v3010 = vunpack.c.h.b16 %v2677
    %v3011 = vunpack.c.l.b16 %v2678
    %v3012 = vunpack.c.h.b16 %v2678
    %v3013 = vunpack.c.l.b16 %v2679
    %v3014 = vunpack.c.h.b16 %v2679
    %v3015 = vunpack.c.l.b16 %v2680
    %v3016 = vunpack.c.h.b16 %v2680
    %v3017 = vunpack.c.l.b16 %v2681
    %v3018 = vunpack.c.h.b16 %v2681
    %v3019 = vunpack.c.l.b16 %v2682
    %v3020 = vunpack.c.h.b16 %v2682
    %v3021 = vunpack.c.l.b16 %v2683
    %v3022 = vunpack.c.h.b16 %v2683
    %v3023 = vunpack.c.l.b16 %v2684
    %v3024 = vunpack.c.h.b16 %v2684
    %v3025 = vunpack.c.l.b16 %v2685
    %v3026 = vunpack.c.h.b16 %v2685
    %v3027 = vunpack.c.l.b16 %v2686
    %v3028 = vunpack.c.h.b16 %v2686
    %v3029 = vunpack.c.l.b16 %v2687
    %v3030 = vunpack.c.h.b16 %v2687
    %v3031 = vunpack.c.l.b16 %v2688
    %v3032 = vunpack.c.h.b16 %v2688
    %v3033 = vunpack.c.l.b16 %v2689
    %v3034 = vunpack.c.h.b16 %v2689
    %v3035 = vunpack.c.l.b16 %v2690
    %v3036 = vunpack.c.h.b16 %v2690
    %v3037 = vunpack.c.l.b16 %v2691
    %v3038 = vunpack.c.h.b16 %v2691
    %v3039 = vunpack.c.l.b16 %v2692
    %v3040 = vunpack.c.h.b16 %v2692
    %v3041 = vunpack.c.l.b16 %v2693
    %v3042 = vunpack.c.h.b16 %v2693
    %v3043 = vunpack.c.l.b16 %v2694
    %v3044 = vunpack.c.h.b16 %v2694
    %v3045 = vunpack.c.l.b16 %v2695
    %v3046 = vunpack.c.h.b16 %v2695
    %v3047 = vunpack.c.l.b16 %v2696
    %v3048 = vunpack.c.h.b16 %v2696
    %v3049 = vunpack.c.l.b16 %v2697
    %v3050 = vunpack.c.h.b16 %v2697
    %v3051 = vunpack.c.l.b16 %v2698
    %v3052 = vunpack.c.h.b16 %v2698
    %v3053 = vunpack.c.l.b16 %v2699
    %v3054 = vunpack.c.h.b16 %v2699
    %v3055 = vunpack.c.l.b16 %v2700
    %v3056 = vunpack.c.h.b16 %v2700
    %v3057 = vunpack.c.l.b16 %v2701
    %v3058 = vunpack.c.h.b16 %v2701
    %v3059 = vunpack.c.l.b16 %v2702
    %v3060 = vunpack.c.h.b16 %v2702
    %v3061 = vunpack.c.l.b16 %v2703
    %v3062 = vunpack.c.h.b16 %v2703
    %v3063 = vunpack.c.l.b16 %v2704
    %v3064 = vunpack.c.h.b16 %v2704
    %v3065 = vunpack.c.l.b16 %v2705
    %v3066 = vunpack.c.h.b16 %v2705
    %v3067 = vunpack.c.l.b16 %v2706
    %v3068 = vunpack.c.h.b16 %v2706
    %v3069 = vunpack.c.l.b16 %v2707
    %v3070 = vunpack.c.h.b16 %v2707
    %v3071 = vunpack.c.l.b16 %v2708
    %v3072 = vunpack.c.h.b16 %v2708
    %v3073 = vunpack.c.l.b16 %v2709
    %v3074 = vunpack.c.h.b16 %v2709
    %v3075 = vunpack.c.l.b16 %v2710
    %v3076 = vunpack.c.h.b16 %v2710
    %v3077 = vunpack.c.l.b16 %v2711
    %v3078 = vunpack.c.h.b16 %v2711
    %v3079 = vunpack.c.l.b16 %v2712
    %v3080 = vunpack.c.h.b16 %v2712
    %v3081 = vunpack.c.l.b16 %v2713
    %v3082 = vunpack.c.h.b16 %v2713
    %v3083 = vunpack.c.l.b16 %v2714
    %v3084 = vunpack.c.h.b16 %v2714
    %v3085 = vunpack.c.l.b16 %v2715
    %v3086 = vunpack.c.h.b16 %v2715
    %v3087 = vunpack.c.l.b16 %v2716
    %v3088 = vunpack.c.h.b16 %v2716
    %v3089 = vunpack.c.l.b16 %v2717
    %v3090 = vunpack.c.h.b16 %v2717
    %v3091 = vunpack.c.l.b16 %v2718
    %v3092 = vunpack.c.h.b16 %v2718
    %v3093 = vunpack.c.l.b16 %v2719
    %v3094 = vunpack.c.h.b16 %v2719
    %v3095 = vunpack.c.l.b16 %v2720
    %v3096 = vunpack.c.h.b16 %v2720
    %v3097 = vunpack.c.l.b16 %v2721
    %v3098 = vunpack.c.h.b16 %v2721
    %v3099 = vunpack.c.l.b16 %v2722
    %v3100 = vunpack.c.h.b16 %v2722
    %v3101 = vunpack.c.l.b16 %v2723
    %v3102 = vunpack.c.h.b16 %v2723
    %v3103 = vunpack.c.l.b16 %v2724
    %v3104 = vunpack.c.h.b16 %v2724
    %v3105 = vunpack.c.l.b16 %v2725
    %v3106 = vunpack.c.h.b16 %v2725
    %v3107 = vunpack.c.l.b16 %v2726
    %v3108 = vunpack.c.h.b16 %v2726
    %v3109 = vunpack.c.l.b16 %v2727
    %v3110 = vunpack.c.h.b16 %v2727
    %v3111 = vunpack.c.l.b16 %v2728
    %v3112 = vunpack.c.h.b16 %v2728
    %v3113 = vunpack.c.l.b16 %v2729
    %v3114 = vunpack.c.h.b16 %v2729
    %v3115 = vunpack.c.l.b16 %v2730
    %v3116 = vunpack.c.h.b16 %v2730
    %v3117 = vunpack.c.l.b16 %v2731
    %v3118 = vunpack.c.h.b16 %v2731
    %v3119 = vunpack.c.l.b16 %v2732
    %v3120 = vunpack.c.h.b16 %v2732
    %v3121 = vunpack.c.l.b16 %v2733
    %v3122 = vunpack.c.h.b16 %v2733
    %v3123 = vunpack.c.l.b16 %v2734
    %v3124 = vunpack.c.h.b16 %v2734
    %v3125 = vunpack.c.l.b16 %v2735
    %v3126 = vunpack.c.h.b16 %v2735
    %v3127 = vunpack.c.l.b16 %v2736
    %v3128 = vunpack.c.h.b16 %v2736
    %v3129 = vunpack.c.l.b16 %v2737
    %v3130 = vunpack.c.h.b16 %v2737
    %v3131 = vunpack.c.l.b16 %v2738
    %v3132 = vunpack.c.h.b16 %v2738
    %v3133 = vunpack.c.l.b16 %v2739
    %v3134 = vunpack.c.h.b16 %v2739
    %v3135 = vunpack.c.l.b16 %v2740
    %v3136 = vunpack.c.h.b16 %v2740
    %v3137 = vunpack.c.l.b16 %v2741
    %v3138 = vunpack.c.h.b16 %v2741
    %v3139 = vunpack.c.l.b16 %v2742
    %v3140 = vunpack.c.h.b16 %v2742
    %v3141 = vunpack.c.l.b16 %v2743
    %v3142 = vunpack.c.h.b16 %v2743
    %v3143 = vunpack.c.l.b16 %v2744
    %v3144 = vunpack.c.h.b16 %v2744
    %v3145 = vunpack.c.l.b16 %v2745
    %v3146 = vunpack.c.h.b16 %v2745
    %v3147 = vunpack.c.l.b16 %v2746
    %v3148 = vunpack.c.h.b16 %v2746
    %v3149 = vunpack.c.l.b16 %v2747
    %v3150 = vunpack.c.h.b16 %v2747
    %v3151 = vunpack.c.l.b16 %v2748
    %v3152 = vunpack.c.h.b16 %v2748
    %v3153 = vunpack.c.l.b16 %v2749
    %v3154 = vunpack.c.h.b16 %v2749
    %v3155 = vunpack.c.l.b16 %v2750
    %v3156 = vunpack.c.h.b16 %v2750
    %v3157 = vpack.c.b16 %v2905, %v2901
    %v3158 = vpack.c.b16 %v2906, %v2902
    %v3159 = vpack.c.b16 %v2907, %v2903
    %v3160 = vpack.c.b16 %v2908, %v2904
    %v3161 = vpack.c.b16 %v2913, %v2909
    %v3162 = vpack.c.b16 %v2914, %v2910
    %v3163 = vpack.c.b16 %v2915, %v2911
    %v3164 = vpack.c.b16 %v2916, %v2912
    %v3165 = vpack.c.b16 %v2921, %v2917
    %v3166 = vpack.c.b16 %v2922, %v2918
    %v3167 = vpack.c.b16 %v2923, %v2919
    %v3168 = vpack.c.b16 %v2924, %v2920
    %v3169 = vpack.c.b16 %v2929, %v2925
    %v3170 = vpack.c.b16 %v2930, %v2926
    %v3171 = vpack.c.b16 %v2931, %v2927
    %v3172 = vpack.c.b16 %v2932, %v2928
    %v3173 = vpack.c.b16 %v2937, %v2933
    %v3174 = vpack.c.b16 %v2938, %v2934
    %v3175 = vpack.c.b16 %v2939, %v2935
    %v3176 = vpack.c.b16 %v2940, %v2936
    %v3177 = vpack.c.b16 %v2945, %v2941
    %v3178 = vpack.c.b16 %v2946, %v2942
    %v3179 = vpack.c.b16 %v2947, %v2943
    %v3180 = vpack.c.b16 %v2948, %v2944
    %v3181 = vpack.c.b16 %v2953, %v2949
    %v3182 = vpack.c.b16 %v2954, %v2950
    %v3183 = vpack.c.b16 %v2955, %v2951
    %v3184 = vpack.c.b16 %v2956, %v2952
    %v3185 = vpack.c.b16 %v2961, %v2957
    %v3186 = vpack.c.b16 %v2962, %v2958
    %v3187 = vpack.c.b16 %v2963, %v2959
    %v3188 = vpack.c.b16 %v2964, %v2960
    %v3189 = vpack.c.b16 %v2969, %v2965
    %v3190 = vpack.c.b16 %v2970, %v2966
    %v3191 = vpack.c.b16 %v2971, %v2967
    %v3192 = vpack.c.b16 %v2972, %v2968
    %v3193 = vpack.c.b16 %v2977, %v2973
    %v3194 = vpack.c.b16 %v2978, %v2974
    %v3195 = vpack.c.b16 %v2979, %v2975
    %v3196 = vpack.c.b16 %v2980, %v2976
    %v3197 = vpack.c.b16 %v2985, %v2981
    %v3198 = vpack.c.b16 %v2986, %v2982
    %v3199 = vpack.c.b16 %v2987, %v2983
    %v3200 = vpack.c.b16 %v2988, %v2984
    %v3201 = vpack.c.b16 %v2993, %v2989
    %v3202 = vpack.c.b16 %v2994, %v2990
    %v3203 = vpack.c.b16 %v2995, %v2991
    %v3204 = vpack.c.b16 %v2996, %v2992
    %v3205 = vpack.c.b16 %v3001, %v2997
    %v3206 = vpack.c.b16 %v3002, %v2998
    %v3207 = vpack.c.b16 %v3003, %v2999
    %v3208 = vpack.c.b16 %v3004, %v3000
    %v3209 = vpack.c.b16 %v3009, %v3005
    %v3210 = vpack.c.b16 %v3010, %v3006
    %v3211 = vpack.c.b16 %v3011, %v3007
    %v3212 = vpack.c.b16 %v3012, %v3008
    %v3213 = vpack.c.b16 %v3017, %v3013
    %v3214 = vpack.c.b16 %v3018, %v3014
    %v3215 = vpack.c.b16 %v3019, %v3015
    %v3216 = vpack.c.b16 %v3020, %v3016
    %v3217 = vpack.c.b16 %v3025, %v3021
    %v3218 = vpack.c.b16 %v3026, %v3022
    %v3219 = vpack.c.b16 %v3027, %v3023
    %v3220 = vpack.c.b16 %v3028, %v3024
    %v3221 = vpack.c.b16 %v3033, %v3029
    %v3222 = vpack.c.b16 %v3034, %v3030
    %v3223 = vpack.c.b16 %v3035, %v3031
    %v3224 = vpack.c.b16 %v3036, %v3032
    %v3225 = vpack.c.b16 %v3041, %v3037
    %v3226 = vpack.c.b16 %v3042, %v3038
    %v3227 = vpack.c.b16 %v3043, %v3039
    %v3228 = vpack.c.b16 %v3044, %v3040
    %v3229 = vpack.c.b16 %v3049, %v3045
    %v3230 = vpack.c.b16 %v3050, %v3046
    %v3231 = vpack.c.b16 %v3051, %v3047
    %v3232 = vpack.c.b16 %v3052, %v3048
    %v3233 = vpack.c.b16 %v3057, %v3053
    %v3234 = vpack.c.b16 %v3058, %v3054
    %v3235 = vpack.c.b16 %v3059, %v3055
    %v3236 = vpack.c.b16 %v3060, %v3056
    %v3237 = vpack.c.b16 %v3065, %v3061
    %v3238 = vpack.c.b16 %v3066, %v3062
    %v3239 = vpack.c.b16 %v3067, %v3063
    %v3240 = vpack.c.b16 %v3068, %v3064
    %v3241 = vpack.c.b16 %v3073, %v3069
    %v3242 = vpack.c.b16 %v3074, %v3070
    %v3243 = vpack.c.b16 %v3075, %v3071
    %v3244 = vpack.c.b16 %v3076, %v3072
    %v3245 = vpack.c.b16 %v3081, %v3077
    %v3246 = vpack.c.b16 %v3082, %v3078
    %v3247 = vpack.c.b16 %v3083, %v3079
    %v3248 = vpack.c.b16 %v3084, %v3080
    %v3249 = vpack.c.b16 %v3089, %v3085
    %v3250 = vpack.c.b16 %v3090, %v3086
    %v3251 = vpack.c.b16 %v3091, %v3087
    %v3252 = vpack.c.b16 %v3092, %v3088
    %v3253 = vpack.c.b16 %v3097, %v3093
    %v3254 = vpack.c.b16 %v3098, %v3094
    %v3255 = vpack.c.b16 %v3099, %v3095
    %v3256 = vpack.c.b16 %v3100, %v3096
    %v3257 = vpack.c.b16 %v3105, %v3101
    %v3258 = vpack.c.b16 %v3106, %v3102
    %v3259 = vpack.c.b16 %v3107, %v3103
    %v3260 = vpack.c.b16 %v3108, %v3104
    %v3261 = vpack.c.b16 %v3113, %v3109
    %v3262 = vpack.c.b16 %v3114, %v3110
    %v3263 = vpack.c.b16 %v3115, %v3111
    %v3264 = vpack.c.b16 %v3116, %v3112
    %v3265 = vpack.c.b16 %v3121, %v3117
    %v3266 = vpack.c.b16 %v3122, %v3118
    %v3267 = vpack.c.b16 %v3123, %v3119
    %v3268 = vpack.c.b16 %v3124, %v3120
    %v3269 = vpack.c.b16 %v3129, %v3125
    %v3270 = vpack.c.b16 %v3130, %v3126
    %v3271 = vpack.c.b16 %v3131, %v3127
    %v3272 = vpack.c.b16 %v3132, %v3128
    %v3273 = vpack.c.b16 %v3137, %v3133
    %v3274 = vpack.c.b16 %v3138, %v3134
    %v3275 = vpack.c.b16 %v3139, %v3135
    %v3276 = vpack.c.b16 %v3140, %v3136
    %v3277 = vpack.c.b16 %v3145, %v3141
    %v3278 = vpack.c.b16 %v3146, %v3142
    %v3279 = vpack.c.b16 %v3147, %v3143
    %v3280 = vpack.c.b16 %v3148, %v3144
    %v3281 = vpack.c.b16 %v3153, %v3149
    %v3282 = vpack.c.b16 %v3154, %v3150
    %v3283 = vpack.c.b16 %v3155, %v3151
    %v3284 = vpack.c.b16 %v3156, %v3152
    %3413 = vmatprep.subr.bf16.mxu0 %v3158
    %3414 = vmatpush1.bf16.msra.mxu0 %v3157
    %3415 = vmatprep.subr.bf16.mxu0 %v3162
    %3416 = vmatpush1.bf16.msra.mxu0 %v3161
    %3417 = vmatprep.subr.bf16.mxu0 %v3166
    %3418 = vmatpush1.bf16.msra.mxu0 %v3165
    %3419 = vmatprep.subr.bf16.mxu0 %v3170
    %3420 = vmatpush1.bf16.msra.mxu0 %v3169
    %3421 = vmatprep.subr.bf16.mxu0 %v3174
    %3422 = vmatpush1.bf16.msra.mxu0 %v3173
    %3423 = vmatprep.subr.bf16.mxu0 %v3178
    %3424 = vmatpush1.bf16.msra.mxu0 %v3177
    %3425 = vmatprep.subr.bf16.mxu0 %v3182
    %3426 = vmatpush1.bf16.msra.mxu0 %v3181
    %3427 = vmatprep.subr.bf16.mxu0 %v3186
    %3428 = vmatpush1.bf16.msra.mxu0 %v3185
    %3429 = vmatprep.subr.bf16.mxu0 %v3190
    %3430 = vmatpush1.bf16.msra.mxu0 %v3189
    %3431 = vmatprep.subr.bf16.mxu0 %v3194
    %3432 = vmatpush1.bf16.msra.mxu0 %v3193
    %3433 = vmatprep.subr.bf16.mxu0 %v3198
    %3434 = vmatpush1.bf16.msra.mxu0 %v3197
    %3435 = vmatprep.subr.bf16.mxu0 %v3202
    %3436 = vmatpush1.bf16.msra.mxu0 %v3201
    %3437 = vmatprep.subr.bf16.mxu0 %v3206
    %3438 = vmatpush1.bf16.msra.mxu0 %v3205
    %3439 = vmatprep.subr.bf16.mxu0 %v3210
    %3440 = vmatpush1.bf16.msra.mxu0 %v3209
    %3441 = vmatprep.subr.bf16.mxu0 %v3214
    %3442 = vmatpush1.bf16.msra.mxu0 %v3213
    %3443 = vmatprep.subr.bf16.mxu0 %v3218
    %3444 = vmatpush1.bf16.msra.mxu0 %v3217
    %3445 = vmatprep.mubr.bf16.mxu0 %v2592
    %3446 = vmatmul.mubr.bf16.gmra.mrb[0].mxu0 %v2591
    %v3447 = vpop.f32.mrb[0].mxu0
    %v3448 = vadd.f32 %v2756, %v3447
    %v3449 = vpop.f32.mrb[0].mxu0
    %v3450 = vadd.f32 %v2760, %v3449
    %v3451 = vpop.f32.mrb[0].mxu0
    %v3452 = vadd.f32 %v2756, %v3451
    %v3453 = vpop.f32.mrb[0].mxu0
    %v3454 = vadd.f32 %v2760, %v3453
    %3455 = vmatprep.mubr.bf16.mxu0 %v2596
    %3456 = vmatmul.mubr.bf16.gmra.mrb[0].mxu0 %v2595
    %v3457 = vpop.f32.mrb[0].mxu0
    %v3458 = vadd.f32 %v2756, %v3457
    %v3459 = vpop.f32.mrb[0].mxu0
    %v3460 = vadd.f32 %v2760, %v3459
    %v3461 = vpop.f32.mrb[0].mxu0
    %v3462 = vadd.f32 %v2756, %v3461
    %v3463 = vpop.f32.mrb[0].mxu0
    %v3464 = vadd.f32 %v2760, %v3463
    %3465 = vmatprep.mubr.bf16.mxu0 %v2600
    %3466 = vmatmul.mubr.bf16.gmra.mrb[0].mxu0 %v2599
    %v3467 = vpop.f32.mrb[0].mxu0
    %v3468 = vadd.f32 %v2756, %v3467
    %v3469 = vpop.f32.mrb[0].mxu0
    %v3470 = vadd.f32 %v2760, %v3469
    %v3471 = vpop.f32.mrb[0].mxu0
    %v3472 = vadd.f32 %v2756, %v3471
    %v3473 = vpop.f32.mrb[0].mxu0
    %v3474 = vadd.f32 %v2760, %v3473
    %3475 = vmatprep.mubr.bf16.mxu0 %v2604
    %3476 = vmatmul.mubr.bf16.gmra.mrb[0].mxu0 %v2603
    %v3477 = vpop.f32.mrb[0].mxu0
    %v3478 = vadd.f32 %v2756, %v3477
    %v3479 = vpop.f32.mrb[0].mxu0
    %v3480 = vadd.f32 %v2760, %v3479
    %v3481 = vpop.f32.mrb[0].mxu0
    %v3482 = vadd.f32 %v2756, %v3481
    %v3483 = vpop.f32.mrb[0].mxu0
    %v3484 = vadd.f32 %v2760, %v3483
    %3485 = vmatprep.mubr.bf16.mxu0 %v2608
    %3486 = vmatmul.mubr.bf16.gmra.mrb[0].mxu0 %v2607
    %v3487 = vpop.f32.mrb[0].mxu0
    %v3488 = vadd.f32 %v2756, %v3487
    %v3489 = vpop.f32.mrb[0].mxu0
    %v3490 = vadd.f32 %v2760, %v3489
    %v3491 = vpop.f32.mrb[0].mxu0
    %v3492 = vadd.f32 %v2756, %v3491
    %v3493 = vpop.f32.mrb[0].mxu0
    %v3494 = vadd.f32 %v2760, %v3493
    %3495 = vmatprep.mubr.bf16.mxu0 %v2612
    %3496 = vmatmul.mubr.bf16.gmra.mrb[0].mxu0 %v2611
    %v3497 = vpop.f32.mrb[0].mxu0
    %v3498 = vadd.f32 %v2756, %v3497
    %v3499 = vpop.f32.mrb[0].mxu0
    %v3500 = vadd.f32 %v2760, %v3499
    %v3501 = vpop.f32.mrb[0].mxu0
    %v3502 = vadd.f32 %v2756, %v3501
    %v3503 = vpop.f32.mrb[0].mxu0
    %v3504 = vadd.f32 %v2760, %v3503
    %3505 = vmatprep.mubr.bf16.mxu0 %v2616
    %3506 = vmatmul.mubr.bf16.gmra.mrb[0].mxu0 %v2615
    %v3507 = vpop.f32.mrb[0].mxu0
    %v3508 = vadd.f32 %v2756, %v3507
    %v3509 = vpop.f32.mrb[0].mxu0
    %v3510 = vadd.f32 %v2760, %v3509
    %v3511 = vpop.f32.mrb[0].mxu0
    %v3512 = vadd.f32 %v2756, %v3511
    %v3513 = vpop.f32.mrb[0].mxu0
    %v3514 = vadd.f32 %v2760, %v3513
    %3515 = vmatprep.mubr.bf16.mxu0 %v2620
    %3516 = vmatmul.mubr.bf16.gmra.mrb[0].mxu0 %v2619
    %v3517 = vpop.f32.mrb[0].mxu0
    %v3518 = vadd.f32 %v2756, %v3517
    %v3519 = vpop.f32.mrb[0].mxu0
    %v3520 = vadd.f32 %v2760, %v3519
    %v3521 = vpop.f32.mrb[0].mxu0
    %v3522 = vadd.f32 %v2756, %v3521
    %v3523 = vpop.f32.mrb[0].mxu0
    %v3524 = vadd.f32 %v2760, %v3523
    %3525 = vdwg.mxu0
    %3526 = vmatprep.subr.bf16.mxu0 %v3222
    %3527 = vmatpush1.bf16.msra.mxu0 %v3221
    %3528 = vmatprep.subr.bf16.mxu0 %v3226
    %3529 = vmatpush1.bf16.msra.mxu0 %v3225
    %3530 = vmatprep.subr.bf16.mxu0 %v3230
    %3531 = vmatpush1.bf16.msra.mxu0 %v3229
    %3532 = vmatprep.subr.bf16.mxu0 %v3234
    %3533 = vmatpush1.bf16.msra.mxu0 %v3233
    %3534 = vmatprep.subr.bf16.mxu0 %v3238
    %3535 = vmatpush1.bf16.msra.mxu0 %v3237
    %3536 = vmatprep.subr.bf16.mxu0 %v3242
    %3537 = vmatpush1.bf16.msra.mxu0 %v3241
    %3538 = vmatprep.subr.bf16.mxu0 %v3246
    %3539 = vmatpush1.bf16.msra.mxu0 %v3245
    %3540 = vmatprep.subr.bf16.mxu0 %v3250
    %3541 = vmatpush1.bf16.msra.mxu0 %v3249
    %3542 = vmatprep.subr.bf16.mxu0 %v3254
    %3543 = vmatpush1.bf16.msra.mxu0 %v3253
    %3544 = vmatprep.subr.bf16.mxu0 %v3258
    %3545 = vmatpush1.bf16.msra.mxu0 %v3257
    %3546 = vmatprep.subr.bf16.mxu0 %v3262
    %3547 = vmatpush1.bf16.msra.mxu0 %v3261
    %3548 = vmatprep.subr.bf16.mxu0 %v3266
    %3549 = vmatpush1.bf16.msra.mxu0 %v3265
    %3550 = vmatprep.subr.bf16.mxu0 %v3270
    %3551 = vmatpush1.bf16.msra.mxu0 %v3269
    %3552 = vmatprep.subr.bf16.mxu0 %v3274
    %3553 = vmatpush1.bf16.msra.mxu0 %v3273
    %3554 = vmatprep.subr.bf16.mxu0 %v3278
    %3555 = vmatpush1.bf16.msra.mxu0 %v3277
    %3556 = vmatprep.subr.bf16.mxu0 %v3282
    %3557 = vmatpush1.bf16.msra.mxu0 %v3281
    %3558 = vmatprep.mubr.bf16.mxu0 %v2594
    %3559 = vmatmul.mubr.bf16.gmra.mrb[0].mxu0 %v2593
    %v3560 = vpop.f32.mrb[0].mxu0
    %v3561 = vadd.f32 %v3448, %v3560
    %v3562 = vpop.f32.mrb[0].mxu0
    %v3563 = vadd.f32 %v3450, %v3562
    %v3564 = vpop.f32.mrb[0].mxu0
    %v3565 = vadd.f32 %v3452, %v3564
    %v3566 = vpop.f32.mrb[0].mxu0
    %v3567 = vadd.f32 %v3454, %v3566
    %3568 = vmatprep.mubr.bf16.mxu0 %v2598
    %3569 = vmatmul.mubr.bf16.gmra.mrb[0].mxu0 %v2597
    %v3570 = vpop.f32.mrb[0].mxu0
    %v3571 = vadd.f32 %v3458, %v3570
    %v3572 = vpop.f32.mrb[0].mxu0
    %v3573 = vadd.f32 %v3460, %v3572
    %v3574 = vpop.f32.mrb[0].mxu0
    %v3575 = vadd.f32 %v3462, %v3574
    %v3576 = vpop.f32.mrb[0].mxu0
    %v3577 = vadd.f32 %v3464, %v3576
    %3578 = vmatprep.mubr.bf16.mxu0 %v2602
    %3579 = vmatmul.mubr.bf16.gmra.mrb[0].mxu0 %v2601
    %v3580 = vpop.f32.mrb[0].mxu0
    %v3581 = vadd.f32 %v3468, %v3580
    %v3582 = vpop.f32.mrb[0].mxu0
    %v3583 = vadd.f32 %v3470, %v3582
    %v3584 = vpop.f32.mrb[0].mxu0
    %v3585 = vadd.f32 %v3472, %v3584
    %v3586 = vpop.f32.mrb[0].mxu0
    %v3587 = vadd.f32 %v3474, %v3586
    %3588 = vmatprep.mubr.bf16.mxu0 %v2606
    %3589 = vmatmul.mubr.bf16.gmra.mrb[0].mxu0 %v2605
    %v3590 = vpop.f32.mrb[0].mxu0
    %v3591 = vadd.f32 %v3478, %v3590
    %v3592 = vpop.f32.mrb[0].mxu0
    %v3593 = vadd.f32 %v3480, %v3592
    %v3594 = vpop.f32.mrb[0].mxu0
    %v3595 = vadd.f32 %v3482, %v3594
    %v3596 = vpop.f32.mrb[0].mxu0
    %v3597 = vadd.f32 %v3484, %v3596
    %3598 = vmatprep.mubr.bf16.mxu0 %v2610
    %3599 = vmatmul.mubr.bf16.gmra.mrb[0].mxu0 %v2609
    %v3600 = vpop.f32.mrb[0].mxu0
    %v3601 = vadd.f32 %v3488, %v3600
    %v3602 = vpop.f32.mrb[0].mxu0
    %v3603 = vadd.f32 %v3490, %v3602
    %v3604 = vpop.f32.mrb[0].mxu0
    %v3605 = vadd.f32 %v3492, %v3604
    %v3606 = vpop.f32.mrb[0].mxu0
    %v3607 = vadd.f32 %v3494, %v3606
    %3608 = vmatprep.mubr.bf16.mxu0 %v2614
    %3609 = vmatmul.mubr.bf16.gmra.mrb[0].mxu0 %v2613
    %v3610 = vpop.f32.mrb[0].mxu0
    %v3611 = vadd.f32 %v3498, %v3610
    %v3612 = vpop.f32.mrb[0].mxu0
    %v3613 = vadd.f32 %v3500, %v3612
    %v3614 = vpop.f32.mrb[0].mxu0
    %v3615 = vadd.f32 %v3502, %v3614
    %v3616 = vpop.f32.mrb[0].mxu0
    %v3617 = vadd.f32 %v3504, %v3616
    %3618 = vmatprep.mubr.bf16.mxu0 %v2618
    %3619 = vmatmul.mubr.bf16.gmra.mrb[0].mxu0 %v2617
    %v3620 = vpop.f32.mrb[0].mxu0
    %v3621 = vadd.f32 %v3508, %v3620
    %v3622 = vpop.f32.mrb[0].mxu0
    %v3623 = vadd.f32 %v3510, %v3622
    %v3624 = vpop.f32.mrb[0].mxu0
    %v3625 = vadd.f32 %v3512, %v3624
    %v3626 = vpop.f32.mrb[0].mxu0
    %v3627 = vadd.f32 %v3514, %v3626
    %3628 = vmatprep.mubr.bf16.mxu0 %v2622
    %3629 = vmatmul.mubr.bf16.gmra.mrb[0].mxu0 %v2621
    %v3630 = vpop.f32.mrb[0].mxu0
    %v3631 = vadd.f32 %v3518, %v3630
    %v3632 = vpop.f32.mrb[0].mxu0
    %v3633 = vadd.f32 %v3520, %v3632
    %v3634 = vpop.f32.mrb[0].mxu0
    %v3635 = vadd.f32 %v3522, %v3634
    %v3636 = vpop.f32.mrb[0].mxu0
    %v3637 = vadd.f32 %v3524, %v3636
    %3638 = vdwg.mxu0
    %3639 = vmatprep.subr.bf16.mxu0 %v3160
    %3640 = vmatpush1.bf16.msra.mxu0 %v3159
    %3641 = vmatprep.subr.bf16.mxu0 %v3164
    %3642 = vmatpush1.bf16.msra.mxu0 %v3163
    %3643 = vmatprep.subr.bf16.mxu0 %v3168
    %3644 = vmatpush1.bf16.msra.mxu0 %v3167
    %3645 = vmatprep.subr.bf16.mxu0 %v3172
    %3646 = vmatpush1.bf16.msra.mxu0 %v3171
    %3647 = vmatprep.subr.bf16.mxu0 %v3176
    %3648 = vmatpush1.bf16.msra.mxu0 %v3175
    %3649 = vmatprep.subr.bf16.mxu0 %v3180
    %3650 = vmatpush1.bf16.msra.mxu0 %v3179
    %3651 = vmatprep.subr.bf16.mxu0 %v3184
    %3652 = vmatpush1.bf16.msra.mxu0 %v3183
    %3653 = vmatprep.subr.bf16.mxu0 %v3188
    %3654 = vmatpush1.bf16.msra.mxu0 %v3187
    %3655 = vmatprep.subr.bf16.mxu0 %v3192
    %3656 = vmatpush1.bf16.msra.mxu0 %v3191
    %3657 = vmatprep.subr.bf16.mxu0 %v3196
    %3658 = vmatpush1.bf16.msra.mxu0 %v3195
    %3659 = vmatprep.subr.bf16.mxu0 %v3200
    %3660 = vmatpush1.bf16.msra.mxu0 %v3199
    %3661 = vmatprep.subr.bf16.mxu0 %v3204
    %3662 = vmatpush1.bf16.msra.mxu0 %v3203
    %3663 = vmatprep.subr.bf16.mxu0 %v3208
    %3664 = vmatpush1.bf16.msra.mxu0 %v3207
    %3665 = vmatprep.subr.bf16.mxu0 %v3212
    %3666 = vmatpush1.bf16.msra.mxu0 %v3211
    %3667 = vmatprep.subr.bf16.mxu0 %v3216
    %3668 = vmatpush1.bf16.msra.mxu0 %v3215
    %3669 = vmatprep.subr.bf16.mxu0 %v3220
    %3670 = vmatpush1.bf16.msra.mxu0 %v3219
    %3671 = vmatprep.mubr.bf16.mxu0 %v2592
    %3672 = vmatmul.mubr.bf16.gmra.mrb[0].mxu0 %v2591
    %v3673 = vpop.f32.mrb[0].mxu0
    %v3674 = vadd.f32 %v2764, %v3673
    %v3675 = vpop.f32.mrb[0].mxu0
    %v3676 = vadd.f32 %v2768, %v3675
    %v3677 = vpop.f32.mrb[0].mxu0
    %v3678 = vadd.f32 %v2764, %v3677
    %v3679 = vpop.f32.mrb[0].mxu0
    %v3680 = vadd.f32 %v2768, %v3679
    %3681 = vmatprep.mubr.bf16.mxu0 %v2596
    %3682 = vmatmul.mubr.bf16.gmra.mrb[0].mxu0 %v2595
    %v3683 = vpop.f32.mrb[0].mxu0
    %v3684 = vadd.f32 %v2764, %v3683
    %v3685 = vpop.f32.mrb[0].mxu0
    %v3686 = vadd.f32 %v2768, %v3685
    %v3687 = vpop.f32.mrb[0].mxu0
    %v3688 = vadd.f32 %v2764, %v3687
    %v3689 = vpop.f32.mrb[0].mxu0
    %v3690 = vadd.f32 %v2768, %v3689
    %3691 = vmatprep.mubr.bf16.mxu0 %v2600
    %3692 = vmatmul.mubr.bf16.gmra.mrb[0].mxu0 %v2599
    %v3693 = vpop.f32.mrb[0].mxu0
    %v3694 = vadd.f32 %v2764, %v3693
    %v3695 = vpop.f32.mrb[0].mxu0
    %v3696 = vadd.f32 %v2768, %v3695
    %v3697 = vpop.f32.mrb[0].mxu0
    %v3698 = vadd.f32 %v2764, %v3697
    %v3699 = vpop.f32.mrb[0].mxu0
    %v3700 = vadd.f32 %v2768, %v3699
    %3701 = vmatprep.mubr.bf16.mxu0 %v2604
    %3702 = vmatmul.mubr.bf16.gmra.mrb[0].mxu0 %v2603
    %v3703 = vpop.f32.mrb[0].mxu0
    %v3704 = vadd.f32 %v2764, %v3703
    %v3705 = vpop.f32.mrb[0].mxu0
    %v3706 = vadd.f32 %v2768, %v3705
    %v3707 = vpop.f32.mrb[0].mxu0
    %v3708 = vadd.f32 %v2764, %v3707
    %v3709 = vpop.f32.mrb[0].mxu0
    %v3710 = vadd.f32 %v2768, %v3709
    %3711 = vmatprep.mubr.bf16.mxu0 %v2608
    %3712 = vmatmul.mubr.bf16.gmra.mrb[0].mxu0 %v2607
    %v3713 = vpop.f32.mrb[0].mxu0
    %v3714 = vadd.f32 %v2764, %v3713
    %v3715 = vpop.f32.mrb[0].mxu0
    %v3716 = vadd.f32 %v2768, %v3715
    %v3717 = vpop.f32.mrb[0].mxu0
    %v3718 = vadd.f32 %v2764, %v3717
    %v3719 = vpop.f32.mrb[0].mxu0
    %v3720 = vadd.f32 %v2768, %v3719
    %3721 = vmatprep.mubr.bf16.mxu0 %v2612
    %3722 = vmatmul.mubr.bf16.gmra.mrb[0].mxu0 %v2611
    %v3723 = vpop.f32.mrb[0].mxu0
    %v3724 = vadd.f32 %v2764, %v3723
    %v3725 = vpop.f32.mrb[0].mxu0
    %v3726 = vadd.f32 %v2768, %v3725
    %v3727 = vpop.f32.mrb[0].mxu0
    %v3728 = vadd.f32 %v2764, %v3727
    %v3729 = vpop.f32.mrb[0].mxu0
    %v3730 = vadd.f32 %v2768, %v3729
    %3731 = vmatprep.mubr.bf16.mxu0 %v2616
    %3732 = vmatmul.mubr.bf16.gmra.mrb[0].mxu0 %v2615
    %v3733 = vpop.f32.mrb[0].mxu0
    %v3734 = vadd.f32 %v2764, %v3733
    %v3735 = vpop.f32.mrb[0].mxu0
    %v3736 = vadd.f32 %v2768, %v3735
    %v3737 = vpop.f32.mrb[0].mxu0
    %v3738 = vadd.f32 %v2764, %v3737
    %v3739 = vpop.f32.mrb[0].mxu0
    %v3740 = vadd.f32 %v2768, %v3739
    %3741 = vmatprep.mubr.bf16.mxu0 %v2620
    %3742 = vmatmul.mubr.bf16.gmra.mrb[0].mxu0 %v2619
    %v3743 = vpop.f32.mrb[0].mxu0
    %v3744 = vadd.f32 %v2764, %v3743
    %v3745 = vpop.f32.mrb[0].mxu0
    %v3746 = vadd.f32 %v2768, %v3745
    %v3747 = vpop.f32.mrb[0].mxu0
    %v3748 = vadd.f32 %v2764, %v3747
    %v3749 = vpop.f32.mrb[0].mxu0
    %v3750 = vadd.f32 %v2768, %v3749
    %3751 = vdwg.mxu0
    %3752 = vmatprep.subr.bf16.mxu0 %v3224
    %3753 = vmatpush1.bf16.msra.mxu0 %v3223
    %3754 = vmatprep.subr.bf16.mxu0 %v3228
    %3755 = vmatpush1.bf16.msra.mxu0 %v3227
    %3756 = vmatprep.subr.bf16.mxu0 %v3232
    %3757 = vmatpush1.bf16.msra.mxu0 %v3231
    %3758 = vmatprep.subr.bf16.mxu0 %v3236
    %3759 = vmatpush1.bf16.msra.mxu0 %v3235
    %3760 = vmatprep.subr.bf16.mxu0 %v3240
    %3761 = vmatpush1.bf16.msra.mxu0 %v3239
    %3762 = vmatprep.subr.bf16.mxu0 %v3244
    %3763 = vmatpush1.bf16.msra.mxu0 %v3243
    %3764 = vmatprep.subr.bf16.mxu0 %v3248
    %3765 = vmatpush1.bf16.msra.mxu0 %v3247
    %3766 = vmatprep.subr.bf16.mxu0 %v3252
    %3767 = vmatpush1.bf16.msra.mxu0 %v3251
    %3768 = vmatprep.subr.bf16.mxu0 %v3256
    %3769 = vmatpush1.bf16.msra.mxu0 %v3255
    %3770 = vmatprep.subr.bf16.mxu0 %v3260
    %3771 = vmatpush1.bf16.msra.mxu0 %v3259
    %3772 = vmatprep.subr.bf16.mxu0 %v3264
    %3773 = vmatpush1.bf16.msra.mxu0 %v3263
    %3774 = vmatprep.subr.bf16.mxu0 %v3268
    %3775 = vmatpush1.bf16.msra.mxu0 %v3267
    %3776 = vmatprep.subr.bf16.mxu0 %v3272
    %3777 = vmatpush1.bf16.msra.mxu0 %v3271
    %3778 = vmatprep.subr.bf16.mxu0 %v3276
    %3779 = vmatpush1.bf16.msra.mxu0 %v3275
    %3780 = vmatprep.subr.bf16.mxu0 %v3280
    %3781 = vmatpush1.bf16.msra.mxu0 %v3279
    %3782 = vmatprep.subr.bf16.mxu0 %v3284
    %3783 = vmatpush1.bf16.msra.mxu0 %v3283
    %3784 = vmatprep.mubr.bf16.mxu0 %v2594
    %3785 = vmatmul.mubr.bf16.gmra.mrb[0].mxu0 %v2593
    %v3786 = vpop.f32.mrb[0].mxu0
    %v3787 = vadd.f32 %v3674, %v3786
    %v3788 = vpop.f32.mrb[0].mxu0
    %v3789 = vadd.f32 %v3676, %v3788
    %v3790 = vpop.f32.mrb[0].mxu0
    %v3791 = vadd.f32 %v3678, %v3790
    %v3792 = vpop.f32.mrb[0].mxu0
    %v3793 = vadd.f32 %v3680, %v3792
    %3794 = vmatprep.mubr.bf16.mxu0 %v2598
    %3795 = vmatmul.mubr.bf16.gmra.mrb[0].mxu0 %v2597
    %v3796 = vpop.f32.mrb[0].mxu0
    %v3797 = vadd.f32 %v3684, %v3796
    %v3798 = vpop.f32.mrb[0].mxu0
    %v3799 = vadd.f32 %v3686, %v3798
    %v3800 = vpop.f32.mrb[0].mxu0
    %v3801 = vadd.f32 %v3688, %v3800
    %v3802 = vpop.f32.mrb[0].mxu0
    %v3803 = vadd.f32 %v3690, %v3802
    %3804 = vmatprep.mubr.bf16.mxu0 %v2602
    %3805 = vmatmul.mubr.bf16.gmra.mrb[0].mxu0 %v2601
    %v3806 = vpop.f32.mrb[0].mxu0
    %v3807 = vadd.f32 %v3694, %v3806
    %v3808 = vpop.f32.mrb[0].mxu0
    %v3809 = vadd.f32 %v3696, %v3808
    %v3810 = vpop.f32.mrb[0].mxu0
    %v3811 = vadd.f32 %v3698, %v3810
    %v3812 = vpop.f32.mrb[0].mxu0
    %v3813 = vadd.f32 %v3700, %v3812
    %3814 = vmatprep.mubr.bf16.mxu0 %v2606
    %3815 = vmatmul.mubr.bf16.gmra.mrb[0].mxu0 %v2605
    %v3816 = vpop.f32.mrb[0].mxu0
    %v3817 = vadd.f32 %v3704, %v3816
    %v3818 = vpop.f32.mrb[0].mxu0
    %v3819 = vadd.f32 %v3706, %v3818
    %v3820 = vpop.f32.mrb[0].mxu0
    %v3821 = vadd.f32 %v3708, %v3820
    %v3822 = vpop.f32.mrb[0].mxu0
    %v3823 = vadd.f32 %v3710, %v3822
    %3824 = vmatprep.mubr.bf16.mxu0 %v2610
    %3825 = vmatmul.mubr.bf16.gmra.mrb[0].mxu0 %v2609
    %v3826 = vpop.f32.mrb[0].mxu0
    %v3827 = vadd.f32 %v3714, %v3826
    %v3828 = vpop.f32.mrb[0].mxu0
    %v3829 = vadd.f32 %v3716, %v3828
    %v3830 = vpop.f32.mrb[0].mxu0
    %v3831 = vadd.f32 %v3718, %v3830
    %v3832 = vpop.f32.mrb[0].mxu0
    %v3833 = vadd.f32 %v3720, %v3832
    %3834 = vmatprep.mubr.bf16.mxu0 %v2614
    %3835 = vmatmul.mubr.bf16.gmra.mrb[0].mxu0 %v2613
    %v3836 = vpop.f32.mrb[0].mxu0
    %v3837 = vadd.f32 %v3724, %v3836
    %v3838 = vpop.f32.mrb[0].mxu0
    %v3839 = vadd.f32 %v3726, %v3838
    %v3840 = vpop.f32.mrb[0].mxu0
    %v3841 = vadd.f32 %v3728, %v3840
    %v3842 = vpop.f32.mrb[0].mxu0
    %v3843 = vadd.f32 %v3730, %v3842
    %3844 = vmatprep.mubr.bf16.mxu0 %v2618
    %3845 = vmatmul.mubr.bf16.gmra.mrb[0].mxu0 %v2617
    %v3846 = vpop.f32.mrb[0].mxu0
    %v3847 = vadd.f32 %v3734, %v3846
    %v3848 = vpop.f32.mrb[0].mxu0
    %v3849 = vadd.f32 %v3736, %v3848
    %v3850 = vpop.f32.mrb[0].mxu0
    %v3851 = vadd.f32 %v3738, %v3850
    %v3852 = vpop.f32.mrb[0].mxu0
    %v3853 = vadd.f32 %v3740, %v3852
    %3854 = vmatprep.mubr.bf16.mxu0 %v2622
    %3855 = vmatmul.mubr.bf16.gmra.mrb[0].mxu0 %v2621
    %v3856 = vpop.f32.mrb[0].mxu0
    %v3857 = vadd.f32 %v3744, %v3856
    %v3858 = vpop.f32.mrb[0].mxu0
    %v3859 = vadd.f32 %v3746, %v3858
    %v3860 = vpop.f32.mrb[0].mxu0
    %v3861 = vadd.f32 %v3748, %v3860
    %v3862 = vpop.f32.mrb[0].mxu0
    %v3863 = vadd.f32 %v3750, %v3862
    %3864 = vdwg.mxu0
    %v3865 = vmax.f32 %v3561, 0.0
    %v3866 = vmax.f32 %v3563, 0.0
    %v3867 = vmax.f32 %v3787, 0.0
    %v3868 = vmax.f32 %v3789, 0.0
    %v3869 = vmax.f32 %v3565, 0.0
    %v3870 = vmax.f32 %v3567, 0.0
    %v3871 = vmax.f32 %v3791, 0.0
    %v3872 = vmax.f32 %v3793, 0.0
    %v3873 = vmax.f32 %v3571, 0.0
    %v3874 = vmax.f32 %v3573, 0.0
    %v3875 = vmax.f32 %v3797, 0.0
    %v3876 = vmax.f32 %v3799, 0.0
    %v3877 = vmax.f32 %v3575, 0.0
    %v3878 = vmax.f32 %v3577, 0.0
    %v3879 = vmax.f32 %v3801, 0.0
    %v3880 = vmax.f32 %v3803, 0.0
    %v3881 = vmax.f32 %v3581, 0.0
    %v3882 = vmax.f32 %v3583, 0.0
    %v3883 = vmax.f32 %v3807, 0.0
    %v3884 = vmax.f32 %v3809, 0.0
    %v3885 = vmax.f32 %v3585, 0.0
    %v3886 = vmax.f32 %v3587, 0.0
    %v3887 = vmax.f32 %v3811, 0.0
    %v3888 = vmax.f32 %v3813, 0.0
    %v3889 = vmax.f32 %v3591, 0.0
    %v3890 = vmax.f32 %v3593, 0.0
    %v3891 = vmax.f32 %v3817, 0.0
    %v3892 = vmax.f32 %v3819, 0.0
    %v3893 = vmax.f32 %v3595, 0.0
    %v3894 = vmax.f32 %v3597, 0.0
    %v3895 = vmax.f32 %v3821, 0.0
    %v3896 = vmax.f32 %v3823, 0.0
    %v3897 = vmax.f32 %v3601, 0.0
    %v3898 = vmax.f32 %v3603, 0.0
    %v3899 = vmax.f32 %v3827, 0.0
    %v3900 = vmax.f32 %v3829, 0.0
    %v3901 = vmax.f32 %v3605, 0.0
    %v3902 = vmax.f32 %v3607, 0.0
    %v3903 = vmax.f32 %v3831, 0.0
    %v3904 = vmax.f32 %v3833, 0.0
    %v3905 = vmax.f32 %v3611, 0.0
    %v3906 = vmax.f32 %v3613, 0.0
    %v3907 = vmax.f32 %v3837, 0.0
    %v3908 = vmax.f32 %v3839, 0.0
    %v3909 = vmax.f32 %v3615, 0.0
    %v3910 = vmax.f32 %v3617, 0.0
    %v3911 = vmax.f32 %v3841, 0.0
    %v3912 = vmax.f32 %v3843, 0.0
    %v3913 = vmax.f32 %v3621, 0.0
    %v3914 = vmax.f32 %v3623, 0.0
    %v3915 = vmax.f32 %v3847, 0.0
    %v3916 = vmax.f32 %v3849, 0.0
    %v3917 = vmax.f32 %v3625, 0.0
    %v3918 = vmax.f32 %v3627, 0.0
    %v3919 = vmax.f32 %v3851, 0.0
    %v3920 = vmax.f32 %v3853, 0.0
    %v3921 = vmax.f32 %v3631, 0.0
    %v3922 = vmax.f32 %v3633, 0.0
    %v3923 = vmax.f32 %v3857, 0.0
    %v3924 = vmax.f32 %v3859, 0.0
    %v3925 = vmax.f32 %v3635, 0.0
    %v3926 = vmax.f32 %v3637, 0.0
    %v3927 = vmax.f32 %v3861, 0.0
    %v3928 = vmax.f32 %v3863, 0.0
    %v3929 = vpack.c.bf16 %v3869, %v3865
    %v3930 = vpack.c.bf16 %v3870, %v3866
    %v3931 = vpack.c.bf16 %v3871, %v3867
    %v3932 = vpack.c.bf16 %v3872, %v3868
    %v3933 = vpack.c.bf16 %v3877, %v3873
    %v3934 = vpack.c.bf16 %v3878, %v3874
    %v3935 = vpack.c.bf16 %v3879, %v3875
    %v3936 = vpack.c.bf16 %v3880, %v3876
    %v3937 = vpack.c.bf16 %v3885, %v3881
    %v3938 = vpack.c.bf16 %v3886, %v3882
    %v3939 = vpack.c.bf16 %v3887, %v3883
    %v3940 = vpack.c.bf16 %v3888, %v3884
    %v3941 = vpack.c.bf16 %v3893, %v3889
    %v3942 = vpack.c.bf16 %v3894, %v3890
    %v3943 = vpack.c.bf16 %v3895, %v3891
    %v3944 = vpack.c.bf16 %v3896, %v3892
    %v3945 = vpack.c.bf16 %v3901, %v3897
    %v3946 = vpack.c.bf16 %v3902, %v3898
    %v3947 = vpack.c.bf16 %v3903, %v3899
    %v3948 = vpack.c.bf16 %v3904, %v3900
    %v3949 = vpack.c.bf16 %v3909, %v3905
    %v3950 = vpack.c.bf16 %v3910, %v3906
    %v3951 = vpack.c.bf16 %v3911, %v3907
    %v3952 = vpack.c.bf16 %v3912, %v3908
    %v3953 = vpack.c.bf16 %v3917, %v3913
    %v3954 = vpack.c.bf16 %v3918, %v3914
    %v3955 = vpack.c.bf16 %v3919, %v3915
    %v3956 = vpack.c.bf16 %v3920, %v3916
    %v3957 = vpack.c.bf16 %v3925, %v3921
    %v3958 = vpack.c.bf16 %v3926, %v3922
    %v3959 = vpack.c.bf16 %v3927, %v3923
    %v3960 = vpack.c.bf16 %v3928, %v3924
    %v3961 = vld [vmem:[%s5] sm:$0xf]
    %v3962 = vld [vmem:[%s5 + $0x4] sm:$0xf]
    %v3963 = vld [vmem:[%s5 + $0x8] sm:$0xf]
    %v3964 = vld [vmem:[%s5 + $0xc] sm:$0xf]
    %v3965 = vld [vmem:[%s5 + $0x10] sm:$0xf]
    %v3966 = vld [vmem:[%s5 + $0x14] sm:$0xf]
    %v3967 = vld [vmem:[%s5 + $0x18] sm:$0xf]
    %v3968 = vld [vmem:[%s5 + $0x1c] sm:$0xf]
    %v3969 = vld [vmem:[%s5 + $0x20] sm:$0xf]
    %v3970 = vld [vmem:[%s5 + $0x24] sm:$0xf]
    %v3971 = vld [vmem:[%s5 + $0x28] sm:$0xf]
    %v3972 = vld [vmem:[%s5 + $0x2c] sm:$0xf]
    %v3973 = vld [vmem:[%s5 + $0x30] sm:$0xf]
    %v3974 = vld [vmem:[%s5 + $0x34] sm:$0xf]
    %v3975 = vld [vmem:[%s5 + $0x38] sm:$0xf]
    %v3976 = vld [vmem:[%s5 + $0x3c] sm:$0xf]
    %v3977 = vld [vmem:[%s5 + $0x40] sm:$0xf]
    %v3978 = vld [vmem:[%s5 + $0x44] sm:$0xf]
    %v3979 = vld [vmem:[%s5 + $0x48] sm:$0xf]
    %v3980 = vld [vmem:[%s5 + $0x4c] sm:$0xf]
    %v3981 = vld [vmem:[%s5 + $0x50] sm:$0xf]
    %v3982 = vld [vmem:[%s5 + $0x54] sm:$0xf]
    %v3983 = vld [vmem:[%s5 + $0x58] sm:$0xf]
    %v3984 = vld [vmem:[%s5 + $0x5c] sm:$0xf]
    %v3985 = vld [vmem:[%s5 + $0x60] sm:$0xf]
    %v3986 = vld [vmem:[%s5 + $0x64] sm:$0xf]
    %v3987 = vld [vmem:[%s5 + $0x68] sm:$0xf]
    %v3988 = vld [vmem:[%s5 + $0x6c] sm:$0xf]
    %v3989 = vld [vmem:[%s5 + $0x70] sm:$0xf]
    %v3990 = vld [vmem:[%s5 + $0x74] sm:$0xf]
    %v3991 = vld [vmem:[%s5 + $0x78] sm:$0xf]
    %v3992 = vld [vmem:[%s5 + $0x7c] sm:$0xf]
    %v3993 = vld [vmem:[%s5 + $0x80] sm:$0xf]
    %v3994 = vld [vmem:[%s5 + $0x84] sm:$0xf]
    %v3995 = vld [vmem:[%s5 + $0x88] sm:$0xf]
    %v3996 = vld [vmem:[%s5 + $0x8c] sm:$0xf]
    %v3997 = vld [vmem:[%s5 + $0x90] sm:$0xf]
    %v3998 = vld [vmem:[%s5 + $0x94] sm:$0xf]
    %v3999 = vld [vmem:[%s5 + $0x98] sm:$0xf]
    %v4000 = vld [vmem:[%s5 + $0x9c] sm:$0xf]
    %v4001 = vld [vmem:[%s5 + $0xa0] sm:$0xf]
    %v4002 = vld [vmem:[%s5 + $0xa4] sm:$0xf]
    %v4003 = vld [vmem:[%s5 + $0xa8] sm:$0xf]
    %v4004 = vld [vmem:[%s5 + $0xac] sm:$0xf]
    %v4005 = vld [vmem:[%s5 + $0xb0] sm:$0xf]
    %v4006 = vld [vmem:[%s5 + $0xb4] sm:$0xf]
    %v4007 = vld [vmem:[%s5 + $0xb8] sm:$0xf]
    %v4008 = vld [vmem:[%s5 + $0xbc] sm:$0xf]
    %v4009 = vld [vmem:[%s5 + $0xc0] sm:$0xf]
    %v4010 = vld [vmem:[%s5 + $0xc4] sm:$0xf]
    %v4011 = vld [vmem:[%s5 + $0xc8] sm:$0xf]
    %v4012 = vld [vmem:[%s5 + $0xcc] sm:$0xf]
    %v4013 = vld [vmem:[%s5 + $0xd0] sm:$0xf]
    %v4014 = vld [vmem:[%s5 + $0xd4] sm:$0xf]
    %v4015 = vld [vmem:[%s5 + $0xd8] sm:$0xf]
    %v4016 = vld [vmem:[%s5 + $0xdc] sm:$0xf]
    %v4017 = vld [vmem:[%s5 + $0xe0] sm:$0xf]
    %v4018 = vld [vmem:[%s5 + $0xe4] sm:$0xf]
    %v4019 = vld [vmem:[%s5 + $0xe8] sm:$0xf]
    %v4020 = vld [vmem:[%s5 + $0xec] sm:$0xf]
    %v4021 = vld [vmem:[%s5 + $0xf0] sm:$0xf]
    %v4022 = vld [vmem:[%s5 + $0xf4] sm:$0xf]
    %v4023 = vld [vmem:[%s5 + $0xf8] sm:$0xf]
    %v4024 = vld [vmem:[%s5 + $0xfc] sm:$0xf]
    %v4025 = vld [vmem:[%s6] sm:$0x1]
    %v4027 = vlaneseq
    %v4028 = vshrl.u32 %v4027, 7
    %v4029 = vsub.s32 0, %v4028
    %v4030 = vrot.slane %v4025, %v4029
    %v4096 = vunpack.c.l.b16 %v3961
    %v4097 = vunpack.c.l.b16 %v3962
    %v4098 = vunpack.c.l.b16 %v3963
    %v4099 = vunpack.c.l.b16 %v3964
    %v4100 = vunpack.c.l.b16 %v3965
    %v4101 = vunpack.c.l.b16 %v3966
    %v4102 = vunpack.c.l.b16 %v3967
    %v4103 = vunpack.c.l.b16 %v3968
    %v4104 = vunpack.c.l.b16 %v3969
    %v4105 = vunpack.c.l.b16 %v3970
    %v4106 = vunpack.c.l.b16 %v3971
    %v4107 = vunpack.c.l.b16 %v3972
    %v4108 = vunpack.c.l.b16 %v3973
    %v4109 = vunpack.c.l.b16 %v3974
    %v4110 = vunpack.c.l.b16 %v3975
    %v4111 = vunpack.c.l.b16 %v3976
    %v4112 = vunpack.c.l.b16 %v3977
    %v4113 = vunpack.c.l.b16 %v3978
    %v4114 = vunpack.c.l.b16 %v3979
    %v4115 = vunpack.c.l.b16 %v3980
    %v4116 = vunpack.c.l.b16 %v3981
    %v4117 = vunpack.c.l.b16 %v3982
    %v4118 = vunpack.c.l.b16 %v3983
    %v4119 = vunpack.c.l.b16 %v3984
    %v4120 = vunpack.c.l.b16 %v3985
    %v4121 = vunpack.c.l.b16 %v3986
    %v4122 = vunpack.c.l.b16 %v3987
    %v4123 = vunpack.c.l.b16 %v3988
    %v4124 = vunpack.c.l.b16 %v3989
    %v4125 = vunpack.c.l.b16 %v3990
    %v4126 = vunpack.c.l.b16 %v3991
    %v4127 = vunpack.c.l.b16 %v3992
    %v4128 = vunpack.c.l.b16 %v3993
    %v4129 = vunpack.c.l.b16 %v3994
    %v4130 = vunpack.c.l.b16 %v3995
    %v4131 = vunpack.c.l.b16 %v3996
    %v4132 = vunpack.c.l.b16 %v3997
    %v4133 = vunpack.c.l.b16 %v3998
    %v4134 = vunpack.c.l.b16 %v3999
    %v4135 = vunpack.c.l.b16 %v4000
    %v4136 = vunpack.c.l.b16 %v4001
    %v4137 = vunpack.c.l.b16 %v4002
    %v4138 = vunpack.c.l.b16 %v4003
    %v4139 = vunpack.c.l.b16 %v4004
    %v4140 = vunpack.c.l.b16 %v4005
    %v4141 = vunpack.c.l.b16 %v4006
    %v4142 = vunpack.c.l.b16 %v4007
    %v4143 = vunpack.c.l.b16 %v4008
    %v4144 = vunpack.c.l.b16 %v4009
    %v4145 = vunpack.c.l.b16 %v4010
    %v4146 = vunpack.c.l.b16 %v4011
    %v4147 = vunpack.c.l.b16 %v4012
    %v4148 = vunpack.c.l.b16 %v4013
    %v4149 = vunpack.c.l.b16 %v4014
    %v4150 = vunpack.c.l.b16 %v4015
    %v4151 = vunpack.c.l.b16 %v4016
    %v4152 = vunpack.c.l.b16 %v4017
    %v4153 = vunpack.c.l.b16 %v4018
    %v4154 = vunpack.c.l.b16 %v4019
    %v4155 = vunpack.c.l.b16 %v4020
    %v4156 = vunpack.c.l.b16 %v4021
    %v4157 = vunpack.c.l.b16 %v4022
    %v4158 = vunpack.c.l.b16 %v4023
    %v4159 = vunpack.c.l.b16 %v4024
    %v4160 = vpack.c.b16 %v4097, %v4096
    %v4161 = vpack.c.b16 %v4099, %v4098
    %v4162 = vpack.c.b16 %v4101, %v4100
    %v4163 = vpack.c.b16 %v4103, %v4102
    %v4164 = vpack.c.b16 %v4105, %v4104
    %v4165 = vpack.c.b16 %v4107, %v4106
    %v4166 = vpack.c.b16 %v4109, %v4108
    %v4167 = vpack.c.b16 %v4111, %v4110
    %v4168 = vpack.c.b16 %v4113, %v4112
    %v4169 = vpack.c.b16 %v4115, %v4114
    %v4170 = vpack.c.b16 %v4117, %v4116
    %v4171 = vpack.c.b16 %v4119, %v4118
    %v4172 = vpack.c.b16 %v4121, %v4120
    %v4173 = vpack.c.b16 %v4123, %v4122
    %v4174 = vpack.c.b16 %v4125, %v4124
    %v4175 = vpack.c.b16 %v4127, %v4126
    %v4176 = vpack.c.b16 %v4129, %v4128
    %v4177 = vpack.c.b16 %v4131, %v4130
    %v4178 = vpack.c.b16 %v4133, %v4132
    %v4179 = vpack.c.b16 %v4135, %v4134
    %v4180 = vpack.c.b16 %v4137, %v4136
    %v4181 = vpack.c.b16 %v4139, %v4138
    %v4182 = vpack.c.b16 %v4141, %v4140
    %v4183 = vpack.c.b16 %v4143, %v4142
    %v4184 = vpack.c.b16 %v4145, %v4144
    %v4185 = vpack.c.b16 %v4147, %v4146
    %v4186 = vpack.c.b16 %v4149, %v4148
    %v4187 = vpack.c.b16 %v4151, %v4150
    %v4188 = vpack.c.b16 %v4153, %v4152
    %v4189 = vpack.c.b16 %v4155, %v4154
    %v4190 = vpack.c.b16 %v4157, %v4156
    %v4191 = vpack.c.b16 %v4159, %v4158
    %4224 = vmatprep.subr.bf16.mxu0 0
    %4225 = vmatpush1.bf16.msra.mxu0 %v4160
    %4226 = vmatprep.subr.bf16.mxu0 0
    %4227 = vmatpush1.bf16.msra.mxu0 %v4161
    %4228 = vmatprep.subr.bf16.mxu0 0
    %4229 = vmatpush1.bf16.msra.mxu0 %v4162
    %4230 = vmatprep.subr.bf16.mxu0 0
    %4231 = vmatpush1.bf16.msra.mxu0 %v4163
    %4232 = vmatprep.subr.bf16.mxu0 0
    %4233 = vmatpush1.bf16.msra.mxu0 %v4164
    %4234 = vmatprep.subr.bf16.mxu0 0
    %4235 = vmatpush1.bf16.msra.mxu0 %v4165
    %4236 = vmatprep.subr.bf16.mxu0 0
    %4237 = vmatpush1.bf16.msra.mxu0 %v4166
    %4238 = vmatprep.subr.bf16.mxu0 0
    %4239 = vmatpush1.bf16.msra.mxu0 %v4167
    %4240 = vmatprep.subr.bf16.mxu0 0
    %4241 = vmatpush1.bf16.msra.mxu0 %v4168
    %4242 = vmatprep.subr.bf16.mxu0 0
    %4243 = vmatpush1.bf16.msra.mxu0 %v4169
    %4244 = vmatprep.subr.bf16.mxu0 0
    %4245 = vmatpush1.bf16.msra.mxu0 %v4170
    %4246 = vmatprep.subr.bf16.mxu0 0
    %4247 = vmatpush1.bf16.msra.mxu0 %v4171
    %4248 = vmatprep.subr.bf16.mxu0 0
    %4249 = vmatpush1.bf16.msra.mxu0 %v4172
    %4250 = vmatprep.subr.bf16.mxu0 0
    %4251 = vmatpush1.bf16.msra.mxu0 %v4173
    %4252 = vmatprep.subr.bf16.mxu0 0
    %4253 = vmatpush1.bf16.msra.mxu0 %v4174
    %4254 = vmatprep.subr.bf16.mxu0 0
    %4255 = vmatpush1.bf16.msra.mxu0 %v4175
    %4256 = vmatprep.mubr.bf16.mxu0 %v3930
    %4257 = vmatmul.mubr.bf16.gmra.mrb[0].mxu0 %v3929
    %v4258 = vpop.f32.mrb[0].mxu0
    %v4259 = vadd.f32 %v4030, %v4258
    %v4260 = vpop.f32.mrb[0].mxu0
    %v4261 = vpop.f32.mrb[0].mxu0
    %v4262 = vadd.f32 %v4030, %v4261
    %v4263 = vpop.f32.mrb[0].mxu0
    %4264 = vmatprep.mubr.bf16.mxu0 %v3934
    %4265 = vmatmul.mubr.bf16.gmra.mrb[0].mxu0 %v3933
    %v4266 = vpop.f32.mrb[0].mxu0
    %v4267 = vadd.f32 %v4030, %v4266
    %v4268 = vpop.f32.mrb[0].mxu0
    %v4269 = vpop.f32.mrb[0].mxu0
    %v4270 = vadd.f32 %v4030, %v4269
    %v4271 = vpop.f32.mrb[0].mxu0
    %4272 = vmatprep.mubr.bf16.mxu0 %v3938
    %4273 = vmatmul.mubr.bf16.gmra.mrb[0].mxu0 %v3937
    %v4274 = vpop.f32.mrb[0].mxu0
    %v4275 = vadd.f32 %v4030, %v4274
    %v4276 = vpop.f32.mrb[0].mxu0
    %v4277 = vpop.f32.mrb[0].mxu0
    %v4278 = vadd.f32 %v4030, %v4277
    %v4279 = vpop.f32.mrb[0].mxu0
    %4280 = vmatprep.mubr.bf16.mxu0 %v3942
    %4281 = vmatmul.mubr.bf16.gmra.mrb[0].mxu0 %v3941
    %v4282 = vpop.f32.mrb[0].mxu0
    %v4283 = vadd.f32 %v4030, %v4282
    %v4284 = vpop.f32.mrb[0].mxu0
    %v4285 = vpop.f32.mrb[0].mxu0
    %v4286 = vadd.f32 %v4030, %v4285
    %v4287 = vpop.f32.mrb[0].mxu0
    %4288 = vmatprep.mubr.bf16.mxu0 %v3946
    %4289 = vmatmul.mubr.bf16.gmra.mrb[0].mxu0 %v3945
    %v4290 = vpop.f32.mrb[0].mxu0
    %v4291 = vadd.f32 %v4030, %v4290
    %v4292 = vpop.f32.mrb[0].mxu0
    %v4293 = vpop.f32.mrb[0].mxu0
    %v4294 = vadd.f32 %v4030, %v4293
    %v4295 = vpop.f32.mrb[0].mxu0
    %4296 = vmatprep.mubr.bf16.mxu0 %v3950
    %4297 = vmatmul.mubr.bf16.gmra.mrb[0].mxu0 %v3949
    %v4298 = vpop.f32.mrb[0].mxu0
    %v4299 = vadd.f32 %v4030, %v4298
    %v4300 = vpop.f32.mrb[0].mxu0
    %v4301 = vpop.f32.mrb[0].mxu0
    %v4302 = vadd.f32 %v4030, %v4301
    %v4303 = vpop.f32.mrb[0].mxu0
    %4304 = vmatprep.mubr.bf16.mxu0 %v3954
    %4305 = vmatmul.mubr.bf16.gmra.mrb[0].mxu0 %v3953
    %v4306 = vpop.f32.mrb[0].mxu0
    %v4307 = vadd.f32 %v4030, %v4306
    %v4308 = vpop.f32.mrb[0].mxu0
    %v4309 = vpop.f32.mrb[0].mxu0
    %v4310 = vadd.f32 %v4030, %v4309
    %v4311 = vpop.f32.mrb[0].mxu0
    %4312 = vmatprep.mubr.bf16.mxu0 %v3958
    %4313 = vmatmul.mubr.bf16.gmra.mrb[0].mxu0 %v3957
    %v4314 = vpop.f32.mrb[0].mxu0
    %v4315 = vadd.f32 %v4030, %v4314
    %v4316 = vpop.f32.mrb[0].mxu0
    %v4317 = vpop.f32.mrb[0].mxu0
    %v4318 = vadd.f32 %v4030, %v4317
    %v4319 = vpop.f32.mrb[0].mxu0
    %4320 = vdwg.mxu0
    %4321 = vmatprep.subr.bf16.mxu0 0
    %4322 = vmatpush1.bf16.msra.mxu0 %v4176
    %4323 = vmatprep.subr.bf16.mxu0 0
    %4324 = vmatpush1.bf16.msra.mxu0 %v4177
    %4325 = vmatprep.subr.bf16.mxu0 0
    %4326 = vmatpush1.bf16.msra.mxu0 %v4178
    %4327 = vmatprep.subr.bf16.mxu0 0
    %4328 = vmatpush1.bf16.msra.mxu0 %v4179
    %4329 = vmatprep.subr.bf16.mxu0 0
    %4330 = vmatpush1.bf16.msra.mxu0 %v4180
    %4331 = vmatprep.subr.bf16.mxu0 0
    %4332 = vmatpush1.bf16.msra.mxu0 %v4181
    %4333 = vmatprep.subr.bf16.mxu0 0
    %4334 = vmatpush1.bf16.msra.mxu0 %v4182
    %4335 = vmatprep.subr.bf16.mxu0 0
    %4336 = vmatpush1.bf16.msra.mxu0 %v4183
    %4337 = vmatprep.subr.bf16.mxu0 0
    %4338 = vmatpush1.bf16.msra.mxu0 %v4184
    %4339 = vmatprep.subr.bf16.mxu0 0
    %4340 = vmatpush1.bf16.msra.mxu0 %v4185
    %4341 = vmatprep.subr.bf16.mxu0 0
    %4342 = vmatpush1.bf16.msra.mxu0 %v4186
    %4343 = vmatprep.subr.bf16.mxu0 0
    %4344 = vmatpush1.bf16.msra.mxu0 %v4187
    %4345 = vmatprep.subr.bf16.mxu0 0
    %4346 = vmatpush1.bf16.msra.mxu0 %v4188
    %4347 = vmatprep.subr.bf16.mxu0 0
    %4348 = vmatpush1.bf16.msra.mxu0 %v4189
    %4349 = vmatprep.subr.bf16.mxu0 0
    %4350 = vmatpush1.bf16.msra.mxu0 %v4190
    %4351 = vmatprep.subr.bf16.mxu0 0
    %4352 = vmatpush1.bf16.msra.mxu0 %v4191
    %4353 = vmatprep.mubr.bf16.mxu0 %v3932
    %4354 = vmatmul.mubr.bf16.gmra.mrb[0].mxu0 %v3931
    %v4355 = vpop.f32.mrb[0].mxu0
    %v4356 = vadd.f32 %v4259, %v4355
    %v4357 = vpop.f32.mrb[0].mxu0
    %v4358 = vpop.f32.mrb[0].mxu0
    %v4359 = vadd.f32 %v4262, %v4358
    %v4360 = vpop.f32.mrb[0].mxu0
    %4361 = vmatprep.mubr.bf16.mxu0 %v3936
    %4362 = vmatmul.mubr.bf16.gmra.mrb[0].mxu0 %v3935
    %v4363 = vpop.f32.mrb[0].mxu0
    %v4364 = vadd.f32 %v4267, %v4363
    %v4365 = vpop.f32.mrb[0].mxu0
    %v4366 = vpop.f32.mrb[0].mxu0
    %v4367 = vadd.f32 %v4270, %v4366
    %v4368 = vpop.f32.mrb[0].mxu0
    %4369 = vmatprep.mubr.bf16.mxu0 %v3940
    %4370 = vmatmul.mubr.bf16.gmra.mrb[0].mxu0 %v3939
    %v4371 = vpop.f32.mrb[0].mxu0
    %v4372 = vadd.f32 %v4275, %v4371
    %v4373 = vpop.f32.mrb[0].mxu0
    %v4374 = vpop.f32.mrb[0].mxu0
    %v4375 = vadd.f32 %v4278, %v4374
    %v4376 = vpop.f32.mrb[0].mxu0
    %4377 = vmatprep.mubr.bf16.mxu0 %v3944
    %4378 = vmatmul.mubr.bf16.gmra.mrb[0].mxu0 %v3943
    %v4379 = vpop.f32.mrb[0].mxu0
    %v4380 = vadd.f32 %v4283, %v4379
    %v4381 = vpop.f32.mrb[0].mxu0
    %v4382 = vpop.f32.mrb[0].mxu0
    %v4383 = vadd.f32 %v4286, %v4382
    %v4384 = vpop.f32.mrb[0].mxu0
    %4385 = vmatprep.mubr.bf16.mxu0 %v3948
    %4386 = vmatmul.mubr.bf16.gmra.mrb[0].mxu0 %v3947
    %v4387 = vpop.f32.mrb[0].mxu0
    %v4388 = vadd.f32 %v4291, %v4387
    %v4389 = vpop.f32.mrb[0].mxu0
    %v4390 = vpop.f32.mrb[0].mxu0
    %v4391 = vadd.f32 %v4294, %v4390
    %v4392 = vpop.f32.mrb[0].mxu0
    %4393 = vmatprep.mubr.bf16.mxu0 %v3952
    %4394 = vmatmul.mubr.bf16.gmra.mrb[0].mxu0 %v3951
    %v4395 = vpop.f32.mrb[0].mxu0
    %v4396 = vadd.f32 %v4299, %v4395
    %v4397 = vpop.f32.mrb[0].mxu0
    %v4398 = vpop.f32.mrb[0].mxu0
    %v4399 = vadd.f32 %v4302, %v4398
    %v4400 = vpop.f32.mrb[0].mxu0
    %4401 = vmatprep.mubr.bf16.mxu0 %v3956
    %4402 = vmatmul.mubr.bf16.gmra.mrb[0].mxu0 %v3955
    %v4403 = vpop.f32.mrb[0].mxu0
    %v4404 = vadd.f32 %v4307, %v4403
    %v4405 = vpop.f32.mrb[0].mxu0
    %v4406 = vpop.f32.mrb[0].mxu0
    %v4407 = vadd.f32 %v4310, %v4406
    %v4408 = vpop.f32.mrb[0].mxu0
    %4409 = vmatprep.mubr.bf16.mxu0 %v3960
    %4410 = vmatmul.mubr.bf16.gmra.mrb[0].mxu0 %v3959
    %v4411 = vpop.f32.mrb[0].mxu0
    %v4412 = vadd.f32 %v4315, %v4411
    %v4413 = vpop.f32.mrb[0].mxu0
    %v4414 = vpop.f32.mrb[0].mxu0
    %v4415 = vadd.f32 %v4318, %v4414
    %v4416 = vpop.f32.mrb[0].mxu0
    %4417 = vdwg.mxu0
    %4418 = vmax.xlane.f32.xlu0 %v4356
    %v4419 = vpop.xlane.xlu0 %4418
    %4420 = vmax.xlane.f32.xlu0 %v4359
    %v4421 = vpop.xlane.xlu0 %4420
    %4422 = vmax.xlane.f32.xlu0 %v4364
    %v4423 = vpop.xlane.xlu0 %4422
    %4424 = vmax.xlane.f32.xlu0 %v4367
    %v4425 = vpop.xlane.xlu0 %4424
    %4426 = vmax.xlane.f32.xlu0 %v4372
    %v4427 = vpop.xlane.xlu0 %4426
    %4428 = vmax.xlane.f32.xlu0 %v4375
    %v4429 = vpop.xlane.xlu0 %4428
    %4430 = vmax.xlane.f32.xlu0 %v4380
    %v4431 = vpop.xlane.xlu0 %4430
    %4432 = vmax.xlane.f32.xlu0 %v4383
    %v4433 = vpop.xlane.xlu0 %4432
    %4434 = vmax.xlane.f32.xlu0 %v4388
    %v4435 = vpop.xlane.xlu0 %4434
    %4436 = vmax.xlane.f32.xlu0 %v4391
    %v4437 = vpop.xlane.xlu0 %4436
    %4438 = vmax.xlane.f32.xlu0 %v4396
    %v4439 = vpop.xlane.xlu0 %4438
    %4440 = vmax.xlane.f32.xlu0 %v4399
    %v4441 = vpop.xlane.xlu0 %4440
    %4442 = vmax.xlane.f32.xlu0 %v4404
    %v4443 = vpop.xlane.xlu0 %4442
    %4444 = vmax.xlane.f32.xlu0 %v4407
    %v4445 = vpop.xlane.xlu0 %4444
    %4446 = vmax.xlane.f32.xlu0 %v4412
    %v4447 = vpop.xlane.xlu0 %4446
    %4448 = vmax.xlane.f32.xlu0 %v4415
    %v4449 = vpop.xlane.xlu0 %4448
    %v4450 = vsub.f32 %v4356, %v4419
    %v4451 = vsub.f32 %v4359, %v4421
    %v4452 = vsub.f32 %v4364, %v4423
    %v4453 = vsub.f32 %v4367, %v4425
    %v4454 = vsub.f32 %v4372, %v4427
    %v4455 = vsub.f32 %v4375, %v4429
    %v4456 = vsub.f32 %v4380, %v4431
    %v4457 = vsub.f32 %v4383, %v4433
    %v4458 = vsub.f32 %v4388, %v4435
    %v4459 = vsub.f32 %v4391, %v4437
    %v4460 = vsub.f32 %v4396, %v4439
    %v4461 = vsub.f32 %v4399, %v4441
    %v4462 = vsub.f32 %v4404, %v4443
    %v4463 = vsub.f32 %v4407, %v4445
    %v4464 = vsub.f32 %v4412, %v4447
    %v4465 = vsub.f32 %v4415, %v4449
    %v4466 = vmul.f32 %v4450, 1.442695
    %v4467 = vpow.pop %v4466
    %v4468 = vmul.f32 %v4451, 1.442695
    %v4469 = vpow.pop %v4468
    %v4470 = vmul.f32 %v4452, 1.442695
    %v4471 = vpow.pop %v4470
    %v4472 = vmul.f32 %v4453, 1.442695
    %v4473 = vpow.pop %v4472
    %v4474 = vmul.f32 %v4454, 1.442695
    %v4475 = vpow.pop %v4474
    %v4476 = vmul.f32 %v4455, 1.442695
    %v4477 = vpow.pop %v4476
    %v4478 = vmul.f32 %v4456, 1.442695
    %v4479 = vpow.pop %v4478
    %v4480 = vmul.f32 %v4457, 1.442695
    %v4481 = vpow.pop %v4480
    %v4482 = vmul.f32 %v4458, 1.442695
    %v4483 = vpow.pop %v4482
    %v4484 = vmul.f32 %v4459, 1.442695
    %v4485 = vpow.pop %v4484
    %v4486 = vmul.f32 %v4460, 1.442695
    %v4487 = vpow.pop %v4486
    %v4488 = vmul.f32 %v4461, 1.442695
    %v4489 = vpow.pop %v4488
    %v4490 = vmul.f32 %v4462, 1.442695
    %v4491 = vpow.pop %v4490
    %v4492 = vmul.f32 %v4463, 1.442695
    %v4493 = vpow.pop %v4492
    %v4494 = vmul.f32 %v4464, 1.442695
    %v4495 = vpow.pop %v4494
    %v4496 = vmul.f32 %v4465, 1.442695
    %v4497 = vpow.pop %v4496
    %4498 = vadd.xlane.f32.xlu0 %v4467
    %v4499 = vpop.xlane.xlu0 %4498
    %4500 = vadd.xlane.f32.xlu0 %v4469
    %v4501 = vpop.xlane.xlu0 %4500
    %4502 = vadd.xlane.f32.xlu0 %v4471
    %v4503 = vpop.xlane.xlu0 %4502
    %4504 = vadd.xlane.f32.xlu0 %v4473
    %v4505 = vpop.xlane.xlu0 %4504
    %4506 = vadd.xlane.f32.xlu0 %v4475
    %v4507 = vpop.xlane.xlu0 %4506
    %4508 = vadd.xlane.f32.xlu0 %v4477
    %v4509 = vpop.xlane.xlu0 %4508
    %4510 = vadd.xlane.f32.xlu0 %v4479
    %v4511 = vpop.xlane.xlu0 %4510
    %4512 = vadd.xlane.f32.xlu0 %v4481
    %v4513 = vpop.xlane.xlu0 %4512
    %4514 = vadd.xlane.f32.xlu0 %v4483
    %v4515 = vpop.xlane.xlu0 %4514
    %4516 = vadd.xlane.f32.xlu0 %v4485
    %v4517 = vpop.xlane.xlu0 %4516
    %4518 = vadd.xlane.f32.xlu0 %v4487
    %v4519 = vpop.xlane.xlu0 %4518
    %4520 = vadd.xlane.f32.xlu0 %v4489
    %v4521 = vpop.xlane.xlu0 %4520
    %4522 = vadd.xlane.f32.xlu0 %v4491
    %v4523 = vpop.xlane.xlu0 %4522
    %4524 = vadd.xlane.f32.xlu0 %v4493
    %v4525 = vpop.xlane.xlu0 %4524
    %4526 = vadd.xlane.f32.xlu0 %v4495
    %v4527 = vpop.xlane.xlu0 %4526
    %4528 = vadd.xlane.f32.xlu0 %v4497
    %v4529 = vpop.xlane.xlu0 %4528
    %v4530 = vrcp.pop %v4499
    %v4531 = vrcp.pop %v4501
    %v4532 = vrcp.pop %v4503
    %v4533 = vrcp.pop %v4505
    %v4534 = vrcp.pop %v4507
    %v4535 = vrcp.pop %v4509
    %v4536 = vrcp.pop %v4511
    %v4537 = vrcp.pop %v4513
    %v4538 = vrcp.pop %v4515
    %v4539 = vrcp.pop %v4517
    %v4540 = vrcp.pop %v4519
    %v4541 = vrcp.pop %v4521
    %v4542 = vrcp.pop %v4523
    %v4543 = vrcp.pop %v4525
    %v4544 = vrcp.pop %v4527
    %v4545 = vrcp.pop %v4529
    %v4546 = vmul.f32 %v4467, %v4530
    %v4547 = vmul.f32 %v4469, %v4531
    %v4548 = vmul.f32 %v4471, %v4532
    %v4549 = vmul.f32 %v4473, %v4533
    %v4550 = vmul.f32 %v4475, %v4534
    %v4551 = vmul.f32 %v4477, %v4535
    %v4552 = vmul.f32 %v4479, %v4536
    %v4553 = vmul.f32 %v4481, %v4537
    %v4554 = vmul.f32 %v4483, %v4538
    %v4555 = vmul.f32 %v4485, %v4539
    %v4556 = vmul.f32 %v4487, %v4540
    %v4557 = vmul.f32 %v4489, %v4541
    %v4558 = vmul.f32 %v4491, %v4542
    %v4559 = vmul.f32 %v4493, %v4543
    %v4560 = vmul.f32 %v4495, %v4544
    %v4561 = vmul.f32 %v4497, %v4545
    %v4562 = vpack.c.bf16 %v4547, %v4546
    %v4563 = vpack.c.bf16 %v4549, %v4548
    %v4564 = vpack.c.bf16 %v4551, %v4550
    %v4565 = vpack.c.bf16 %v4553, %v4552
    %v4566 = vpack.c.bf16 %v4555, %v4554
    %v4567 = vpack.c.bf16 %v4557, %v4556
    %v4568 = vpack.c.bf16 %v4559, %v4558
    %v4569 = vpack.c.bf16 %v4561, %v4560
    %v4578 = vunpack.c.l.b16 %v4562
    %v4579 = vunpack.c.h.b16 %v4562
    %v4580 = vunpack.c.l.b16 %v4563
    %v4581 = vunpack.c.h.b16 %v4563
    %v4582 = vunpack.c.l.b16 %v4564
    %v4583 = vunpack.c.h.b16 %v4564
    %v4584 = vunpack.c.l.b16 %v4565
    %v4585 = vunpack.c.h.b16 %v4565
    %v4586 = vunpack.c.l.b16 %v4566
    %v4587 = vunpack.c.h.b16 %v4566
    %v4588 = vunpack.c.l.b16 %v4567
    %v4589 = vunpack.c.h.b16 %v4567
    %v4590 = vunpack.c.l.b16 %v4568
    %v4591 = vunpack.c.h.b16 %v4568
    %v4592 = vunpack.c.l.b16 %v4569
    %v4593 = vunpack.c.h.b16 %v4569
    %v4594 = vpack.c.b16 %v4578, %v4578
    %v4595 = vpack.c.b16 %v4579, %v4579
    %v4596 = vpack.c.b16 %v4580, %v4580
    %v4597 = vpack.c.b16 %v4581, %v4581
    %v4598 = vpack.c.b16 %v4582, %v4582
    %v4599 = vpack.c.b16 %v4583, %v4583
    %v4600 = vpack.c.b16 %v4584, %v4584
    %v4601 = vpack.c.b16 %v4585, %v4585
    %v4602 = vpack.c.b16 %v4586, %v4586
    %v4603 = vpack.c.b16 %v4587, %v4587
    %v4604 = vpack.c.b16 %v4588, %v4588
    %v4605 = vpack.c.b16 %v4589, %v4589
    %v4606 = vpack.c.b16 %v4590, %v4590
    %v4607 = vpack.c.b16 %v4591, %v4591
    %v4608 = vpack.c.b16 %v4592, %v4592
    %v4609 = vpack.c.b16 %v4593, %v4593
    %4626 = vst [vmem:[#allocation7] sm:$0xf] %v4594
    %4627 = vst [vmem:[#allocation7 + $0x4] sm:$0xf] %v4595
    %4628 = vst [vmem:[#allocation7 + $0x8] sm:$0xf] %v4596
    %4629 = vst [vmem:[#allocation7 + $0xc] sm:$0xf] %v4597
    %4630 = vst [vmem:[#allocation7 + $0x10] sm:$0xf] %v4598
    %4631 = vst [vmem:[#allocation7 + $0x14] sm:$0xf] %v4599
    %4632 = vst [vmem:[#allocation7 + $0x18] sm:$0xf] %v4600
    %4633 = vst [vmem:[#allocation7 + $0x1c] sm:$0xf] %v4601
    %4634 = vst [vmem:[#allocation7 + $0x20] sm:$0xf] %v4602
    %4635 = vst [vmem:[#allocation7 + $0x24] sm:$0xf] %v4603
    %4636 = vst [vmem:[#allocation7 + $0x28] sm:$0xf] %v4604
    %4637 = vst [vmem:[#allocation7 + $0x2c] sm:$0xf] %v4605
    %4638 = vst [vmem:[#allocation7 + $0x30] sm:$0xf] %v4606
    %4639 = vst [vmem:[#allocation7 + $0x34] sm:$0xf] %v4607
    %4640 = vst [vmem:[#allocation7 + $0x38] sm:$0xf] %v4608
    %4641 = vst [vmem:[#allocation7 + $0x3c] sm:$0xf] %v4609
    // Predicated region
    $region38: #{tpu_custom_call.1} parent=1 // pred_check
      _
    $region39: #{tpu_custom_call.1} parent=1 // pred_check_branch
      %4643 = sbr.rel (0) target = $region41
    $region40: #{tpu_custom_call.1} parent=1 // pred_region
      %s4645 = ssub.s32 1024, 1024
      %4646 = vsyncadd [#allocation4], %s4645
      %s4647 = sshll.u32 [#allocation7], 4
      %s4648 = int_to_ptr.vmem [resolvable:$true] %s4647
      %4653 = dma.vmem_to_hbm [thread:$0]  %s4648, 1024, %s7, [#allocation4], 64, 64, 4
    $region41: #{tpu_custom_call.1} parent=1 // pred_fallthru
      _
    // Predicated region
    $region42: #{tpu_custom_call.1} parent=1 // pred_check
      _
    $region43: #{tpu_custom_call.1} parent=1 // pred_check_branch
      %4655 = sbr.rel (0) target = $region45
    $region44: #{tpu_custom_call.1} parent=1 // pred_region
      %4656 = dma.done [#allocation4], 1024
    $region45: #{tpu_custom_call.1} parent=1 // pred_fallthru
      _
    %4657 = vsyncpa [#allocation3], 1
    %4658 = vsyncpa [#allocation6], 1
    %4659 = vsyncpa [#allocation4], 1

</llo_original>
